<compile_context>
chip_gen: v5e
topology: v5e:2x2
jax: 0.10.0
libtpu: 0.0.40
codegen_flags: <defaults>
</compile_context>

<pallas_src>
import jax
import jax.numpy as jnp
from jax.experimental import pallas as pl
from jax.experimental.pallas import tpu as pltpu

# ---- Model config (small but TPU-tile friendly: head_dim = 128 lanes) -------
HIDDEN_SIZE = 256
NUM_HEADS = 2
NUM_KV_HEADS = 1
HEAD_DIM = HIDDEN_SIZE // NUM_HEADS          # 128
Q_SIZE = NUM_HEADS * HEAD_DIM                # 256
KV_SIZE = NUM_KV_HEADS * HEAD_DIM            # 128
GROUP = NUM_HEADS // NUM_KV_HEADS            # GQA group size
SCALING = HEAD_DIM ** (-0.5)
ROPE_THETA = 10000.0
EPS = 1e-5

SEQ_LEN = 256                                # tokens in the demo
TILE_T = 128                                 # token tile (fills MXU sublanes)
NEG_INF = -1e30


# --------------------------- Kernel 1: QKV + norm + RoPE ----------------------
def qkv_rope_kernel(h_ref, wqkv_ref, qw_ref, kw_ref, cos_ref, sin_ref, rot_ref,
                    q_out_ref, k_out_ref, v_out_ref):
    # QKV projection: bf16 operands, f32 accumulation on the MXU.
    qkv = jnp.dot(h_ref[...].astype(jnp.bfloat16), wqkv_ref[...],
                  preferred_element_type=jnp.float32)
    q = qkv[:, :Q_SIZE]
    k = qkv[:, Q_SIZE:Q_SIZE + KV_SIZE]
    v = qkv[:, Q_SIZE + KV_SIZE:]

    # RMSNorm over the full (all-heads) q / k projections, in f32 (OLMoE style).
    def rms_norm(x, w):
        var = jnp.mean(x * x, axis=-1, keepdims=True)
        return x * jax.lax.rsqrt(var + EPS) * w

    q = rms_norm(q, qw_ref[...])
    k = rms_norm(k, kw_ref[...])

    cos = cos_ref[...]      # [TILE_T, HEAD_DIM], cos duplicated over halves
    sin = sin_ref[...]      # [TILE_T, HEAD_DIM], sin duplicated over halves
    rot = rot_ref[...]      # [HEAD_DIM, HEAD_DIM] rotate_half permutation (+-1)

    def rope(x):            # x: [TILE_T, HEAD_DIM] f32
        # rotate_half(x) == x @ rot (sign folded into the constant matrix).
        rotated = jnp.dot(x, rot, preferred_element_type=jnp.float32)
        return x * cos + rotated * sin

    q_heads = [rope(q[:, h * HEAD_DIM:(h + 1) * HEAD_DIM])
               for h in range(NUM_HEADS)]
    k_heads = [rope(k[:, g * HEAD_DIM:(g + 1) * HEAD_DIM])
               for g in range(NUM_KV_HEADS)]

    q_out_ref[...] = jnp.concatenate(q_heads, axis=-1).astype(jnp.bfloat16)
    k_full = jnp.concatenate(k_heads, axis=-1) if NUM_KV_HEADS > 1 else k_heads[0]
    k_out_ref[...] = k_full.astype(jnp.bfloat16)
    v_out_ref[...] = v.astype(jnp.bfloat16)


# --------------------- Kernel 2: causal GQA attention + o_proj ----------------
def attn_o_kernel(q_ref, k_ref, v_ref, wo_ref, out_ref):
    i = pl.program_id(0)
    tile = q_ref.shape[0]
    kv_len = k_ref.shape[0]

    # Additive causal bias for this query tile, built once from absolute
    # positions (program_id offset), then stacked for the GQA head group.
    q_pos = i * tile + jax.lax.broadcasted_iota(jnp.int32, (tile, kv_len), 0)
    k_pos = jax.lax.broadcasted_iota(jnp.int32, (tile, kv_len), 1)
    bias = jnp.where(q_pos >= k_pos, 0.0, NEG_INF).astype(jnp.float32)
    if GROUP > 1:
        bias = jnp.concatenate([bias] * GROUP, axis=0)   # [GROUP*tile, kv_len]

    q = q_ref[...]      # bf16 [tile, Q_SIZE]
    k = k_ref[...]      # bf16 [kv_len, KV_SIZE]   (full sequence, resident)
    v = v_ref[...]      # bf16 [kv_len, KV_SIZE]

    head_out = [None] * NUM_HEADS
    for g in range(NUM_KV_HEADS):
        k_g = k[:, g * HEAD_DIM:(g + 1) * HEAD_DIM]
        v_g = v[:, g * HEAD_DIM:(g + 1) * HEAD_DIM]
        # Stack the query heads sharing this KV head along rows: one big matmul.
        q_heads = [q[:, h * HEAD_DIM:(h + 1) * HEAD_DIM]
                   for h in range(g * GROUP, (g + 1) * GROUP)]
        q_g = jnp.concatenate(q_heads, axis=0) if GROUP > 1 else q_heads[0]

        # scores: [GROUP*tile, kv_len], bf16 inputs, f32 accumulation.
        s = jax.lax.dot_general(q_g, k_g, (((1,), (1,)), ((), ())),
                                preferred_element_type=jnp.float32)
        s = s * SCALING + bias
        s = s - jnp.max(s, axis=-1, keepdims=True)
        p = jnp.exp(s)
        l = jnp.sum(p, axis=-1, keepdims=True)
        o = jnp.dot(p.astype(jnp.bfloat16), v_g,
                    preferred_element_type=jnp.float32)
        o = o / l                                         # normalize after PV
        for j, h in enumerate(range(g * GROUP, (g + 1) * GROUP)):
            head_out[h] = o[j * tile:(j + 1) * tile, :]

    attn = jnp.concatenate(head_out, axis=-1)             # [tile, Q_SIZE] f32
    out_ref[...] = jnp.dot(attn.astype(jnp.bfloat16), wo_ref[...],
                           preferred_element_type=jnp.float32)


# ----------------------------------- Wrapper ----------------------------------
@jax.jit
def olmoe_attention(positions, hidden_states, wqkv, wo, q_norm_w, k_norm_w):
    T, H = hidden_states.shape
    assert T % TILE_T == 0 and H == HIDDEN_SIZE
    n_tiles = T // TILE_T

    # Rotary tables (glue, plain JAX): cos/sin duplicated over halves.
    inv_freq = 1.0 / (ROPE_THETA ** (
        jnp.arange(0, HEAD_DIM, 2, dtype=jnp.float32) / HEAD_DIM))
    ang = positions.astype(jnp.float32)[:, None] * inv_freq[None, :]
    cos = jnp.concatenate([jnp.cos(ang), jnp.cos(ang)], axis=-1)  # [T, hd]
    sin = jnp.concatenate([jnp.sin(ang), jnp.sin(ang)], axis=-1)  # [T, hd]

    # rotate_half as a constant permutation matrix: x @ rot == [-x2, x1].
    half = HEAD_DIM // 2
    eye = jnp.eye(half, dtype=jnp.float32)
    zero = jnp.zeros((half, half), jnp.float32)
    rot = jnp.block([[zero, eye], [-eye, zero]])                  # [hd, hd]

    qw = q_norm_w.reshape(1, Q_SIZE)
    kw = k_norm_w.reshape(1, KV_SIZE)
    wqkv_bf = wqkv.astype(jnp.bfloat16)
    wo_bf = wo.astype(jnp.bfloat16)

    cparams = pltpu.CompilerParams(
        dimension_semantics=("parallel",),          # megacore-friendly on v7x
        vmem_limit_bytes=32 * 1024 * 1024)          # explicit VMEM budget

    # ---- Pass 1: QKV projection + qk RMSNorm + RoPE, tiled over tokens ------
    q_r, k_r, v_r = pl.pallas_call(
        qkv_rope_kernel,
        grid=(n_tiles,),
        in_specs=[
            pl.BlockSpec((TILE_T, H), lambda i: (i, 0)),          # hidden tile
            pl.BlockSpec(wqkv_bf.shape, lambda i: (0, 0)),        # resident
            pl.BlockSpec((1, Q_SIZE), lambda i: (0, 0)),          # resident
            pl.BlockSpec((1, KV_SIZE), lambda i: (0, 0)),         # resident
            pl.BlockSpec((TILE_T, HEAD_DIM), lambda i: (i, 0)),   # cos tile
            pl.BlockSpec((TILE_T, HEAD_DIM), lambda i: (i, 0)),   # sin tile
            pl.BlockSpec((HEAD_DIM, HEAD_DIM), lambda i: (0, 0)),  # resident
        ],
        out_specs=[
            pl.BlockSpec((TILE_T, Q_SIZE), lambda i: (i, 0)),
            pl.BlockSpec((TILE_T, KV_SIZE), lambda i: (i, 0)),
            pl.BlockSpec((TILE_T, KV_SIZE), lambda i: (i, 0)),
        ],
        out_shape=[
            jax.ShapeDtypeStruct((T, Q_SIZE), jnp.bfloat16),
            jax.ShapeDtypeStruct((T, KV_SIZE), jnp.bfloat16),
            jax.ShapeDtypeStruct((T, KV_SIZE), jnp.bfloat16),
        ],
        compiler_params=cparams,
    )(hidden_states, wqkv_bf, qw, kw, cos, sin, rot)

    # ---- Pass 2: causal GQA attention + output projection, per query tile ---
    out = pl.pallas_call(
        attn_o_kernel,
        grid=(n_tiles,),
        in_specs=[
            pl.BlockSpec((TILE_T, Q_SIZE), lambda i: (i, 0)),     # q tile
            pl.BlockSpec((T, KV_SIZE), lambda i: (0, 0)),         # K resident
            pl.BlockSpec((T, KV_SIZE), lambda i: (0, 0)),         # V resident
            pl.BlockSpec((Q_SIZE, H), lambda i: (0, 0)),          # wo resident
        ],
        out_specs=pl.BlockSpec((TILE_T, H), lambda i: (i, 0)),
        out_shape=jax.ShapeDtypeStruct((T, H), jnp.float32),
        compiler_params=cparams,
    )(q_r, k_r, v_r, wo_bf)
    return out


# ------------------------------ Pure-JAX reference ----------------------------
def olmoe_attention_ref(positions, hidden_states, wqkv, wo, q_norm_w, k_norm_w):
    qkv = hidden_states @ wqkv
    q, k, v = jnp.split(qkv, [Q_SIZE, Q_SIZE + KV_SIZE], axis=-1)

    def rms(x, w):
        var = jnp.mean(x * x, axis=-1, keepdims=True)
        return x * jax.lax.rsqrt(var + EPS) * w

    q = rms(q, q_norm_w)
    k = rms(k, k_norm_w)

    inv_freq = 1.0 / (ROPE_THETA ** (
        jnp.arange(0, HEAD_DIM, 2, dtype=jnp.float32) / HEAD_DIM))
    ang = positions.astype(jnp.float32)[:, None] * inv_freq[None, :]
    c, s = jnp.cos(ang), jnp.sin(ang)

    def rope(x):  # x: [T, n_heads*hd], neox style
        T = x.shape[0]
        xh = x.reshape(T, -1, HEAD_DIM)
        x1, x2 = xh[..., :HEAD_DIM // 2], xh[..., HEAD_DIM // 2:]
        o1 = x1 * c[:, None, :] - x2 * s[:, None, :]
        o2 = x2 * c[:, None, :] + x1 * s[:, None, :]
        return jnp.concatenate([o1, o2], axis=-1).reshape(T, -1)

    q, k = rope(q), rope(k)
    T = hidden_states.shape[0]
    qh = q.reshape(T, NUM_HEADS, HEAD_DIM)
    kh = jnp.repeat(k.reshape(T, NUM_KV_HEADS, HEAD_DIM), GROUP, axis=1)
    vh = jnp.repeat(v.reshape(T, NUM_KV_HEADS, HEAD_DIM), GROUP, axis=1)

    scores = jnp.einsum('thd,shd->hts', qh, kh) * SCALING
    mask = jnp.tril(jnp.ones((T, T), bool))
    scores = jnp.where(mask[None], scores, NEG_INF)
    p = jax.nn.softmax(scores, axis=-1)
    out = jnp.einsum('hts,shd->thd', p, vh).reshape(T, Q_SIZE)
    return out @ wo


# ------------------------------------- Main ------------------------------------
if __name__ == "__main__":
    key = jax.random.PRNGKey(0)
    k1, k2, k3, k4, k5 = jax.random.split(key, 5)

    hidden_states = jax.random.normal(k5, (SEQ_LEN, HIDDEN_SIZE), jnp.float32)
    positions = jnp.arange(SEQ_LEN, dtype=jnp.int32)

    wqkv = 0.02 * jax.random.normal(k1, (HIDDEN_SIZE, Q_SIZE + 2 * KV_SIZE),
                                    jnp.float32)
    wo = 0.02 * jax.random.normal(k2, (Q_SIZE, HIDDEN_SIZE), jnp.float32)
    q_norm_w = 1.0 + 0.1 * jax.random.normal(k3, (Q_SIZE,), jnp.float32)
    k_norm_w = 1.0 + 0.1 * jax.random.normal(k4, (KV_SIZE,), jnp.float32)

    out = olmoe_attention(positions, hidden_states, wqkv, wo,
                          q_norm_w, k_norm_w)
    out = jax.block_until_ready(out)

    ref = olmoe_attention_ref(positions, hidden_states, wqkv, wo,
                              q_norm_w, k_norm_w)
    assert out.shape == (SEQ_LEN, HIDDEN_SIZE)
    max_err = jnp.max(jnp.abs(out - ref))
    # bf16 matmul path vs f32 reference -> loose-but-meaningful tolerance.
    assert jnp.allclose(out, ref, atol=3e-2, rtol=3e-2), (
        f"max abs err {max_err}")

    print("KERNEL_OK")
</pallas_src>

<mosaic_0001>
module attributes {stable_mosaic.version = 11 : i64} {
  func.func @qkv_rope_kernel(%arg0: i32, %arg1: memref<128x256xf32, #tpu.memory_space<vmem>>, %arg2: memref<256x512xbf16, #tpu.memory_space<vmem>>, %arg3: memref<1x256xf32, #tpu.memory_space<vmem>>, %arg4: memref<1x128xf32, #tpu.memory_space<vmem>>, %arg5: memref<128x128xf32, #tpu.memory_space<vmem>>, %arg6: memref<128x128xf32, #tpu.memory_space<vmem>>, %arg7: memref<128x128xf32, #tpu.memory_space<vmem>>, %arg8: memref<128x256xbf16, #tpu.memory_space<vmem>>, %arg9: memref<128x128xbf16, #tpu.memory_space<vmem>>, %arg10: memref<128x128xbf16, #tpu.memory_space<vmem>>) attributes {dimension_semantics = [#tpu.dimension_semantics<parallel>], iteration_bounds = array<i64: 2>, scalar_prefetch = 0 : i64, scratch_operands = 0 : i64, tpu.core_type = #tpu.core_type<tc>, window_params = [{transform_indices = @transform_0, window_bounds = array<i64: 128, 256>}, {pipeline_mode = #tpu.pipeline_mode<synchronous>, transform_indices = @transform_1, window_bounds = array<i64: 256, 512>}, {pipeline_mode = #tpu.pipeline_mode<synchronous>, transform_indices = @transform_2, window_bounds = array<i64: 1, 256>}, {pipeline_mode = #tpu.pipeline_mode<synchronous>, transform_indices = @transform_3, window_bounds = array<i64: 1, 128>}, {transform_indices = @transform_4, window_bounds = array<i64: 128, 128>}, {transform_indices = @transform_5, window_bounds = array<i64: 128, 128>}, {pipeline_mode = #tpu.pipeline_mode<synchronous>, transform_indices = @transform_6, window_bounds = array<i64: 128, 128>}, {transform_indices = @transform_7, window_bounds = array<i64: 128, 256>}, {transform_indices = @transform_8, window_bounds = array<i64: 128, 128>}, {transform_indices = @transform_9, window_bounds = array<i64: 128, 128>}]} {
    %c0 = arith.constant 0 : index
    %c0_0 = arith.constant 0 : index
    %0 = vector.load %arg1[%c0, %c0_0] : memref<128x256xf32, #tpu.memory_space<vmem>>, vector<128x256xf32>
    %1 = arith.truncf %0 : vector<128x256xf32> to vector<128x256xbf16>
    %c0_1 = arith.constant 0 : index
    %c0_2 = arith.constant 0 : index
    %2 = vector.load %arg2[%c0_1, %c0_2] : memref<256x512xbf16, #tpu.memory_space<vmem>>, vector<256x512xbf16>
    %cst = arith.constant dense<0.000000e+00> : vector<128x512xf32>
    %3 = tpu.matmul %1, %2, %cst {dimension_numbers = #tpu.dot_dimension_numbers<[1], [0], [0], [1], [0, 0, 1, 1], [], []>} : vector<128x256xbf16>, vector<256x512xbf16>, vector<128x512xf32> -> vector<128x512xf32>
    %4 = vector.extract_strided_slice %3 {offsets = [0, 0], sizes = [128, 256], strides = [1, 1]} : vector<128x512xf32> to vector<128x256xf32>
    %5 = vector.extract_strided_slice %3 {offsets = [0, 256], sizes = [128, 128], strides = [1, 1]} : vector<128x512xf32> to vector<128x128xf32>
    %6 = vector.extract_strided_slice %3 {offsets = [0, 384], sizes = [128, 128], strides = [1, 1]} : vector<128x512xf32> to vector<128x128xf32>
    %c0_3 = arith.constant 0 : index
    %c0_4 = arith.constant 0 : index
    %7 = vector.load %arg3[%c0_3, %c0_4] : memref<1x256xf32, #tpu.memory_space<vmem>>, vector<1x256xf32>
    %8 = arith.mulf %4, %4 : vector<128x256xf32>
    %cst_5 = arith.constant dense<0.000000e+00> : vector<128xf32>
    %9 = vector.multi_reduction <add>, %8, %cst_5 [1] : vector<128x256xf32> to vector<128xf32>
    %10 = vector.shape_cast %9 : vector<128xf32> to vector<128x1xf32>
    %cst_6 = arith.constant 2.560000e+02 : f32
    %11 = vector.broadcast %cst_6 : f32 to vector<128x1xf32>
    %12 = arith.divf %10, %11 : vector<128x1xf32>
    %cst_7 = arith.constant 9.99999974E-6 : f32
    %13 = vector.broadcast %cst_7 : f32 to vector<128x1xf32>
    %14 = arith.addf %12, %13 : vector<128x1xf32>
    %15 = math.rsqrt %14 : vector<128x1xf32>
    %16 = vector.broadcast %15 : vector<128x1xf32> to vector<128x256xf32>
    %17 = arith.mulf %4, %16 : vector<128x256xf32>
    %18 = vector.broadcast %7 : vector<1x256xf32> to vector<128x256xf32>
    %19 = arith.mulf %17, %18 : vector<128x256xf32>
    %c0_8 = arith.constant 0 : index
    %c0_9 = arith.constant 0 : index
    %20 = vector.load %arg4[%c0_8, %c0_9] : memref<1x128xf32, #tpu.memory_space<vmem>>, vector<1x128xf32>
    %21 = arith.mulf %5, %5 : vector<128x128xf32>
    %cst_10 = arith.constant dense<0.000000e+00> : vector<128xf32>
    %22 = vector.multi_reduction <add>, %21, %cst_10 [1] : vector<128x128xf32> to vector<128xf32>
    %23 = vector.shape_cast %22 : vector<128xf32> to vector<128x1xf32>
    %cst_11 = arith.constant 1.280000e+02 : f32
    %24 = vector.broadcast %cst_11 : f32 to vector<128x1xf32>
    %25 = arith.divf %23, %24 : vector<128x1xf32>
    %cst_12 = arith.constant 9.99999974E-6 : f32
    %26 = vector.broadcast %cst_12 : f32 to vector<128x1xf32>
    %27 = arith.addf %25, %26 : vector<128x1xf32>
    %28 = math.rsqrt %27 : vector<128x1xf32>
    %29 = vector.broadcast %28 : vector<128x1xf32> to vector<128x128xf32>
    %30 = arith.mulf %5, %29 : vector<128x128xf32>
    %31 = vector.broadcast %20 : vector<1x128xf32> to vector<128x128xf32>
    %32 = arith.mulf %30, %31 : vector<128x128xf32>
    %c0_13 = arith.constant 0 : index
    %c0_14 = arith.constant 0 : index
    %33 = vector.load %arg5[%c0_13, %c0_14] : memref<128x128xf32, #tpu.memory_space<vmem>>, vector<128x128xf32>
    %c0_15 = arith.constant 0 : index
    %c0_16 = arith.constant 0 : index
    %34 = vector.load %arg6[%c0_15, %c0_16] : memref<128x128xf32, #tpu.memory_space<vmem>>, vector<128x128xf32>
    %c0_17 = arith.constant 0 : index
    %c0_18 = arith.constant 0 : index
    %35 = vector.load %arg7[%c0_17, %c0_18] : memref<128x128xf32, #tpu.memory_space<vmem>>, vector<128x128xf32>
    %36 = vector.extract_strided_slice %19 {offsets = [0, 0], sizes = [128, 128], strides = [1, 1]} : vector<128x256xf32> to vector<128x128xf32>
    %cst_19 = arith.constant dense<0.000000e+00> : vector<128x128xf32>
    %37 = tpu.matmul %36, %35, %cst_19 {dimension_numbers = #tpu.dot_dimension_numbers<[1], [0], [0], [1], [0, 0, 1, 1], [], []>} : vector<128x128xf32>, vector<128x128xf32>, vector<128x128xf32> -> vector<128x128xf32>
    %38 = arith.mulf %36, %33 : vector<128x128xf32>
    %39 = arith.mulf %37, %34 : vector<128x128xf32>
    %40 = arith.addf %38, %39 : vector<128x128xf32>
    %41 = vector.extract_strided_slice %19 {offsets = [0, 128], sizes = [128, 128], strides = [1, 1]} : vector<128x256xf32> to vector<128x128xf32>
    %cst_20 = arith.constant dense<0.000000e+00> : vector<128x128xf32>
    %42 = tpu.matmul %41, %35, %cst_20 {dimension_numbers = #tpu.dot_dimension_numbers<[1], [0], [0], [1], [0, 0, 1, 1], [], []>} : vector<128x128xf32>, vector<128x128xf32>, vector<128x128xf32> -> vector<128x128xf32>
    %43 = arith.mulf %41, %33 : vector<128x128xf32>
    %44 = arith.mulf %42, %34 : vector<128x128xf32>
    %45 = arith.addf %43, %44 : vector<128x128xf32>
    %cst_21 = arith.constant dense<0.000000e+00> : vector<128x128xf32>
    %46 = tpu.matmul %32, %35, %cst_21 {dimension_numbers = #tpu.dot_dimension_numbers<[1], [0], [0], [1], [0, 0, 1, 1], [], []>} : vector<128x128xf32>, vector<128x128xf32>, vector<128x128xf32> -> vector<128x128xf32>
    %47 = arith.mulf %32, %33 : vector<128x128xf32>
    %48 = arith.mulf %46, %34 : vector<128x128xf32>
    %49 = arith.addf %47, %48 : vector<128x128xf32>
    %50 = tpu.concatenate %40, %45 in 1 : vector<128x128xf32>, vector<128x128xf32> -> vector<128x256xf32>
    %51 = arith.truncf %50 : vector<128x256xf32> to vector<128x256xbf16>
    %c0_22 = arith.constant 0 : index
    %c0_23 = arith.constant 0 : index
    %52 = vector.load %arg8[%c0_22, %c0_23] : memref<128x256xbf16, #tpu.memory_space<vmem>>, vector<128x256xbf16>
    tpu.vector_store %arg8[%c0_22, %c0_23], %51 {strides = array<i32>} : memref<128x256xbf16, #tpu.memory_space<vmem>>, vector<128x256xbf16>,
    %53 = arith.truncf %49 : vector<128x128xf32> to vector<128x128xbf16>
    %c0_24 = arith.constant 0 : index
    %c0_25 = arith.constant 0 : index
    %54 = vector.load %arg9[%c0_24, %c0_25] : memref<128x128xbf16, #tpu.memory_space<vmem>>, vector<128x128xbf16>
    tpu.vector_store %arg9[%c0_24, %c0_25], %53 {strides = array<i32>} : memref<128x128xbf16, #tpu.memory_space<vmem>>, vector<128x128xbf16>,
    %55 = arith.truncf %6 : vector<128x128xf32> to vector<128x128xbf16>
    %c0_26 = arith.constant 0 : index
    %c0_27 = arith.constant 0 : index
    %56 = vector.load %arg10[%c0_26, %c0_27] : memref<128x128xbf16, #tpu.memory_space<vmem>>, vector<128x128xbf16>
    tpu.vector_store %arg10[%c0_26, %c0_27], %55 {strides = array<i32>} : memref<128x128xbf16, #tpu.memory_space<vmem>>, vector<128x128xbf16>,
    return
  }
  func.func @transform_0(%arg0: i32) -> (i32, i32) {
    %c0_i32 = arith.constant 0 : i32
    %c0_i32_0 = arith.constant 0 : i32
    return %arg0, %c0_i32 : i32, i32
  }
  func.func @transform_1(%arg0: i32) -> (i32, i32) {
    %c0_i32 = arith.constant 0 : i32
    %c0_i32_0 = arith.constant 0 : i32
    %c0_i32_1 = arith.constant 0 : i32
    return %c0_i32, %c0_i32_0 : i32, i32
  }
  func.func @transform_2(%arg0: i32) -> (i32, i32) {
    %c0_i32 = arith.constant 0 : i32
    %c0_i32_0 = arith.constant 0 : i32
    %c0_i32_1 = arith.constant 0 : i32
    return %c0_i32, %c0_i32_0 : i32, i32
  }
  func.func @transform_3(%arg0: i32) -> (i32, i32) {
    %c0_i32 = arith.constant 0 : i32
    %c0_i32_0 = arith.constant 0 : i32
    %c0_i32_1 = arith.constant 0 : i32
    return %c0_i32, %c0_i32_0 : i32, i32
  }
  func.func @transform_4(%arg0: i32) -> (i32, i32) {
    %c0_i32 = arith.constant 0 : i32
    %c0_i32_0 = arith.constant 0 : i32
    return %arg0, %c0_i32 : i32, i32
  }
  func.func @transform_5(%arg0: i32) -> (i32, i32) {
    %c0_i32 = arith.constant 0 : i32
    %c0_i32_0 = arith.constant 0 : i32
    return %arg0, %c0_i32 : i32, i32
  }
  func.func @transform_6(%arg0: i32) -> (i32, i32) {
    %c0_i32 = arith.constant 0 : i32
    %c0_i32_0 = arith.constant 0 : i32
    %c0_i32_1 = arith.constant 0 : i32
    return %c0_i32, %c0_i32_0 : i32, i32
  }
  func.func @transform_7(%arg0: i32) -> (i32, i32) {
    %c0_i32 = arith.constant 0 : i32
    %c0_i32_0 = arith.constant 0 : i32
    return %arg0, %c0_i32 : i32, i32
  }
  func.func @transform_8(%arg0: i32) -> (i32, i32) {
    %c0_i32 = arith.constant 0 : i32
    %c0_i32_0 = arith.constant 0 : i32
    return %arg0, %c0_i32 : i32, i32
  }
  func.func @transform_9(%arg0: i32) -> (i32, i32) {
    %c0_i32 = arith.constant 0 : i32
    %c0_i32_0 = arith.constant 0 : i32
    return %arg0, %c0_i32 : i32, i32
  }
}

module attributes {stable_mosaic.version = 11 : i64} {
  func.func @attn_o_kernel(%arg0: i32, %arg1: memref<128x256xbf16, #tpu.memory_space<vmem>>, %arg2: memref<256x128xbf16, #tpu.memory_space<vmem>>, %arg3: memref<256x128xbf16, #tpu.memory_space<vmem>>, %arg4: memref<256x256xbf16, #tpu.memory_space<vmem>>, %arg5: memref<128x256xf32, #tpu.memory_space<vmem>>) attributes {dimension_semantics = [#tpu.dimension_semantics<parallel>], iteration_bounds = array<i64: 2>, scalar_prefetch = 0 : i64, scratch_operands = 0 : i64, tpu.core_type = #tpu.core_type<tc>, window_params = [{transform_indices = @transform_0, window_bounds = array<i64: 128, 256>}, {pipeline_mode = #tpu.pipeline_mode<synchronous>, transform_indices = @transform_1, window_bounds = array<i64: 256, 128>}, {pipeline_mode = #tpu.pipeline_mode<synchronous>, transform_indices = @transform_2, window_bounds = array<i64: 256, 128>}, {pipeline_mode = #tpu.pipeline_mode<synchronous>, transform_indices = @transform_3, window_bounds = array<i64: 256, 256>}, {transform_indices = @transform_4, window_bounds = array<i64: 128, 256>}]} {
    %c128_i32 = arith.constant 128 : i32
    %0 = arith.muli %arg0, %c128_i32 : i32
    %1 = tpu.iota {dimensions = array<i32: 0>} : vector<128x256xi32>
    %2 = vector.broadcast %0 : i32 to vector<128x256xi32>
    %3 = arith.addi %2, %1 : vector<128x256xi32>
    %4 = tpu.iota {dimensions = array<i32: 1>} : vector<128x256xi32>
    %5 = arith.cmpi sge, %3, %4 : vector<128x256xi32>
    %cst = arith.constant 0.000000e+00 : f32
    %cst_0 = arith.constant -1.000000e+30 : f32
    %6 = vector.broadcast %cst : f32 to vector<128x256xf32>
    %7 = vector.broadcast %cst_0 : f32 to vector<128x256xf32>
    %8 = arith.select %5, %6, %7 : vector<128x256xi1>, vector<128x256xf32>
    %9 = tpu.concatenate %8, %8 in 0 : vector<128x256xf32>, vector<128x256xf32> -> vector<256x256xf32>
    %c0 = arith.constant 0 : index
    %c0_1 = arith.constant 0 : index
    %10 = vector.load %arg1[%c0, %c0_1] : memref<128x256xbf16, #tpu.memory_space<vmem>>, vector<128x256xbf16>
    %c0_2 = arith.constant 0 : index
    %c0_3 = arith.constant 0 : index
    %11 = vector.load %arg2[%c0_2, %c0_3] : memref<256x128xbf16, #tpu.memory_space<vmem>>, vector<256x128xbf16>
    %c0_4 = arith.constant 0 : index
    %c0_5 = arith.constant 0 : index
    %12 = vector.load %arg3[%c0_4, %c0_5] : memref<256x128xbf16, #tpu.memory_space<vmem>>, vector<256x128xbf16>
    %13 = vector.extract_strided_slice %10 {offsets = [0, 0], sizes = [128, 128], strides = [1, 1]} : vector<128x256xbf16> to vector<128x128xbf16>
    %14 = vector.extract_strided_slice %10 {offsets = [0, 128], sizes = [128, 128], strides = [1, 1]} : vector<128x256xbf16> to vector<128x128xbf16>
    %15 = tpu.concatenate %13, %14 in 0 : vector<128x128xbf16>, vector<128x128xbf16> -> vector<256x128xbf16>
    %cst_6 = arith.constant dense<0.000000e+00> : vector<256x256xf32>
    %16 = tpu.matmul %15, %11, %cst_6 {dimension_numbers = #tpu.dot_dimension_numbers<[1], [1], [0], [0], [0, 0, 1, 0], [], []>} : vector<256x128xbf16>, vector<256x128xbf16>, vector<256x256xf32> -> vector<256x256xf32>
    %cst_7 = arith.constant 0.0883883461 : f32
    %17 = vector.broadcast %cst_7 : f32 to vector<256x256xf32>
    %18 = arith.mulf %16, %17 : vector<256x256xf32>
    %19 = arith.addf %18, %9 : vector<256x256xf32>
    %cst_8 = arith.constant dense<0xFF800000> : vector<256xf32>
    %20 = vector.multi_reduction <maximumf>, %19, %cst_8 [1] : vector<256x256xf32> to vector<256xf32>
    %21 = vector.shape_cast %20 : vector<256xf32> to vector<256x1xf32>
    %22 = vector.broadcast %21 : vector<256x1xf32> to vector<256x256xf32>
    %23 = arith.subf %19, %22 : vector<256x256xf32>
    %24 = math.exp %23 : vector<256x256xf32>
    %cst_9 = arith.constant dense<0.000000e+00> : vector<256xf32>
    %25 = vector.multi_reduction <add>, %24, %cst_9 [1] : vector<256x256xf32> to vector<256xf32>
    %26 = vector.shape_cast %25 : vector<256xf32> to vector<256x1xf32>
    %27 = arith.truncf %24 : vector<256x256xf32> to vector<256x256xbf16>
    %cst_10 = arith.constant dense<0.000000e+00> : vector<256x128xf32>
    %28 = tpu.matmul %27, %12, %cst_10 {dimension_numbers = #tpu.dot_dimension_numbers<[1], [0], [0], [1], [0, 0, 1, 1], [], []>} : vector<256x256xbf16>, vector<256x128xbf16>, vector<256x128xf32> -> vector<256x128xf32>
    %29 = vector.broadcast %26 : vector<256x1xf32> to vector<256x128xf32>
    %30 = arith.divf %28, %29 : vector<256x128xf32>
    %31 = vector.extract_strided_slice %30 {offsets = [0, 0], sizes = [128, 128], strides = [1, 1]} : vector<256x128xf32> to vector<128x128xf32>
    %32 = vector.extract_strided_slice %30 {offsets = [128, 0], sizes = [128, 128], strides = [1, 1]} : vector<256x128xf32> to vector<128x128xf32>
    %33 = tpu.concatenate %31, %32 in 1 : vector<128x128xf32>, vector<128x128xf32> -> vector<128x256xf32>
    %34 = arith.truncf %33 : vector<128x256xf32> to vector<128x256xbf16>
    %c0_11 = arith.constant 0 : index
    %c0_12 = arith.constant 0 : index
    %35 = vector.load %arg4[%c0_11, %c0_12] : memref<256x256xbf16, #tpu.memory_space<vmem>>, vector<256x256xbf16>
    %cst_13 = arith.constant dense<0.000000e+00> : vector<128x256xf32>
    %36 = tpu.matmul %34, %35, %cst_13 {dimension_numbers = #tpu.dot_dimension_numbers<[1], [0], [0], [1], [0, 0, 1, 1], [], []>} : vector<128x256xbf16>, vector<256x256xbf16>, vector<128x256xf32> -> vector<128x256xf32>
    %c0_14 = arith.constant 0 : index
    %c0_15 = arith.constant 0 : index
    %37 = vector.load %arg5[%c0_14, %c0_15] : memref<128x256xf32, #tpu.memory_space<vmem>>, vector<128x256xf32>
    tpu.vector_store %arg5[%c0_14, %c0_15], %36 {strides = array<i32>} : memref<128x256xf32, #tpu.memory_space<vmem>>, vector<128x256xf32>,
    return
  }
  func.func @transform_0(%arg0: i32) -> (i32, i32) {
    %c0_i32 = arith.constant 0 : i32
    %c0_i32_0 = arith.constant 0 : i32
    return %arg0, %c0_i32 : i32, i32
  }
  func.func @transform_1(%arg0: i32) -> (i32, i32) {
    %c0_i32 = arith.constant 0 : i32
    %c0_i32_0 = arith.constant 0 : i32
    %c0_i32_1 = arith.constant 0 : i32
    return %c0_i32, %c0_i32_0 : i32, i32
  }
  func.func @transform_2(%arg0: i32) -> (i32, i32) {
    %c0_i32 = arith.constant 0 : i32
    %c0_i32_0 = arith.constant 0 : i32
    %c0_i32_1 = arith.constant 0 : i32
    return %c0_i32, %c0_i32_0 : i32, i32
  }
  func.func @transform_3(%arg0: i32) -> (i32, i32) {
    %c0_i32 = arith.constant 0 : i32
    %c0_i32_0 = arith.constant 0 : i32
    %c0_i32_1 = arith.constant 0 : i32
    return %c0_i32, %c0_i32_0 : i32, i32
  }
  func.func @transform_4(%arg0: i32) -> (i32, i32) {
    %c0_i32 = arith.constant 0 : i32
    %c0_i32_0 = arith.constant 0 : i32
    return %arg0, %c0_i32 : i32, i32
  }
}

</mosaic_0001>

<llo_original>
// kernel: olmoe_attention.3
$region0: #{olmoe_attention.3}
  #allocation0 [shape = 'u32[]', space=smem, size = 0x4, offset = 0x4, fixed_abs, tag = 'smem constant byte address 0x4 - core index']
  #allocation1 [shape = 'u32[72,128]{1,0:T(1,128)}', space=vmem, size = 0x9000, scoped, tag = 'internal scratch']
  %s0 = inlined_call_operand.vmem [shape: bf16[256,256], index: 0, kind: input, shape index: {}]
  %s1 = inlined_call_operand.vmem [shape: bf16[256,128], index: 1, kind: input, shape index: {}]
  %s2 = inlined_call_operand.vmem [shape: bf16[256,128], index: 2, kind: input, shape index: {}]
  %s3 = inlined_call_operand.vmem [shape: bf16[256,256], index: 3, kind: input, shape index: {}]
  %s4 = inlined_call_operand.hbm [shape: f32[256,256], index: 4, kind: output, shape index: {}]
  %s5 = sld [smem:[#allocation0]]
  $region49: #{olmoe_attention.3} parent=0
    _
  %s7 = ssub.s32 1, %s5
  %s8 = scalar_select 0, %s7, %s5
  $region1: #{olmoe_attention.3} parent=0
    #allocation2 [shape = 'u8[262144]{0}', space=vmem, size = 0x40000, scoped, tag = 'output window, operand 0']
    #allocation3 [shape = 's32[2]{0}', space=sflag, size = 0x8, scoped, tag = 'scoped memory for olmoe_attention.3']
    %9 = vsyncpa [#allocation3], 0
    %s10 = scalar_lea.sflag [#allocation3], 1
    %11 = vsyncpa %s10, 0
    loop: start=0, step=1, limit=4
    $region2: #{olmoe_attention.3} parent=1 // loop_pre_header
      _
    $region3: #{olmoe_attention.3} parent=1 // loop_header
      %s13 = sphi 0, %s17
      %p14 = scmp.ge.s32.totalorder %s13, 4
      %s23 = sphi 0, %s25
      %s26 = sphi 0, %s23
      %s27 = sphi 0, %s26
      %s43 = sphi 0, %s27
      %s47 = sphi 0, %s47
      %s49 = sphi 0, %s47
      %s50 = sphi 0, %s49
      %s64 = sphi 0, %s50
      %s68 = sphi 0, %s68
      %s70 = sphi 0, %s68
      %s71 = sphi 0, %s70
      %s85 = sphi 0, %s71
      %s89 = sphi 0, %s89
      %s91 = sphi 0, %s89
      %s92 = sphi 0, %s91
      %s106 = sphi 0, %s92
      %s112 = sphi 0, %s114
      %s115 = sphi 0, %s112
      %s116 = sphi 0, %s115
      %s132 = sphi 0, %s116
    $region4: #{olmoe_attention.3} parent=1 // loop_header_branch
      %16 = sbr.rel (%p14) target = $region8
    $region5: #{olmoe_attention.3} parent=1 // loop_body
      %s18 = ssub.s32 %s13, 1
      %s19 = ssub.s32 %s13, 2
      %s20 = sadd.s32 %s13, 1
      %s21 = ssub.s32 %s13, %s20
      %p22 = scmp.eq.s32.totalorder %s21, 0
      %s24 = sadd.s32 %s23, 1
      %s25 = scalar_select %p22, %s23, %s24
      %p28 = pneg %p22
      %p29 = scmp.eq.s32.totalorder %s13, 1
      %p30 = por %p28, %p29
      %p31 = scmp.ne.s32.totalorder %s23, %s26
      %p32 = scmp.eq.s32.totalorder %s13, 0
      %p33 = por %p31, %p32
      %p34 = scmp.ne.s32.totalorder %s23, %s26
      %p35 = scmp.eq.s32.totalorder %s18, 1
      %p36 = por %p34, %p35
      %p37 = scmp.ne.s32.totalorder %s26, %s27
      %p38 = scmp.eq.s32.totalorder %s18, 0
      %p39 = por %p37, %p38
      %p40 = scmp.ne.s32.totalorder %s26, %s27
      %p41 = scmp.eq.s32.totalorder %s19, 1
      %p42 = por %p40, %p41
      %p44 = scmp.ne.s32.totalorder %s27, %s43
      %p45 = scmp.eq.s32.totalorder %s19, 0
      %p46 = por %p44, %p45
      %s48 = sadd.s32 %s47, 1
      %p51 = scmp.eq.s32.totalorder %s13, 1
      %p52 = scmp.ne.s32.totalorder %s47, %s49
      %p53 = scmp.eq.s32.totalorder %s13, 0
      %p54 = por %p52, %p53
      %p55 = scmp.ne.s32.totalorder %s47, %s49
      %p56 = scmp.eq.s32.totalorder %s18, 1
      %p57 = por %p55, %p56
      %p58 = scmp.ne.s32.totalorder %s49, %s50
      %p59 = scmp.eq.s32.totalorder %s18, 0
      %p60 = por %p58, %p59
      %p61 = scmp.ne.s32.totalorder %s49, %s50
      %p62 = scmp.eq.s32.totalorder %s19, 1
      %p63 = por %p61, %p62
      %p65 = scmp.ne.s32.totalorder %s50, %s64
      %p66 = scmp.eq.s32.totalorder %s19, 0
      %p67 = por %p65, %p66
      %s69 = sadd.s32 %s68, 1
      %p72 = scmp.eq.s32.totalorder %s13, 1
      %p73 = scmp.ne.s32.totalorder %s68, %s70
      %p74 = scmp.eq.s32.totalorder %s13, 0
      %p75 = por %p73, %p74
      %p76 = scmp.ne.s32.totalorder %s68, %s70
      %p77 = scmp.eq.s32.totalorder %s18, 1
      %p78 = por %p76, %p77
      %p79 = scmp.ne.s32.totalorder %s70, %s71
      %p80 = scmp.eq.s32.totalorder %s18, 0
      %p81 = por %p79, %p80
      %p82 = scmp.ne.s32.totalorder %s70, %s71
      %p83 = scmp.eq.s32.totalorder %s19, 1
      %p84 = por %p82, %p83
      %p86 = scmp.ne.s32.totalorder %s71, %s85
      %p87 = scmp.eq.s32.totalorder %s19, 0
      %p88 = por %p86, %p87
      %s90 = sadd.s32 %s89, 1
      %p93 = scmp.eq.s32.totalorder %s13, 1
      %p94 = scmp.ne.s32.totalorder %s89, %s91
      %p95 = scmp.eq.s32.totalorder %s13, 0
      %p96 = por %p94, %p95
      %p97 = scmp.ne.s32.totalorder %s89, %s91
      %p98 = scmp.eq.s32.totalorder %s18, 1
      %p99 = por %p97, %p98
      %p100 = scmp.ne.s32.totalorder %s91, %s92
      %p101 = scmp.eq.s32.totalorder %s18, 0
      %p102 = por %p100, %p101
      %p103 = scmp.ne.s32.totalorder %s91, %s92
      %p104 = scmp.eq.s32.totalorder %s19, 1
      %p105 = por %p103, %p104
      %p107 = scmp.ne.s32.totalorder %s92, %s106
      %p108 = scmp.eq.s32.totalorder %s19, 0
      %p109 = por %p107, %p108
      %s110 = ssub.s32 %s13, %s20
      %p111 = scmp.eq.s32.totalorder %s110, 0
      %s113 = sadd.s32 %s112, 1
      %s114 = scalar_select %p111, %s112, %s113
      %p117 = pneg %p111
      %p118 = scmp.eq.s32.totalorder %s13, 1
      %p119 = por %p117, %p118
      %p120 = scmp.ne.s32.totalorder %s112, %s115
      %p121 = scmp.eq.s32.totalorder %s13, 0
      %p122 = por %p120, %p121
      %p123 = scmp.ne.s32.totalorder %s112, %s115
      %p124 = scmp.eq.s32.totalorder %s18, 1
      %p125 = por %p123, %p124
      %p126 = scmp.ne.s32.totalorder %s115, %s116
      %p127 = scmp.eq.s32.totalorder %s18, 0
      %p128 = por %p126, %p127
      %p129 = scmp.ne.s32.totalorder %s115, %s116
      %p130 = scmp.eq.s32.totalorder %s19, 1
      %p131 = por %p129, %p130
      %p133 = scmp.ne.s32.totalorder %s116, %s132
      %p134 = scmp.eq.s32.totalorder %s19, 0
      %p135 = por %p133, %p134
      %p136 = scmp.le.s32.totalorder 1, %s13
      %p137 = scmp.lt.s32.totalorder %s13, 3
      %p138 = pnand %p136, %p137
      %p139 = pneg %p138
      // Predicated region
      $region9: #{olmoe_attention.3} parent=5 // pred_check
        _
      $region10: #{olmoe_attention.3} parent=5 // pred_check_branch
        %141 = sbr.rel (%p138) target = $region12
      $region11: #{olmoe_attention.3} parent=5 // pred_region
        %s142 = ssub.s32 %s13, 1
        // Predicated region
        $region13: #{olmoe_attention.3} parent=11 // pred_check
          %p143 = pneg %p60
        $region14: #{olmoe_attention.3} parent=11 // pred_check_branch
          %145 = sbr.rel (%p143) target = $region16
        $region15: #{olmoe_attention.3} parent=11 // pred_region
          _
        $region16: #{olmoe_attention.3} parent=11 // pred_fallthru
          _
        // Predicated region
        $region17: #{olmoe_attention.3} parent=11 // pred_check
          %p146 = pneg %p81
        $region18: #{olmoe_attention.3} parent=11 // pred_check_branch
          %148 = sbr.rel (%p146) target = $region20
        $region19: #{olmoe_attention.3} parent=11 // pred_region
          _
        $region20: #{olmoe_attention.3} parent=11 // pred_fallthru
          _
        // Predicated region
        $region21: #{olmoe_attention.3} parent=11 // pred_check
          %p149 = pneg %p102
        $region22: #{olmoe_attention.3} parent=11 // pred_check_branch
          %151 = sbr.rel (%p149) target = $region24
        $region23: #{olmoe_attention.3} parent=11 // pred_region
          _
        $region24: #{olmoe_attention.3} parent=11 // pred_fallthru
          _
      $region12: #{olmoe_attention.3} parent=5 // pred_fallthru
        _
      %p152 = scmp.lt.s32.totalorder %s13, 2
      // Predicated region
      $region25: #{olmoe_attention.3} parent=5 // pred_check
        %p153 = pneg %p152
      $region26: #{olmoe_attention.3} parent=5 // pred_check_branch
        %155 = sbr.rel (%p153) target = $region28
      $region27: #{olmoe_attention.3} parent=5 // pred_region
        // Predicated region
        $region29: #{olmoe_attention.3} parent=27 // pred_check
          %p156 = pneg %p33
        $region30: #{olmoe_attention.3} parent=27 // pred_check_branch
          %158 = sbr.rel (%p156) target = $region32
        $region31: #{olmoe_attention.3} parent=27 // pred_region
          %s159 = smul.u32 16, %s13
          %p160 = scmp.lt.s32.totalorder %s159, 31
          %s161 = scalar_select %p160, %s159, 31
          %s162 = smul.addr %s161, 2
          %s163 = smul.addr %s162, 4
          %s164 = scalar_lea.vmem %s0, %s163
          %s165 = smul.u32 16, %s13
        $region32: #{olmoe_attention.3} parent=27 // pred_fallthru
          _
      $region28: #{olmoe_attention.3} parent=5 // pred_fallthru
        _
      %p166 = scmp.le.s32.totalorder 1, %s13
      %p167 = scmp.lt.s32.totalorder %s13, 3
      %p168 = pnand %p166, %p167
      %p169 = pneg %p168
      // Predicated region
      $region33: #{olmoe_attention.3} parent=5 // pred_check
        _
      $region34: #{olmoe_attention.3} parent=5 // pred_check_branch
        %171 = sbr.rel (%p168) target = $region36
      $region35: #{olmoe_attention.3} parent=5 // pred_region
        %s172 = ssub.s32 %s13, 1
        %s173 = smul.u32 16, %s18
        %p174 = scmp.lt.s32.totalorder %s173, 31
        %s175 = scalar_select %p174, %s173, 31
        %s176 = smul.addr %s175, 2
        %s177 = smul.addr %s176, 4
        %s178 = scalar_lea.vmem %s0, %s177
        %p179 = pneg %p39
        %p180 = pneg %p36
        %p181 = pneg %p60
        %p182 = pneg %p57
        %p183 = pneg %p81
        %p184 = pneg %p78
        %p185 = pneg %p102
        %p186 = pneg %p99
        %p187 = pneg %p128
        %p188 = pneg %p125
        %s189 = sand.u32 %s115, 1
        %s190 = scalar_lea.sflag [#allocation3], %s189
        %s191 = sand.u32 %s115, 1
        %s192 = smul.addr %s191, 256
        %s193 = scalar_lea.vmem [#allocation2], %s192
        %s194 = smul.u32 16, %s18
        %p195 = scmp.lt.s32.totalorder %s194, 31
        %s196 = scalar_select %p195, %s194, 31
        %s197 = smul.addr %s196, 2
        %s198 = smul.addr %s197, 4
        %s199 = scalar_lea.vmem %s0, %s198
        %s200 = smul.u32 16, %s18
        %s201 = smul.u32 16, %s18
        %s202 = smul.u32 %s18, 128
        %v203 = vlaneseq
        %v204 = vshrl.u32 %v203, 7
        %v205 = vadd.s32 %v204, 8
        %v206 = vadd.s32 %v204, 16
        %v207 = vadd.s32 %v204, 24
        %v208 = vadd.s32 %v204, 32
        %v209 = vadd.s32 %v204, 40
        %v210 = vadd.s32 %v204, 48
        %v211 = vadd.s32 %v204, 56
        %v212 = vadd.s32 %v204, 64
        %v213 = vadd.s32 %v204, 72
        %v214 = vadd.s32 %v204, 80
        %v215 = vadd.s32 %v204, 88
        %v216 = vadd.s32 %v204, 96
        %v217 = vadd.s32 %v204, 104
        %v218 = vadd.s32 %v204, 112
        %v219 = vadd.s32 %v204, 120
        %v220 = vstv %s202
        %v221 = vadd.s32 %v220, %v204
        %v222 = vadd.s32 %v220, %v205
        %v223 = vadd.s32 %v220, %v206
        %v224 = vadd.s32 %v220, %v207
        %v225 = vadd.s32 %v220, %v208
        %v226 = vadd.s32 %v220, %v209
        %v227 = vadd.s32 %v220, %v210
        %v228 = vadd.s32 %v220, %v211
        %v229 = vadd.s32 %v220, %v212
        %v230 = vadd.s32 %v220, %v213
        %v231 = vadd.s32 %v220, %v214
        %v232 = vadd.s32 %v220, %v215
        %v233 = vadd.s32 %v220, %v216
        %v234 = vadd.s32 %v220, %v217
        %v235 = vadd.s32 %v220, %v218
        %v236 = vadd.s32 %v220, %v219
        %v237 = vlaneseq
        %v238 = vand.u32 %v237, 127
        %v239 = vadd.s32 %v238, 128
        %vm240 = vcmp.ge.s32.totalorder %v221, %v238
        %vm241 = vcmp.ge.s32.totalorder %v221, %v239
        %vm242 = vcmp.ge.s32.totalorder %v222, %v238
        %vm243 = vcmp.ge.s32.totalorder %v222, %v239
        %vm244 = vcmp.ge.s32.totalorder %v223, %v238
        %vm245 = vcmp.ge.s32.totalorder %v223, %v239
        %vm246 = vcmp.ge.s32.totalorder %v224, %v238
        %vm247 = vcmp.ge.s32.totalorder %v224, %v239
        %vm248 = vcmp.ge.s32.totalorder %v225, %v238
        %vm249 = vcmp.ge.s32.totalorder %v225, %v239
        %vm250 = vcmp.ge.s32.totalorder %v226, %v238
        %vm251 = vcmp.ge.s32.totalorder %v226, %v239
        %vm252 = vcmp.ge.s32.totalorder %v227, %v238
        %vm253 = vcmp.ge.s32.totalorder %v227, %v239
        %vm254 = vcmp.ge.s32.totalorder %v228, %v238
        %vm255 = vcmp.ge.s32.totalorder %v228, %v239
        %vm256 = vcmp.ge.s32.totalorder %v229, %v238
        %vm257 = vcmp.ge.s32.totalorder %v229, %v239
        %vm258 = vcmp.ge.s32.totalorder %v230, %v238
        %vm259 = vcmp.ge.s32.totalorder %v230, %v239
        %vm260 = vcmp.ge.s32.totalorder %v231, %v238
        %vm261 = vcmp.ge.s32.totalorder %v231, %v239
        %vm262 = vcmp.ge.s32.totalorder %v232, %v238
        %vm263 = vcmp.ge.s32.totalorder %v232, %v239
        %vm264 = vcmp.ge.s32.totalorder %v233, %v238
        %vm265 = vcmp.ge.s32.totalorder %v233, %v239
        %vm266 = vcmp.ge.s32.totalorder %v234, %v238
        %vm267 = vcmp.ge.s32.totalorder %v234, %v239
        %vm268 = vcmp.ge.s32.totalorder %v235, %v238
        %vm269 = vcmp.ge.s32.totalorder %v235, %v239
        %vm270 = vcmp.ge.s32.totalorder %v236, %v238
        %vm271 = vcmp.ge.s32.totalorder %v236, %v239
        %v272 = vsel %vm240, 0.0, -1e+30
        %v273 = vsel %vm241, 0.0, -1e+30
        %v274 = vsel %vm242, 0.0, -1e+30
        %v275 = vsel %vm243, 0.0, -1e+30
        %v276 = vsel %vm244, 0.0, -1e+30
        %v277 = vsel %vm245, 0.0, -1e+30
        %v278 = vsel %vm246, 0.0, -1e+30
        %v279 = vsel %vm247, 0.0, -1e+30
        %v280 = vsel %vm248, 0.0, -1e+30
        %v281 = vsel %vm249, 0.0, -1e+30
        %v282 = vsel %vm250, 0.0, -1e+30
        %v283 = vsel %vm251, 0.0, -1e+30
        %v284 = vsel %vm252, 0.0, -1e+30
        %v285 = vsel %vm253, 0.0, -1e+30
        %v286 = vsel %vm254, 0.0, -1e+30
        %v287 = vsel %vm255, 0.0, -1e+30
        %v288 = vsel %vm256, 0.0, -1e+30
        %v289 = vsel %vm257, 0.0, -1e+30
        %v290 = vsel %vm258, 0.0, -1e+30
        %v291 = vsel %vm259, 0.0, -1e+30
        %v292 = vsel %vm260, 0.0, -1e+30
        %v293 = vsel %vm261, 0.0, -1e+30
        %v294 = vsel %vm262, 0.0, -1e+30
        %v295 = vsel %vm263, 0.0, -1e+30
        %v296 = vsel %vm264, 0.0, -1e+30
        %v297 = vsel %vm265, 0.0, -1e+30
        %v298 = vsel %vm266, 0.0, -1e+30
        %v299 = vsel %vm267, 0.0, -1e+30
        %v300 = vsel %vm268, 0.0, -1e+30
        %v301 = vsel %vm269, 0.0, -1e+30
        %v302 = vsel %vm270, 0.0, -1e+30
        %v303 = vsel %vm271, 0.0, -1e+30
        %v304 = vld [vmem:[%s199] sm:$0xff]
        %v305 = vld [vmem:[%s199 + $0x8] sm:$0xff]
        %v306 = vld [vmem:[%s199 + $0x10] sm:$0xff]
        %v307 = vld [vmem:[%s199 + $0x18] sm:$0xff]
        %v308 = vld [vmem:[%s199 + $0x20] sm:$0xff]
        %v309 = vld [vmem:[%s199 + $0x28] sm:$0xff]
        %v310 = vld [vmem:[%s199 + $0x30] sm:$0xff]
        %v311 = vld [vmem:[%s199 + $0x38] sm:$0xff]
        %v312 = vld [vmem:[%s199 + $0x40] sm:$0xff]
        %v313 = vld [vmem:[%s199 + $0x48] sm:$0xff]
        %v314 = vld [vmem:[%s199 + $0x50] sm:$0xff]
        %v315 = vld [vmem:[%s199 + $0x58] sm:$0xff]
        %v316 = vld [vmem:[%s199 + $0x60] sm:$0xff]
        %v317 = vld [vmem:[%s199 + $0x68] sm:$0xff]
        %v318 = vld [vmem:[%s199 + $0x70] sm:$0xff]
        %v319 = vld [vmem:[%s199 + $0x78] sm:$0xff]
        %v320 = vld [vmem:[%s1] sm:$0xf]
        %v321 = vld [vmem:[%s1 + $0x4] sm:$0xf]
        %v322 = vld [vmem:[%s1 + $0x8] sm:$0xf]
        %v323 = vld [vmem:[%s1 + $0xc] sm:$0xf]
        %v324 = vld [vmem:[%s1 + $0x10] sm:$0xf]
        %v325 = vld [vmem:[%s1 + $0x14] sm:$0xf]
        %v326 = vld [vmem:[%s1 + $0x18] sm:$0xf]
        %v327 = vld [vmem:[%s1 + $0x1c] sm:$0xf]
        %v328 = vld [vmem:[%s1 + $0x20] sm:$0xf]
        %v329 = vld [vmem:[%s1 + $0x24] sm:$0xf]
        %v330 = vld [vmem:[%s1 + $0x28] sm:$0xf]
        %v331 = vld [vmem:[%s1 + $0x2c] sm:$0xf]
        %v332 = vld [vmem:[%s1 + $0x30] sm:$0xf]
        %v333 = vld [vmem:[%s1 + $0x34] sm:$0xf]
        %v334 = vld [vmem:[%s1 + $0x38] sm:$0xf]
        %v335 = vld [vmem:[%s1 + $0x3c] sm:$0xf]
        %v336 = vld [vmem:[%s1 + $0x40] sm:$0xf]
        %v337 = vld [vmem:[%s1 + $0x44] sm:$0xf]
        %v338 = vld [vmem:[%s1 + $0x48] sm:$0xf]
        %v339 = vld [vmem:[%s1 + $0x4c] sm:$0xf]
        %v340 = vld [vmem:[%s1 + $0x50] sm:$0xf]
        %v341 = vld [vmem:[%s1 + $0x54] sm:$0xf]
        %v342 = vld [vmem:[%s1 + $0x58] sm:$0xf]
        %v343 = vld [vmem:[%s1 + $0x5c] sm:$0xf]
        %v344 = vld [vmem:[%s1 + $0x60] sm:$0xf]
        %v345 = vld [vmem:[%s1 + $0x64] sm:$0xf]
        %v346 = vld [vmem:[%s1 + $0x68] sm:$0xf]
        %v347 = vld [vmem:[%s1 + $0x6c] sm:$0xf]
        %v348 = vld [vmem:[%s1 + $0x70] sm:$0xf]
        %v349 = vld [vmem:[%s1 + $0x74] sm:$0xf]
        %v350 = vld [vmem:[%s1 + $0x78] sm:$0xf]
        %v351 = vld [vmem:[%s1 + $0x7c] sm:$0xf]
        %v352 = vld [vmem:[%s2] sm:$0xf]
        %v353 = vld [vmem:[%s2 + $0x4] sm:$0xf]
        %v354 = vld [vmem:[%s2 + $0x8] sm:$0xf]
        %v355 = vld [vmem:[%s2 + $0xc] sm:$0xf]
        %v356 = vld [vmem:[%s2 + $0x10] sm:$0xf]
        %v357 = vld [vmem:[%s2 + $0x14] sm:$0xf]
        %v358 = vld [vmem:[%s2 + $0x18] sm:$0xf]
        %v359 = vld [vmem:[%s2 + $0x1c] sm:$0xf]
        %v360 = vld [vmem:[%s2 + $0x20] sm:$0xf]
        %v361 = vld [vmem:[%s2 + $0x24] sm:$0xf]
        %v362 = vld [vmem:[%s2 + $0x28] sm:$0xf]
        %v363 = vld [vmem:[%s2 + $0x2c] sm:$0xf]
        %v364 = vld [vmem:[%s2 + $0x30] sm:$0xf]
        %v365 = vld [vmem:[%s2 + $0x34] sm:$0xf]
        %v366 = vld [vmem:[%s2 + $0x38] sm:$0xf]
        %v367 = vld [vmem:[%s2 + $0x3c] sm:$0xf]
        %v368 = vld [vmem:[%s2 + $0x40] sm:$0xf]
        %v369 = vld [vmem:[%s2 + $0x44] sm:$0xf]
        %v370 = vld [vmem:[%s2 + $0x48] sm:$0xf]
        %v371 = vld [vmem:[%s2 + $0x4c] sm:$0xf]
        %v372 = vld [vmem:[%s2 + $0x50] sm:$0xf]
        %v373 = vld [vmem:[%s2 + $0x54] sm:$0xf]
        %v374 = vld [vmem:[%s2 + $0x58] sm:$0xf]
        %v375 = vld [vmem:[%s2 + $0x5c] sm:$0xf]
        %v376 = vld [vmem:[%s2 + $0x60] sm:$0xf]
        %v377 = vld [vmem:[%s2 + $0x64] sm:$0xf]
        %v378 = vld [vmem:[%s2 + $0x68] sm:$0xf]
        %v379 = vld [vmem:[%s2 + $0x6c] sm:$0xf]
        %v380 = vld [vmem:[%s2 + $0x70] sm:$0xf]
        %v381 = vld [vmem:[%s2 + $0x74] sm:$0xf]
        %v382 = vld [vmem:[%s2 + $0x78] sm:$0xf]
        %v383 = vld [vmem:[%s2 + $0x7c] sm:$0xf]
        %v400 = vunpack.c.l.b16 %v304
        %v401 = vunpack.c.l.b16 %v305
        %v402 = vunpack.c.l.b16 %v306
        %v403 = vunpack.c.l.b16 %v307
        %v404 = vunpack.c.l.b16 %v308
        %v405 = vunpack.c.l.b16 %v309
        %v406 = vunpack.c.l.b16 %v310
        %v407 = vunpack.c.l.b16 %v311
        %v408 = vunpack.c.l.b16 %v312
        %v409 = vunpack.c.l.b16 %v313
        %v410 = vunpack.c.l.b16 %v314
        %v411 = vunpack.c.l.b16 %v315
        %v412 = vunpack.c.l.b16 %v316
        %v413 = vunpack.c.l.b16 %v317
        %v414 = vunpack.c.l.b16 %v318
        %v415 = vunpack.c.l.b16 %v319
        %v416 = vpack.c.b16 %v401, %v400
        %v417 = vpack.c.b16 %v403, %v402
        %v418 = vpack.c.b16 %v405, %v404
        %v419 = vpack.c.b16 %v407, %v406
        %v420 = vpack.c.b16 %v409, %v408
        %v421 = vpack.c.b16 %v411, %v410
        %v422 = vpack.c.b16 %v413, %v412
        %v423 = vpack.c.b16 %v415, %v414
        %v432 = vunpack.c.h.b16 %v304
        %v433 = vunpack.c.h.b16 %v305
        %v434 = vunpack.c.h.b16 %v306
        %v435 = vunpack.c.h.b16 %v307
        %v436 = vunpack.c.h.b16 %v308
        %v437 = vunpack.c.h.b16 %v309
        %v438 = vunpack.c.h.b16 %v310
        %v439 = vunpack.c.h.b16 %v311
        %v440 = vunpack.c.h.b16 %v312
        %v441 = vunpack.c.h.b16 %v313
        %v442 = vunpack.c.h.b16 %v314
        %v443 = vunpack.c.h.b16 %v315
        %v444 = vunpack.c.h.b16 %v316
        %v445 = vunpack.c.h.b16 %v317
        %v446 = vunpack.c.h.b16 %v318
        %v447 = vunpack.c.h.b16 %v319
        %v448 = vpack.c.b16 %v433, %v432
        %v449 = vpack.c.b16 %v435, %v434
        %v450 = vpack.c.b16 %v437, %v436
        %v451 = vpack.c.b16 %v439, %v438
        %v452 = vpack.c.b16 %v441, %v440
        %v453 = vpack.c.b16 %v443, %v442
        %v454 = vpack.c.b16 %v445, %v444
        %v455 = vpack.c.b16 %v447, %v446
        %v496 = vunpack.c.l.b16 %v320
        %v497 = vunpack.c.l.b16 %v321
        %v498 = vunpack.c.l.b16 %v322
        %v499 = vunpack.c.l.b16 %v323
        %v500 = vunpack.c.l.b16 %v324
        %v501 = vunpack.c.l.b16 %v325
        %v502 = vunpack.c.l.b16 %v326
        %v503 = vunpack.c.l.b16 %v327
        %v504 = vunpack.c.l.b16 %v328
        %v505 = vunpack.c.l.b16 %v329
        %v506 = vunpack.c.l.b16 %v330
        %v507 = vunpack.c.l.b16 %v331
        %v508 = vunpack.c.l.b16 %v332
        %v509 = vunpack.c.l.b16 %v333
        %v510 = vunpack.c.l.b16 %v334
        %v511 = vunpack.c.l.b16 %v335
        %v512 = vunpack.c.l.b16 %v336
        %v513 = vunpack.c.l.b16 %v337
        %v514 = vunpack.c.l.b16 %v338
        %v515 = vunpack.c.l.b16 %v339
        %v516 = vunpack.c.l.b16 %v340
        %v517 = vunpack.c.l.b16 %v341
        %v518 = vunpack.c.l.b16 %v342
        %v519 = vunpack.c.l.b16 %v343
        %v520 = vunpack.c.l.b16 %v344
        %v521 = vunpack.c.l.b16 %v345
        %v522 = vunpack.c.l.b16 %v346
        %v523 = vunpack.c.l.b16 %v347
        %v524 = vunpack.c.l.b16 %v348
        %v525 = vunpack.c.l.b16 %v349
        %v526 = vunpack.c.l.b16 %v350
        %v527 = vunpack.c.l.b16 %v351
        %v528 = vpack.c.b16 %v497, %v496
        %v529 = vpack.c.b16 %v499, %v498
        %v530 = vpack.c.b16 %v501, %v500
        %v531 = vpack.c.b16 %v503, %v502
        %v532 = vpack.c.b16 %v505, %v504
        %v533 = vpack.c.b16 %v507, %v506
        %v534 = vpack.c.b16 %v509, %v508
        %v535 = vpack.c.b16 %v511, %v510
        %v536 = vpack.c.b16 %v513, %v512
        %v537 = vpack.c.b16 %v515, %v514
        %v538 = vpack.c.b16 %v517, %v516
        %v539 = vpack.c.b16 %v519, %v518
        %v540 = vpack.c.b16 %v521, %v520
        %v541 = vpack.c.b16 %v523, %v522
        %v542 = vpack.c.b16 %v525, %v524
        %v543 = vpack.c.b16 %v527, %v526
        %560 = vmatpush.bf16.xpose.msra.mxu0 %v535
        %561 = vmatpush.bf16.xpose.msra.mxu0 %v534
        %562 = vmatpush.bf16.xpose.msra.mxu0 %v533
        %563 = vmatpush.bf16.xpose.msra.mxu0 %v532
        %564 = vmatpush.bf16.xpose.msra.mxu0 %v531
        %565 = vmatpush.bf16.xpose.msra.mxu0 %v530
        %566 = vmatpush.bf16.xpose.msra.mxu0 %v529
        %567 = vmatpush.bf16.xpose.msra.mxu0 %v528
        %568 = vmatmul.bf16.gmra.mxu0 %v416
        %v569 = vpop.f32.mrf.mxu0
        %v570 = vadd.f32 0.0, %v569
        %v571 = vpop.f32.mrf.mxu0
        %v572 = vadd.f32 0.0, %v571
        %573 = vmatmul.bf16.gmra.mxu0 %v417
        %v574 = vpop.f32.mrf.mxu0
        %v575 = vadd.f32 0.0, %v574
        %v576 = vpop.f32.mrf.mxu0
        %v577 = vadd.f32 0.0, %v576
        %578 = vmatmul.bf16.gmra.mxu0 %v418
        %v579 = vpop.f32.mrf.mxu0
        %v580 = vadd.f32 0.0, %v579
        %v581 = vpop.f32.mrf.mxu0
        %v582 = vadd.f32 0.0, %v581
        %583 = vmatmul.bf16.gmra.mxu0 %v419
        %v584 = vpop.f32.mrf.mxu0
        %v585 = vadd.f32 0.0, %v584
        %v586 = vpop.f32.mrf.mxu0
        %v587 = vadd.f32 0.0, %v586
        %588 = vmatmul.bf16.gmra.mxu0 %v420
        %v589 = vpop.f32.mrf.mxu0
        %v590 = vadd.f32 0.0, %v589
        %v591 = vpop.f32.mrf.mxu0
        %v592 = vadd.f32 0.0, %v591
        %593 = vmatmul.bf16.gmra.mxu0 %v421
        %v594 = vpop.f32.mrf.mxu0
        %v595 = vadd.f32 0.0, %v594
        %v596 = vpop.f32.mrf.mxu0
        %v597 = vadd.f32 0.0, %v596
        %598 = vmatmul.bf16.gmra.mxu0 %v422
        %v599 = vpop.f32.mrf.mxu0
        %v600 = vadd.f32 0.0, %v599
        %v601 = vpop.f32.mrf.mxu0
        %v602 = vadd.f32 0.0, %v601
        %603 = vmatmul.bf16.gmra.mxu0 %v423
        %v604 = vpop.f32.mrf.mxu0
        %v605 = vadd.f32 0.0, %v604
        %v606 = vpop.f32.mrf.mxu0
        %v607 = vadd.f32 0.0, %v606
        %608 = vmatmul.bf16.gmra.mxu0 %v448
        %v609 = vpop.f32.mrf.mxu0
        %v610 = vadd.f32 0.0, %v609
        %v611 = vpop.f32.mrf.mxu0
        %v612 = vadd.f32 0.0, %v611
        %613 = vmatmul.bf16.gmra.mxu0 %v449
        %v614 = vpop.f32.mrf.mxu0
        %v615 = vadd.f32 0.0, %v614
        %v616 = vpop.f32.mrf.mxu0
        %v617 = vadd.f32 0.0, %v616
        %618 = vmatmul.bf16.gmra.mxu0 %v450
        %v619 = vpop.f32.mrf.mxu0
        %v620 = vadd.f32 0.0, %v619
        %v621 = vpop.f32.mrf.mxu0
        %v622 = vadd.f32 0.0, %v621
        %623 = vmatmul.bf16.gmra.mxu0 %v451
        %v624 = vpop.f32.mrf.mxu0
        %v625 = vadd.f32 0.0, %v624
        %v626 = vpop.f32.mrf.mxu0
        %v627 = vadd.f32 0.0, %v626
        %628 = vmatmul.bf16.gmra.mxu0 %v452
        %v629 = vpop.f32.mrf.mxu0
        %v630 = vadd.f32 0.0, %v629
        %v631 = vpop.f32.mrf.mxu0
        %v632 = vadd.f32 0.0, %v631
        %633 = vmatmul.bf16.gmra.mxu0 %v453
        %v634 = vpop.f32.mrf.mxu0
        %v635 = vadd.f32 0.0, %v634
        %v636 = vpop.f32.mrf.mxu0
        %v637 = vadd.f32 0.0, %v636
        %638 = vmatmul.bf16.gmra.mxu0 %v454
        %v639 = vpop.f32.mrf.mxu0
        %v640 = vadd.f32 0.0, %v639
        %v641 = vpop.f32.mrf.mxu0
        %v642 = vadd.f32 0.0, %v641
        %643 = vmatmul.bf16.gmra.mxu0 %v455
        %v644 = vpop.f32.mrf.mxu0
        %v645 = vadd.f32 0.0, %v644
        %v646 = vpop.f32.mrf.mxu0
        %v647 = vadd.f32 0.0, %v646
        %648 = vdwg.mxu0
        %649 = vmatpush.bf16.xpose.msra.mxu0 %v543
        %650 = vmatpush.bf16.xpose.msra.mxu0 %v542
        %651 = vmatpush.bf16.xpose.msra.mxu0 %v541
        %652 = vmatpush.bf16.xpose.msra.mxu0 %v540
        %653 = vmatpush.bf16.xpose.msra.mxu0 %v539
        %654 = vmatpush.bf16.xpose.msra.mxu0 %v538
        %655 = vmatpush.bf16.xpose.msra.mxu0 %v537
        %656 = vmatpush.bf16.xpose.msra.mxu0 %v536
        %657 = vmatmul.bf16.gmra.mxu0 %v416
        %v658 = vpop.f32.mrf.mxu0
        %v659 = vadd.f32 0.0, %v658
        %v660 = vpop.f32.mrf.mxu0
        %v661 = vadd.f32 0.0, %v660
        %662 = vmatmul.bf16.gmra.mxu0 %v417
        %v663 = vpop.f32.mrf.mxu0
        %v664 = vadd.f32 0.0, %v663
        %v665 = vpop.f32.mrf.mxu0
        %v666 = vadd.f32 0.0, %v665
        %667 = vmatmul.bf16.gmra.mxu0 %v418
        %v668 = vpop.f32.mrf.mxu0
        %v669 = vadd.f32 0.0, %v668
        %v670 = vpop.f32.mrf.mxu0
        %v671 = vadd.f32 0.0, %v670
        %672 = vmatmul.bf16.gmra.mxu0 %v419
        %v673 = vpop.f32.mrf.mxu0
        %v674 = vadd.f32 0.0, %v673
        %v675 = vpop.f32.mrf.mxu0
        %v676 = vadd.f32 0.0, %v675
        %677 = vmatmul.bf16.gmra.mxu0 %v420
        %v678 = vpop.f32.mrf.mxu0
        %v679 = vadd.f32 0.0, %v678
        %v680 = vpop.f32.mrf.mxu0
        %v681 = vadd.f32 0.0, %v680
        %682 = vmatmul.bf16.gmra.mxu0 %v421
        %v683 = vpop.f32.mrf.mxu0
        %v684 = vadd.f32 0.0, %v683
        %v685 = vpop.f32.mrf.mxu0
        %v686 = vadd.f32 0.0, %v685
        %687 = vmatmul.bf16.gmra.mxu0 %v422
        %v688 = vpop.f32.mrf.mxu0
        %v689 = vadd.f32 0.0, %v688
        %v690 = vpop.f32.mrf.mxu0
        %v691 = vadd.f32 0.0, %v690
        %692 = vmatmul.bf16.gmra.mxu0 %v423
        %v693 = vpop.f32.mrf.mxu0
        %v694 = vadd.f32 0.0, %v693
        %v695 = vpop.f32.mrf.mxu0
        %v696 = vadd.f32 0.0, %v695
        %697 = vmatmul.bf16.gmra.mxu0 %v448
        %v698 = vpop.f32.mrf.mxu0
        %v699 = vadd.f32 0.0, %v698
        %v700 = vpop.f32.mrf.mxu0
        %v701 = vadd.f32 0.0, %v700
        %702 = vmatmul.bf16.gmra.mxu0 %v449
        %v703 = vpop.f32.mrf.mxu0
        %v704 = vadd.f32 0.0, %v703
        %v705 = vpop.f32.mrf.mxu0
        %v706 = vadd.f32 0.0, %v705
        %707 = vmatmul.bf16.gmra.mxu0 %v450
        %v708 = vpop.f32.mrf.mxu0
        %v709 = vadd.f32 0.0, %v708
        %v710 = vpop.f32.mrf.mxu0
        %v711 = vadd.f32 0.0, %v710
        %712 = vmatmul.bf16.gmra.mxu0 %v451
        %v713 = vpop.f32.mrf.mxu0
        %v714 = vadd.f32 0.0, %v713
        %v715 = vpop.f32.mrf.mxu0
        %v716 = vadd.f32 0.0, %v715
        %717 = vmatmul.bf16.gmra.mxu0 %v452
        %v718 = vpop.f32.mrf.mxu0
        %v719 = vadd.f32 0.0, %v718
        %v720 = vpop.f32.mrf.mxu0
        %v721 = vadd.f32 0.0, %v720
        %722 = vmatmul.bf16.gmra.mxu0 %v453
        %v723 = vpop.f32.mrf.mxu0
        %v724 = vadd.f32 0.0, %v723
        %v725 = vpop.f32.mrf.mxu0
        %v726 = vadd.f32 0.0, %v725
        %727 = vmatmul.bf16.gmra.mxu0 %v454
        %v728 = vpop.f32.mrf.mxu0
        %v729 = vadd.f32 0.0, %v728
        %v730 = vpop.f32.mrf.mxu0
        %v731 = vadd.f32 0.0, %v730
        %732 = vmatmul.bf16.gmra.mxu0 %v455
        %v733 = vpop.f32.mrf.mxu0
        %v734 = vadd.f32 0.0, %v733
        %v735 = vpop.f32.mrf.mxu0
        %v736 = vadd.f32 0.0, %v735
        %737 = vdwg.mxu0
        %v738 = vmul.f32 %v570, 0.088388346
        %v739 = vmul.f32 %v659, 0.088388346
        %v740 = vmul.f32 %v572, 0.088388346
        %v741 = vmul.f32 %v661, 0.088388346
        %v742 = vmul.f32 %v575, 0.088388346
        %v743 = vmul.f32 %v664, 0.088388346
        %v744 = vmul.f32 %v577, 0.088388346
        %v745 = vmul.f32 %v666, 0.088388346
        %v746 = vmul.f32 %v580, 0.088388346
        %v747 = vmul.f32 %v669, 0.088388346
        %v748 = vmul.f32 %v582, 0.088388346
        %v749 = vmul.f32 %v671, 0.088388346
        %v750 = vmul.f32 %v585, 0.088388346
        %v751 = vmul.f32 %v674, 0.088388346
        %v752 = vmul.f32 %v587, 0.088388346
        %v753 = vmul.f32 %v676, 0.088388346
        %v754 = vmul.f32 %v590, 0.088388346
        %v755 = vmul.f32 %v679, 0.088388346
        %v756 = vmul.f32 %v592, 0.088388346
        %v757 = vmul.f32 %v681, 0.088388346
        %v758 = vmul.f32 %v595, 0.088388346
        %v759 = vmul.f32 %v684, 0.088388346
        %v760 = vmul.f32 %v597, 0.088388346
        %v761 = vmul.f32 %v686, 0.088388346
        %v762 = vmul.f32 %v600, 0.088388346
        %v763 = vmul.f32 %v689, 0.088388346
        %v764 = vmul.f32 %v602, 0.088388346
        %v765 = vmul.f32 %v691, 0.088388346
        %v766 = vmul.f32 %v605, 0.088388346
        %v767 = vmul.f32 %v694, 0.088388346
        %v768 = vmul.f32 %v607, 0.088388346
        %v769 = vmul.f32 %v696, 0.088388346
        %v770 = vmul.f32 %v610, 0.088388346
        %v771 = vmul.f32 %v699, 0.088388346
        %v772 = vmul.f32 %v612, 0.088388346
        %v773 = vmul.f32 %v701, 0.088388346
        %v774 = vmul.f32 %v615, 0.088388346
        %v775 = vmul.f32 %v704, 0.088388346
        %v776 = vmul.f32 %v617, 0.088388346
        %v777 = vmul.f32 %v706, 0.088388346
        %v778 = vmul.f32 %v620, 0.088388346
        %v779 = vmul.f32 %v709, 0.088388346
        %v780 = vmul.f32 %v622, 0.088388346
        %v781 = vmul.f32 %v711, 0.088388346
        %v782 = vmul.f32 %v625, 0.088388346
        %v783 = vmul.f32 %v714, 0.088388346
        %v784 = vmul.f32 %v627, 0.088388346
        %v785 = vmul.f32 %v716, 0.088388346
        %v786 = vmul.f32 %v630, 0.088388346
        %v787 = vmul.f32 %v719, 0.088388346
        %v788 = vmul.f32 %v632, 0.088388346
        %v789 = vmul.f32 %v721, 0.088388346
        %v790 = vmul.f32 %v635, 0.088388346
        %v791 = vmul.f32 %v724, 0.088388346
        %v792 = vmul.f32 %v637, 0.088388346
        %v793 = vmul.f32 %v726, 0.088388346
        %v794 = vmul.f32 %v640, 0.088388346
        %v795 = vmul.f32 %v729, 0.088388346
        %v796 = vmul.f32 %v642, 0.088388346
        %v797 = vmul.f32 %v731, 0.088388346
        %v798 = vmul.f32 %v645, 0.088388346
        %v799 = vmul.f32 %v734, 0.088388346
        %v800 = vmul.f32 %v647, 0.088388346
        %v801 = vmul.f32 %v736, 0.088388346
        %v802 = vadd.f32 %v738, %v272
        %v803 = vadd.f32 %v739, %v273
        %v804 = vadd.f32 %v740, %v274
        %v805 = vadd.f32 %v741, %v275
        %v806 = vadd.f32 %v742, %v276
        %v807 = vadd.f32 %v743, %v277
        %v808 = vadd.f32 %v744, %v278
        %v809 = vadd.f32 %v745, %v279
        %v810 = vadd.f32 %v746, %v280
        %v811 = vadd.f32 %v747, %v281
        %v812 = vadd.f32 %v748, %v282
        %v813 = vadd.f32 %v749, %v283
        %v814 = vadd.f32 %v750, %v284
        %v815 = vadd.f32 %v751, %v285
        %v816 = vadd.f32 %v752, %v286
        %v817 = vadd.f32 %v753, %v287
        %v818 = vadd.f32 %v754, %v288
        %v819 = vadd.f32 %v755, %v289
        %v820 = vadd.f32 %v756, %v290
        %v821 = vadd.f32 %v757, %v291
        %v822 = vadd.f32 %v758, %v292
        %v823 = vadd.f32 %v759, %v293
        %v824 = vadd.f32 %v760, %v294
        %v825 = vadd.f32 %v761, %v295
        %v826 = vadd.f32 %v762, %v296
        %v827 = vadd.f32 %v763, %v297
        %v828 = vadd.f32 %v764, %v298
        %v829 = vadd.f32 %v765, %v299
        %v830 = vadd.f32 %v766, %v300
        %v831 = vadd.f32 %v767, %v301
        %v832 = vadd.f32 %v768, %v302
        %v833 = vadd.f32 %v769, %v303
        %v834 = vadd.f32 %v770, %v272
        %v835 = vadd.f32 %v771, %v273
        %v836 = vadd.f32 %v772, %v274
        %v837 = vadd.f32 %v773, %v275
        %v838 = vadd.f32 %v774, %v276
        %v839 = vadd.f32 %v775, %v277
        %v840 = vadd.f32 %v776, %v278
        %v841 = vadd.f32 %v777, %v279
        %v842 = vadd.f32 %v778, %v280
        %v843 = vadd.f32 %v779, %v281
        %v844 = vadd.f32 %v780, %v282
        %v845 = vadd.f32 %v781, %v283
        %v846 = vadd.f32 %v782, %v284
        %v847 = vadd.f32 %v783, %v285
        %v848 = vadd.f32 %v784, %v286
        %v849 = vadd.f32 %v785, %v287
        %v850 = vadd.f32 %v786, %v288
        %v851 = vadd.f32 %v787, %v289
        %v852 = vadd.f32 %v788, %v290
        %v853 = vadd.f32 %v789, %v291
        %v854 = vadd.f32 %v790, %v292
        %v855 = vadd.f32 %v791, %v293
        %v856 = vadd.f32 %v792, %v294
        %v857 = vadd.f32 %v793, %v295
        %v858 = vadd.f32 %v794, %v296
        %v859 = vadd.f32 %v795, %v297
        %v860 = vadd.f32 %v796, %v298
        %v861 = vadd.f32 %v797, %v299
        %v862 = vadd.f32 %v798, %v300
        %v863 = vadd.f32 %v799, %v301
        %v864 = vadd.f32 %v800, %v302
        %v865 = vadd.f32 %v801, %v303
        %v866 = vmax.f32 %v802, %v803
        %867 = vmax.xlane.f32.xlu0 %v866
        %v868 = vpop.xlane.xlu0 %867
        %v869 = vmax.f32 %v804, %v805
        %870 = vmax.xlane.f32.xlu0 %v869
        %v871 = vpop.xlane.xlu0 %870
        %v872 = vmax.f32 %v806, %v807
        %873 = vmax.xlane.f32.xlu0 %v872
        %v874 = vpop.xlane.xlu0 %873
        %v875 = vmax.f32 %v808, %v809
        %876 = vmax.xlane.f32.xlu0 %v875
        %v877 = vpop.xlane.xlu0 %876
        %v878 = vmax.f32 %v810, %v811
        %879 = vmax.xlane.f32.xlu0 %v878
        %v880 = vpop.xlane.xlu0 %879
        %v881 = vmax.f32 %v812, %v813
        %882 = vmax.xlane.f32.xlu0 %v881
        %v883 = vpop.xlane.xlu0 %882
        %v884 = vmax.f32 %v814, %v815
        %885 = vmax.xlane.f32.xlu0 %v884
        %v886 = vpop.xlane.xlu0 %885
        %v887 = vmax.f32 %v816, %v817
        %888 = vmax.xlane.f32.xlu0 %v887
        %v889 = vpop.xlane.xlu0 %888
        %v890 = vmax.f32 %v818, %v819
        %891 = vmax.xlane.f32.xlu0 %v890
        %v892 = vpop.xlane.xlu0 %891
        %v893 = vmax.f32 %v820, %v821
        %894 = vmax.xlane.f32.xlu0 %v893
        %v895 = vpop.xlane.xlu0 %894
        %v896 = vmax.f32 %v822, %v823
        %897 = vmax.xlane.f32.xlu0 %v896
        %v898 = vpop.xlane.xlu0 %897
        %v899 = vmax.f32 %v824, %v825
        %900 = vmax.xlane.f32.xlu0 %v899
        %v901 = vpop.xlane.xlu0 %900
        %v902 = vmax.f32 %v826, %v827
        %903 = vmax.xlane.f32.xlu0 %v902
        %v904 = vpop.xlane.xlu0 %903
        %v905 = vmax.f32 %v828, %v829
        %906 = vmax.xlane.f32.xlu0 %v905
        %v907 = vpop.xlane.xlu0 %906
        %v908 = vmax.f32 %v830, %v831
        %909 = vmax.xlane.f32.xlu0 %v908
        %v910 = vpop.xlane.xlu0 %909
        %v911 = vmax.f32 %v832, %v833
        %912 = vmax.xlane.f32.xlu0 %v911
        %v913 = vpop.xlane.xlu0 %912
        %v914 = vmax.f32 %v834, %v835
        %915 = vmax.xlane.f32.xlu0 %v914
        %v916 = vpop.xlane.xlu0 %915
        %v917 = vmax.f32 %v836, %v837
        %918 = vmax.xlane.f32.xlu0 %v917
        %v919 = vpop.xlane.xlu0 %918
        %v920 = vmax.f32 %v838, %v839
        %921 = vmax.xlane.f32.xlu0 %v920
        %v922 = vpop.xlane.xlu0 %921
        %v923 = vmax.f32 %v840, %v841
        %924 = vmax.xlane.f32.xlu0 %v923
        %v925 = vpop.xlane.xlu0 %924
        %v926 = vmax.f32 %v842, %v843
        %927 = vmax.xlane.f32.xlu0 %v926
        %v928 = vpop.xlane.xlu0 %927
        %v929 = vmax.f32 %v844, %v845
        %930 = vmax.xlane.f32.xlu0 %v929
        %v931 = vpop.xlane.xlu0 %930
        %v932 = vmax.f32 %v846, %v847
        %933 = vmax.xlane.f32.xlu0 %v932
        %v934 = vpop.xlane.xlu0 %933
        %v935 = vmax.f32 %v848, %v849
        %936 = vmax.xlane.f32.xlu0 %v935
        %v937 = vpop.xlane.xlu0 %936
        %v938 = vmax.f32 %v850, %v851
        %939 = vmax.xlane.f32.xlu0 %v938
        %v940 = vpop.xlane.xlu0 %939
        %v941 = vmax.f32 %v852, %v853
        %942 = vmax.xlane.f32.xlu0 %v941
        %v943 = vpop.xlane.xlu0 %942
        %v944 = vmax.f32 %v854, %v855
        %945 = vmax.xlane.f32.xlu0 %v944
        %v946 = vpop.xlane.xlu0 %945
        %v947 = vmax.f32 %v856, %v857
        %948 = vmax.xlane.f32.xlu0 %v947
        %v949 = vpop.xlane.xlu0 %948
        %v950 = vmax.f32 %v858, %v859
        %951 = vmax.xlane.f32.xlu0 %v950
        %v952 = vpop.xlane.xlu0 %951
        %v953 = vmax.f32 %v860, %v861
        %954 = vmax.xlane.f32.xlu0 %v953
        %v955 = vpop.xlane.xlu0 %954
        %v956 = vmax.f32 %v862, %v863
        %957 = vmax.xlane.f32.xlu0 %v956
        %v958 = vpop.xlane.xlu0 %957
        %v959 = vmax.f32 %v864, %v865
        %960 = vmax.xlane.f32.xlu0 %v959
        %v961 = vpop.xlane.xlu0 %960
        %v962 = vsub.f32 %v802, %v868
        %v963 = vsub.f32 %v803, %v868
        %v964 = vsub.f32 %v804, %v871
        %v965 = vsub.f32 %v805, %v871
        %v966 = vsub.f32 %v806, %v874
        %v967 = vsub.f32 %v807, %v874
        %v968 = vsub.f32 %v808, %v877
        %v969 = vsub.f32 %v809, %v877
        %v970 = vsub.f32 %v810, %v880
        %v971 = vsub.f32 %v811, %v880
        %v972 = vsub.f32 %v812, %v883
        %v973 = vsub.f32 %v813, %v883
        %v974 = vsub.f32 %v814, %v886
        %v975 = vsub.f32 %v815, %v886
        %v976 = vsub.f32 %v816, %v889
        %v977 = vsub.f32 %v817, %v889
        %v978 = vsub.f32 %v818, %v892
        %v979 = vsub.f32 %v819, %v892
        %v980 = vsub.f32 %v820, %v895
        %v981 = vsub.f32 %v821, %v895
        %v982 = vsub.f32 %v822, %v898
        %v983 = vsub.f32 %v823, %v898
        %v984 = vsub.f32 %v824, %v901
        %v985 = vsub.f32 %v825, %v901
        %v986 = vsub.f32 %v826, %v904
        %v987 = vsub.f32 %v827, %v904
        %v988 = vsub.f32 %v828, %v907
        %v989 = vsub.f32 %v829, %v907
        %v990 = vsub.f32 %v830, %v910
        %v991 = vsub.f32 %v831, %v910
        %v992 = vsub.f32 %v832, %v913
        %v993 = vsub.f32 %v833, %v913
        %v994 = vsub.f32 %v834, %v916
        %v995 = vsub.f32 %v835, %v916
        %v996 = vsub.f32 %v836, %v919
        %v997 = vsub.f32 %v837, %v919
        %v998 = vsub.f32 %v838, %v922
        %v999 = vsub.f32 %v839, %v922
        %v1000 = vsub.f32 %v840, %v925
        %v1001 = vsub.f32 %v841, %v925
        %v1002 = vsub.f32 %v842, %v928
        %v1003 = vsub.f32 %v843, %v928
        %v1004 = vsub.f32 %v844, %v931
        %v1005 = vsub.f32 %v845, %v931
        %v1006 = vsub.f32 %v846, %v934
        %v1007 = vsub.f32 %v847, %v934
        %v1008 = vsub.f32 %v848, %v937
        %v1009 = vsub.f32 %v849, %v937
        %v1010 = vsub.f32 %v850, %v940
        %v1011 = vsub.f32 %v851, %v940
        %v1012 = vsub.f32 %v852, %v943
        %v1013 = vsub.f32 %v853, %v943
        %v1014 = vsub.f32 %v854, %v946
        %v1015 = vsub.f32 %v855, %v946
        %v1016 = vsub.f32 %v856, %v949
        %v1017 = vsub.f32 %v857, %v949
        %v1018 = vsub.f32 %v858, %v952
        %v1019 = vsub.f32 %v859, %v952
        %v1020 = vsub.f32 %v860, %v955
        %v1021 = vsub.f32 %v861, %v955
        %v1022 = vsub.f32 %v862, %v958
        %v1023 = vsub.f32 %v863, %v958
        %v1024 = vsub.f32 %v864, %v961
        %v1025 = vsub.f32 %v865, %v961
        %v1026 = vmul.f32 %v962, 1.442695
        %v1027 = vpow.pop %v1026
        %v1028 = vmul.f32 %v963, 1.442695
        %v1029 = vpow.pop %v1028
        %v1030 = vmul.f32 %v964, 1.442695
        %v1031 = vpow.pop %v1030
        %v1032 = vmul.f32 %v965, 1.442695
        %v1033 = vpow.pop %v1032
        %v1034 = vmul.f32 %v966, 1.442695
        %v1035 = vpow.pop %v1034
        %v1036 = vmul.f32 %v967, 1.442695
        %v1037 = vpow.pop %v1036
        %v1038 = vmul.f32 %v968, 1.442695
        %v1039 = vpow.pop %v1038
        %v1040 = vmul.f32 %v969, 1.442695
        %v1041 = vpow.pop %v1040
        %v1042 = vmul.f32 %v970, 1.442695
        %v1043 = vpow.pop %v1042
        %v1044 = vmul.f32 %v971, 1.442695
        %v1045 = vpow.pop %v1044
        %v1046 = vmul.f32 %v972, 1.442695
        %v1047 = vpow.pop %v1046
        %v1048 = vmul.f32 %v973, 1.442695
        %v1049 = vpow.pop %v1048
        %v1050 = vmul.f32 %v974, 1.442695
        %v1051 = vpow.pop %v1050
        %v1052 = vmul.f32 %v975, 1.442695
        %v1053 = vpow.pop %v1052
        %v1054 = vmul.f32 %v976, 1.442695
        %v1055 = vpow.pop %v1054
        %v1056 = vmul.f32 %v977, 1.442695
        %v1057 = vpow.pop %v1056
        %v1058 = vmul.f32 %v978, 1.442695
        %v1059 = vpow.pop %v1058
        %v1060 = vmul.f32 %v979, 1.442695
        %v1061 = vpow.pop %v1060
        %v1062 = vmul.f32 %v980, 1.442695
        %v1063 = vpow.pop %v1062
        %v1064 = vmul.f32 %v981, 1.442695
        %v1065 = vpow.pop %v1064
        %v1066 = vmul.f32 %v982, 1.442695
        %v1067 = vpow.pop %v1066
        %v1068 = vmul.f32 %v983, 1.442695
        %v1069 = vpow.pop %v1068
        %v1070 = vmul.f32 %v984, 1.442695
        %v1071 = vpow.pop %v1070
        %v1072 = vmul.f32 %v985, 1.442695
        %v1073 = vpow.pop %v1072
        %v1074 = vmul.f32 %v986, 1.442695
        %v1075 = vpow.pop %v1074
        %v1076 = vmul.f32 %v987, 1.442695
        %v1077 = vpow.pop %v1076
        %v1078 = vmul.f32 %v988, 1.442695
        %v1079 = vpow.pop %v1078
        %v1080 = vmul.f32 %v989, 1.442695
        %v1081 = vpow.pop %v1080
        %v1082 = vmul.f32 %v990, 1.442695
        %v1083 = vpow.pop %v1082
        %v1084 = vmul.f32 %v991, 1.442695
        %v1085 = vpow.pop %v1084
        %v1086 = vmul.f32 %v992, 1.442695
        %v1087 = vpow.pop %v1086
        %v1088 = vmul.f32 %v993, 1.442695
        %v1089 = vpow.pop %v1088
        %v1090 = vmul.f32 %v994, 1.442695
        %v1091 = vpow.pop %v1090
        %v1092 = vmul.f32 %v995, 1.442695
        %v1093 = vpow.pop %v1092
        %v1094 = vmul.f32 %v996, 1.442695
        %v1095 = vpow.pop %v1094
        %v1096 = vmul.f32 %v997, 1.442695
        %v1097 = vpow.pop %v1096
        %v1098 = vmul.f32 %v998, 1.442695
        %v1099 = vpow.pop %v1098
        %v1100 = vmul.f32 %v999, 1.442695
        %v1101 = vpow.pop %v1100
        %v1102 = vmul.f32 %v1000, 1.442695
        %v1103 = vpow.pop %v1102
        %v1104 = vmul.f32 %v1001, 1.442695
        %v1105 = vpow.pop %v1104
        %v1106 = vmul.f32 %v1002, 1.442695
        %v1107 = vpow.pop %v1106
        %v1108 = vmul.f32 %v1003, 1.442695
        %v1109 = vpow.pop %v1108
        %v1110 = vmul.f32 %v1004, 1.442695
        %v1111 = vpow.pop %v1110
        %v1112 = vmul.f32 %v1005, 1.442695
        %v1113 = vpow.pop %v1112
        %v1114 = vmul.f32 %v1006, 1.442695
        %v1115 = vpow.pop %v1114
        %v1116 = vmul.f32 %v1007, 1.442695
        %v1117 = vpow.pop %v1116
        %v1118 = vmul.f32 %v1008, 1.442695
        %v1119 = vpow.pop %v1118
        %v1120 = vmul.f32 %v1009, 1.442695
        %v1121 = vpow.pop %v1120
        %v1122 = vmul.f32 %v1010, 1.442695
        %v1123 = vpow.pop %v1122
        %v1124 = vmul.f32 %v1011, 1.442695
        %v1125 = vpow.pop %v1124
        %v1126 = vmul.f32 %v1012, 1.442695
        %v1127 = vpow.pop %v1126
        %v1128 = vmul.f32 %v1013, 1.442695
        %v1129 = vpow.pop %v1128
        %v1130 = vmul.f32 %v1014, 1.442695
        %v1131 = vpow.pop %v1130
        %v1132 = vmul.f32 %v1015, 1.442695
        %v1133 = vpow.pop %v1132
        %v1134 = vmul.f32 %v1016, 1.442695
        %v1135 = vpow.pop %v1134
        %v1136 = vmul.f32 %v1017, 1.442695
        %v1137 = vpow.pop %v1136
        %v1138 = vmul.f32 %v1018, 1.442695
        %v1139 = vpow.pop %v1138
        %v1140 = vmul.f32 %v1019, 1.442695
        %v1141 = vpow.pop %v1140
        %v1142 = vmul.f32 %v1020, 1.442695
        %v1143 = vpow.pop %v1142
        %v1144 = vmul.f32 %v1021, 1.442695
        %v1145 = vpow.pop %v1144
        %v1146 = vmul.f32 %v1022, 1.442695
        %v1147 = vpow.pop %v1146
        %v1148 = vmul.f32 %v1023, 1.442695
        %v1149 = vpow.pop %v1148
        %v1150 = vmul.f32 %v1024, 1.442695
        %v1151 = vpow.pop %v1150
        %v1152 = vmul.f32 %v1025, 1.442695
        %v1153 = vpow.pop %v1152
        %v1154 = vadd.f32 %v1027, %v1029
        %1155 = vadd.xlane.f32.xlu0 %v1154
        %v1156 = vpop.xlane.xlu0 %1155
        %v1157 = vadd.f32 %v1031, %v1033
        %1158 = vadd.xlane.f32.xlu0 %v1157
        %v1159 = vpop.xlane.xlu0 %1158
        %v1160 = vadd.f32 %v1035, %v1037
        %1161 = vadd.xlane.f32.xlu0 %v1160
        %v1162 = vpop.xlane.xlu0 %1161
        %v1163 = vadd.f32 %v1039, %v1041
        %1164 = vadd.xlane.f32.xlu0 %v1163
        %v1165 = vpop.xlane.xlu0 %1164
        %v1166 = vadd.f32 %v1043, %v1045
        %1167 = vadd.xlane.f32.xlu0 %v1166
        %v1168 = vpop.xlane.xlu0 %1167
        %v1169 = vadd.f32 %v1047, %v1049
        %1170 = vadd.xlane.f32.xlu0 %v1169
        %v1171 = vpop.xlane.xlu0 %1170
        %v1172 = vadd.f32 %v1051, %v1053
        %1173 = vadd.xlane.f32.xlu0 %v1172
        %v1174 = vpop.xlane.xlu0 %1173
        %v1175 = vadd.f32 %v1055, %v1057
        %1176 = vadd.xlane.f32.xlu0 %v1175
        %v1177 = vpop.xlane.xlu0 %1176
        %v1178 = vadd.f32 %v1059, %v1061
        %1179 = vadd.xlane.f32.xlu0 %v1178
        %v1180 = vpop.xlane.xlu0 %1179
        %v1181 = vadd.f32 %v1063, %v1065
        %1182 = vadd.xlane.f32.xlu0 %v1181
        %v1183 = vpop.xlane.xlu0 %1182
        %v1184 = vadd.f32 %v1067, %v1069
        %1185 = vadd.xlane.f32.xlu0 %v1184
        %v1186 = vpop.xlane.xlu0 %1185
        %v1187 = vadd.f32 %v1071, %v1073
        %1188 = vadd.xlane.f32.xlu0 %v1187
        %v1189 = vpop.xlane.xlu0 %1188
        %v1190 = vadd.f32 %v1075, %v1077
        %1191 = vadd.xlane.f32.xlu0 %v1190
        %v1192 = vpop.xlane.xlu0 %1191
        %v1193 = vadd.f32 %v1079, %v1081
        %1194 = vadd.xlane.f32.xlu0 %v1193
        %v1195 = vpop.xlane.xlu0 %1194
        %v1196 = vadd.f32 %v1083, %v1085
        %1197 = vadd.xlane.f32.xlu0 %v1196
        %v1198 = vpop.xlane.xlu0 %1197
        %v1199 = vadd.f32 %v1087, %v1089
        %1200 = vadd.xlane.f32.xlu0 %v1199
        %v1201 = vpop.xlane.xlu0 %1200
        %v1202 = vadd.f32 %v1091, %v1093
        %1203 = vadd.xlane.f32.xlu0 %v1202
        %v1204 = vpop.xlane.xlu0 %1203
        %v1205 = vadd.f32 %v1095, %v1097
        %1206 = vadd.xlane.f32.xlu0 %v1205
        %v1207 = vpop.xlane.xlu0 %1206
        %v1208 = vadd.f32 %v1099, %v1101
        %1209 = vadd.xlane.f32.xlu0 %v1208
        %v1210 = vpop.xlane.xlu0 %1209
        %v1211 = vadd.f32 %v1103, %v1105
        %1212 = vadd.xlane.f32.xlu0 %v1211
        %v1213 = vpop.xlane.xlu0 %1212
        %v1214 = vadd.f32 %v1107, %v1109
        %1215 = vadd.xlane.f32.xlu0 %v1214
        %v1216 = vpop.xlane.xlu0 %1215
        %v1217 = vadd.f32 %v1111, %v1113
        %1218 = vadd.xlane.f32.xlu0 %v1217
        %v1219 = vpop.xlane.xlu0 %1218
        %v1220 = vadd.f32 %v1115, %v1117
        %1221 = vadd.xlane.f32.xlu0 %v1220
        %v1222 = vpop.xlane.xlu0 %1221
        %v1223 = vadd.f32 %v1119, %v1121
        %1224 = vadd.xlane.f32.xlu0 %v1223
        %v1225 = vpop.xlane.xlu0 %1224
        %v1226 = vadd.f32 %v1123, %v1125
        %1227 = vadd.xlane.f32.xlu0 %v1226
        %v1228 = vpop.xlane.xlu0 %1227
        %v1229 = vadd.f32 %v1127, %v1129
        %1230 = vadd.xlane.f32.xlu0 %v1229
        %v1231 = vpop.xlane.xlu0 %1230
        %v1232 = vadd.f32 %v1131, %v1133
        %1233 = vadd.xlane.f32.xlu0 %v1232
        %v1234 = vpop.xlane.xlu0 %1233
        %v1235 = vadd.f32 %v1135, %v1137
        %1236 = vadd.xlane.f32.xlu0 %v1235
        %v1237 = vpop.xlane.xlu0 %1236
        %v1238 = vadd.f32 %v1139, %v1141
        %1239 = vadd.xlane.f32.xlu0 %v1238
        %v1240 = vpop.xlane.xlu0 %1239
        %v1241 = vadd.f32 %v1143, %v1145
        %1242 = vadd.xlane.f32.xlu0 %v1241
        %v1243 = vpop.xlane.xlu0 %1242
        %v1244 = vadd.f32 %v1147, %v1149
        %1245 = vadd.xlane.f32.xlu0 %v1244
        %v1246 = vpop.xlane.xlu0 %1245
        %v1247 = vadd.f32 %v1151, %v1153
        %1248 = vadd.xlane.f32.xlu0 %v1247
        %v1249 = vpop.xlane.xlu0 %1248
        %v1250 = vpack.c.bf16 %v1031, %v1027
        %v1251 = vpack.c.bf16 %v1033, %v1029
        %v1252 = vpack.c.bf16 %v1039, %v1035
        %v1253 = vpack.c.bf16 %v1041, %v1037
        %v1254 = vpack.c.bf16 %v1047, %v1043
        %v1255 = vpack.c.bf16 %v1049, %v1045
        %v1256 = vpack.c.bf16 %v1055, %v1051
        %v1257 = vpack.c.bf16 %v1057, %v1053
        %v1258 = vpack.c.bf16 %v1063, %v1059
        %v1259 = vpack.c.bf16 %v1065, %v1061
        %v1260 = vpack.c.bf16 %v1071, %v1067
        %v1261 = vpack.c.bf16 %v1073, %v1069
        %v1262 = vpack.c.bf16 %v1079, %v1075
        %v1263 = vpack.c.bf16 %v1081, %v1077
        %v1264 = vpack.c.bf16 %v1087, %v1083
        %v1265 = vpack.c.bf16 %v1089, %v1085
        %v1266 = vpack.c.bf16 %v1095, %v1091
        %v1267 = vpack.c.bf16 %v1097, %v1093
        %v1268 = vpack.c.bf16 %v1103, %v1099
        %v1269 = vpack.c.bf16 %v1105, %v1101
        %v1270 = vpack.c.bf16 %v1111, %v1107
        %v1271 = vpack.c.bf16 %v1113, %v1109
        %v1272 = vpack.c.bf16 %v1119, %v1115
        %v1273 = vpack.c.bf16 %v1121, %v1117
        %v1274 = vpack.c.bf16 %v1127, %v1123
        %v1275 = vpack.c.bf16 %v1129, %v1125
        %v1276 = vpack.c.bf16 %v1135, %v1131
        %v1277 = vpack.c.bf16 %v1137, %v1133
        %v1278 = vpack.c.bf16 %v1143, %v1139
        %v1279 = vpack.c.bf16 %v1145, %v1141
        %v1280 = vpack.c.bf16 %v1151, %v1147
        %v1281 = vpack.c.bf16 %v1153, %v1149
        %v1314 = vunpack.c.l.b16 %v352
        %v1315 = vunpack.c.l.b16 %v353
        %v1316 = vunpack.c.l.b16 %v354
        %v1317 = vunpack.c.l.b16 %v355
        %v1318 = vunpack.c.l.b16 %v356
        %v1319 = vunpack.c.l.b16 %v357
        %v1320 = vunpack.c.l.b16 %v358
        %v1321 = vunpack.c.l.b16 %v359
        %v1322 = vunpack.c.l.b16 %v360
        %v1323 = vunpack.c.l.b16 %v361
        %v1324 = vunpack.c.l.b16 %v362
        %v1325 = vunpack.c.l.b16 %v363
        %v1326 = vunpack.c.l.b16 %v364
        %v1327 = vunpack.c.l.b16 %v365
        %v1328 = vunpack.c.l.b16 %v366
        %v1329 = vunpack.c.l.b16 %v367
        %v1330 = vunpack.c.l.b16 %v368
        %v1331 = vunpack.c.l.b16 %v369
        %v1332 = vunpack.c.l.b16 %v370
        %v1333 = vunpack.c.l.b16 %v371
        %v1334 = vunpack.c.l.b16 %v372
        %v1335 = vunpack.c.l.b16 %v373
        %v1336 = vunpack.c.l.b16 %v374
        %v1337 = vunpack.c.l.b16 %v375
        %v1338 = vunpack.c.l.b16 %v376
        %v1339 = vunpack.c.l.b16 %v377
        %v1340 = vunpack.c.l.b16 %v378
        %v1341 = vunpack.c.l.b16 %v379
        %v1342 = vunpack.c.l.b16 %v380
        %v1343 = vunpack.c.l.b16 %v381
        %v1344 = vunpack.c.l.b16 %v382
        %v1345 = vunpack.c.l.b16 %v383
        %v1346 = vpack.c.b16 %v1315, %v1314
        %v1347 = vpack.c.b16 %v1317, %v1316
        %v1348 = vpack.c.b16 %v1319, %v1318
        %v1349 = vpack.c.b16 %v1321, %v1320
        %v1350 = vpack.c.b16 %v1323, %v1322
        %v1351 = vpack.c.b16 %v1325, %v1324
        %v1352 = vpack.c.b16 %v1327, %v1326
        %v1353 = vpack.c.b16 %v1329, %v1328
        %v1354 = vpack.c.b16 %v1331, %v1330
        %v1355 = vpack.c.b16 %v1333, %v1332
        %v1356 = vpack.c.b16 %v1335, %v1334
        %v1357 = vpack.c.b16 %v1337, %v1336
        %v1358 = vpack.c.b16 %v1339, %v1338
        %v1359 = vpack.c.b16 %v1341, %v1340
        %v1360 = vpack.c.b16 %v1343, %v1342
        %v1361 = vpack.c.b16 %v1345, %v1344
        %1378 = vmatpush.bf16.msra.mxu0 %v1353
        %1379 = vmatpush.bf16.msra.mxu0 %v1352
        %1380 = vmatpush.bf16.msra.mxu0 %v1351
        %1381 = vmatpush.bf16.msra.mxu0 %v1350
        %1382 = vmatpush.bf16.msra.mxu0 %v1349
        %1383 = vmatpush.bf16.msra.mxu0 %v1348
        %1384 = vmatpush.bf16.msra.mxu0 %v1347
        %1385 = vmatpush.bf16.msra.mxu0 %v1346
        %1386 = vmatmul.bf16.gmra.mxu0 %v1250
        %v1387 = vpop.f32.mrf.mxu0
        %v1388 = vadd.f32 0.0, %v1387
        %v1389 = vpop.f32.mrf.mxu0
        %v1390 = vadd.f32 0.0, %v1389
        %1391 = vmatmul.bf16.gmra.mxu0 %v1252
        %v1392 = vpop.f32.mrf.mxu0
        %v1393 = vadd.f32 0.0, %v1392
        %v1394 = vpop.f32.mrf.mxu0
        %v1395 = vadd.f32 0.0, %v1394
        %1396 = vmatmul.bf16.gmra.mxu0 %v1254
        %v1397 = vpop.f32.mrf.mxu0
        %v1398 = vadd.f32 0.0, %v1397
        %v1399 = vpop.f32.mrf.mxu0
        %v1400 = vadd.f32 0.0, %v1399
        %1401 = vmatmul.bf16.gmra.mxu0 %v1256
        %v1402 = vpop.f32.mrf.mxu0
        %v1403 = vadd.f32 0.0, %v1402
        %v1404 = vpop.f32.mrf.mxu0
        %v1405 = vadd.f32 0.0, %v1404
        %1406 = vmatmul.bf16.gmra.mxu0 %v1258
        %v1407 = vpop.f32.mrf.mxu0
        %v1408 = vadd.f32 0.0, %v1407
        %v1409 = vpop.f32.mrf.mxu0
        %v1410 = vadd.f32 0.0, %v1409
        %1411 = vmatmul.bf16.gmra.mxu0 %v1260
        %v1412 = vpop.f32.mrf.mxu0
        %v1413 = vadd.f32 0.0, %v1412
        %v1414 = vpop.f32.mrf.mxu0
        %v1415 = vadd.f32 0.0, %v1414
        %1416 = vmatmul.bf16.gmra.mxu0 %v1262
        %v1417 = vpop.f32.mrf.mxu0
        %v1418 = vadd.f32 0.0, %v1417
        %v1419 = vpop.f32.mrf.mxu0
        %v1420 = vadd.f32 0.0, %v1419
        %1421 = vmatmul.bf16.gmra.mxu0 %v1264
        %v1422 = vpop.f32.mrf.mxu0
        %v1423 = vadd.f32 0.0, %v1422
        %v1424 = vpop.f32.mrf.mxu0
        %v1425 = vadd.f32 0.0, %v1424
        %1426 = vmatmul.bf16.gmra.mxu0 %v1266
        %v1427 = vpop.f32.mrf.mxu0
        %v1428 = vadd.f32 0.0, %v1427
        %v1429 = vpop.f32.mrf.mxu0
        %v1430 = vadd.f32 0.0, %v1429
        %1431 = vmatmul.bf16.gmra.mxu0 %v1268
        %v1432 = vpop.f32.mrf.mxu0
        %v1433 = vadd.f32 0.0, %v1432
        %v1434 = vpop.f32.mrf.mxu0
        %v1435 = vadd.f32 0.0, %v1434
        %1436 = vmatmul.bf16.gmra.mxu0 %v1270
        %v1437 = vpop.f32.mrf.mxu0
        %v1438 = vadd.f32 0.0, %v1437
        %v1439 = vpop.f32.mrf.mxu0
        %v1440 = vadd.f32 0.0, %v1439
        %1441 = vmatmul.bf16.gmra.mxu0 %v1272
        %v1442 = vpop.f32.mrf.mxu0
        %v1443 = vadd.f32 0.0, %v1442
        %v1444 = vpop.f32.mrf.mxu0
        %v1445 = vadd.f32 0.0, %v1444
        %1446 = vmatmul.bf16.gmra.mxu0 %v1274
        %v1447 = vpop.f32.mrf.mxu0
        %v1448 = vadd.f32 0.0, %v1447
        %v1449 = vpop.f32.mrf.mxu0
        %v1450 = vadd.f32 0.0, %v1449
        %1451 = vmatmul.bf16.gmra.mxu0 %v1276
        %v1452 = vpop.f32.mrf.mxu0
        %v1453 = vadd.f32 0.0, %v1452
        %v1454 = vpop.f32.mrf.mxu0
        %v1455 = vadd.f32 0.0, %v1454
        %1456 = vmatmul.bf16.gmra.mxu0 %v1278
        %v1457 = vpop.f32.mrf.mxu0
        %v1458 = vadd.f32 0.0, %v1457
        %v1459 = vpop.f32.mrf.mxu0
        %v1460 = vadd.f32 0.0, %v1459
        %1461 = vmatmul.bf16.gmra.mxu0 %v1280
        %v1462 = vpop.f32.mrf.mxu0
        %v1463 = vadd.f32 0.0, %v1462
        %v1464 = vpop.f32.mrf.mxu0
        %v1465 = vadd.f32 0.0, %v1464
        %1466 = vdwg.mxu0
        %1467 = vmatpush.bf16.msra.mxu0 %v1361
        %1468 = vmatpush.bf16.msra.mxu0 %v1360
        %1469 = vmatpush.bf16.msra.mxu0 %v1359
        %1470 = vmatpush.bf16.msra.mxu0 %v1358
        %1471 = vmatpush.bf16.msra.mxu0 %v1357
        %1472 = vmatpush.bf16.msra.mxu0 %v1356
        %1473 = vmatpush.bf16.msra.mxu0 %v1355
        %1474 = vmatpush.bf16.msra.mxu0 %v1354
        %1475 = vmatmul.bf16.gmra.mxu0 %v1251
        %v1476 = vpop.f32.mrf.mxu0
        %v1477 = vadd.f32 %v1388, %v1476
        %v1478 = vpop.f32.mrf.mxu0
        %v1479 = vadd.f32 %v1390, %v1478
        %1480 = vmatmul.bf16.gmra.mxu0 %v1253
        %v1481 = vpop.f32.mrf.mxu0
        %v1482 = vadd.f32 %v1393, %v1481
        %v1483 = vpop.f32.mrf.mxu0
        %v1484 = vadd.f32 %v1395, %v1483
        %1485 = vmatmul.bf16.gmra.mxu0 %v1255
        %v1486 = vpop.f32.mrf.mxu0
        %v1487 = vadd.f32 %v1398, %v1486
        %v1488 = vpop.f32.mrf.mxu0
        %v1489 = vadd.f32 %v1400, %v1488
        %1490 = vmatmul.bf16.gmra.mxu0 %v1257
        %v1491 = vpop.f32.mrf.mxu0
        %v1492 = vadd.f32 %v1403, %v1491
        %v1493 = vpop.f32.mrf.mxu0
        %v1494 = vadd.f32 %v1405, %v1493
        %1495 = vmatmul.bf16.gmra.mxu0 %v1259
        %v1496 = vpop.f32.mrf.mxu0
        %v1497 = vadd.f32 %v1408, %v1496
        %v1498 = vpop.f32.mrf.mxu0
        %v1499 = vadd.f32 %v1410, %v1498
        %1500 = vmatmul.bf16.gmra.mxu0 %v1261
        %v1501 = vpop.f32.mrf.mxu0
        %v1502 = vadd.f32 %v1413, %v1501
        %v1503 = vpop.f32.mrf.mxu0
        %v1504 = vadd.f32 %v1415, %v1503
        %1505 = vmatmul.bf16.gmra.mxu0 %v1263
        %v1506 = vpop.f32.mrf.mxu0
        %v1507 = vadd.f32 %v1418, %v1506
        %v1508 = vpop.f32.mrf.mxu0
        %v1509 = vadd.f32 %v1420, %v1508
        %1510 = vmatmul.bf16.gmra.mxu0 %v1265
        %v1511 = vpop.f32.mrf.mxu0
        %v1512 = vadd.f32 %v1423, %v1511
        %v1513 = vpop.f32.mrf.mxu0
        %v1514 = vadd.f32 %v1425, %v1513
        %1515 = vmatmul.bf16.gmra.mxu0 %v1267
        %v1516 = vpop.f32.mrf.mxu0
        %v1517 = vadd.f32 %v1428, %v1516
        %v1518 = vpop.f32.mrf.mxu0
        %v1519 = vadd.f32 %v1430, %v1518
        %1520 = vmatmul.bf16.gmra.mxu0 %v1269
        %v1521 = vpop.f32.mrf.mxu0
        %v1522 = vadd.f32 %v1433, %v1521
        %v1523 = vpop.f32.mrf.mxu0
        %v1524 = vadd.f32 %v1435, %v1523
        %1525 = vmatmul.bf16.gmra.mxu0 %v1271
        %v1526 = vpop.f32.mrf.mxu0
        %v1527 = vadd.f32 %v1438, %v1526
        %v1528 = vpop.f32.mrf.mxu0
        %v1529 = vadd.f32 %v1440, %v1528
        %1530 = vmatmul.bf16.gmra.mxu0 %v1273
        %v1531 = vpop.f32.mrf.mxu0
        %v1532 = vadd.f32 %v1443, %v1531
        %v1533 = vpop.f32.mrf.mxu0
        %v1534 = vadd.f32 %v1445, %v1533
        %1535 = vmatmul.bf16.gmra.mxu0 %v1275
        %v1536 = vpop.f32.mrf.mxu0
        %v1537 = vadd.f32 %v1448, %v1536
        %v1538 = vpop.f32.mrf.mxu0
        %v1539 = vadd.f32 %v1450, %v1538
        %1540 = vmatmul.bf16.gmra.mxu0 %v1277
        %v1541 = vpop.f32.mrf.mxu0
        %v1542 = vadd.f32 %v1453, %v1541
        %v1543 = vpop.f32.mrf.mxu0
        %v1544 = vadd.f32 %v1455, %v1543
        %1545 = vmatmul.bf16.gmra.mxu0 %v1279
        %v1546 = vpop.f32.mrf.mxu0
        %v1547 = vadd.f32 %v1458, %v1546
        %v1548 = vpop.f32.mrf.mxu0
        %v1549 = vadd.f32 %v1460, %v1548
        %1550 = vmatmul.bf16.gmra.mxu0 %v1281
        %v1551 = vpop.f32.mrf.mxu0
        %v1552 = vadd.f32 %v1463, %v1551
        %v1553 = vpop.f32.mrf.mxu0
        %v1554 = vadd.f32 %v1465, %v1553
        %1555 = vdwg.mxu0
        %v1556 = vrcp.pop %v1156
        %v1557 = vmul.f32 %v1156, %v1556
        %v1558 = vsub.f32 1.0, %v1557
        %v1559 = vmul.f32 %v1556, %v1558
        %v1560 = vadd.f32 %v1556, %v1559
        %vm1561 = vweird.f32 %v1156
        %vm1562 = vweird.f32 %v1556
        %vm1563 = vmor %vm1561, %vm1562
        %v1564 = vsel %vm1563, %v1556, %v1560
        %v1565 = vand.u32 2147483647, %v1156
        %vm1566 = vcmp.eq.f32.partialorder %v1565, 8.507059e+37
        %v1567 = vand.u32 %v1156, 2147483648
        %v1568 = vor.u32 1.1754944e-38, %v1567
        %v1569 = vsel %vm1566, %v1568, %v1564
        %v1570 = vmul.f32 %v1477, %v1569
        %v1571 = vrcp.pop %v1159
        %v1572 = vmul.f32 %v1159, %v1571
        %v1573 = vsub.f32 1.0, %v1572
        %v1574 = vmul.f32 %v1571, %v1573
        %v1575 = vadd.f32 %v1571, %v1574
        %vm1576 = vweird.f32 %v1159
        %vm1577 = vweird.f32 %v1571
        %vm1578 = vmor %vm1576, %vm1577
        %v1579 = vsel %vm1578, %v1571, %v1575
        %v1580 = vand.u32 2147483647, %v1159
        %vm1581 = vcmp.eq.f32.partialorder %v1580, 8.507059e+37
        %v1582 = vand.u32 %v1159, 2147483648
        %v1583 = vor.u32 1.1754944e-38, %v1582
        %v1584 = vsel %vm1581, %v1583, %v1579
        %v1585 = vmul.f32 %v1479, %v1584
        %v1586 = vrcp.pop %v1162
        %v1587 = vmul.f32 %v1162, %v1586
        %v1588 = vsub.f32 1.0, %v1587
        %v1589 = vmul.f32 %v1586, %v1588
        %v1590 = vadd.f32 %v1586, %v1589
        %vm1591 = vweird.f32 %v1162
        %vm1592 = vweird.f32 %v1586
        %vm1593 = vmor %vm1591, %vm1592
        %v1594 = vsel %vm1593, %v1586, %v1590
        %v1595 = vand.u32 2147483647, %v1162
        %vm1596 = vcmp.eq.f32.partialorder %v1595, 8.507059e+37
        %v1597 = vand.u32 %v1162, 2147483648
        %v1598 = vor.u32 1.1754944e-38, %v1597
        %v1599 = vsel %vm1596, %v1598, %v1594
        %v1600 = vmul.f32 %v1482, %v1599
        %v1601 = vrcp.pop %v1165
        %v1602 = vmul.f32 %v1165, %v1601
        %v1603 = vsub.f32 1.0, %v1602
        %v1604 = vmul.f32 %v1601, %v1603
        %v1605 = vadd.f32 %v1601, %v1604
        %vm1606 = vweird.f32 %v1165
        %vm1607 = vweird.f32 %v1601
        %vm1608 = vmor %vm1606, %vm1607
        %v1609 = vsel %vm1608, %v1601, %v1605
        %v1610 = vand.u32 2147483647, %v1165
        %vm1611 = vcmp.eq.f32.partialorder %v1610, 8.507059e+37
        %v1612 = vand.u32 %v1165, 2147483648
        %v1613 = vor.u32 1.1754944e-38, %v1612
        %v1614 = vsel %vm1611, %v1613, %v1609
        %v1615 = vmul.f32 %v1484, %v1614
        %v1616 = vrcp.pop %v1168
        %v1617 = vmul.f32 %v1168, %v1616
        %v1618 = vsub.f32 1.0, %v1617
        %v1619 = vmul.f32 %v1616, %v1618
        %v1620 = vadd.f32 %v1616, %v1619
        %vm1621 = vweird.f32 %v1168
        %vm1622 = vweird.f32 %v1616
        %vm1623 = vmor %vm1621, %vm1622
        %v1624 = vsel %vm1623, %v1616, %v1620
        %v1625 = vand.u32 2147483647, %v1168
        %vm1626 = vcmp.eq.f32.partialorder %v1625, 8.507059e+37
        %v1627 = vand.u32 %v1168, 2147483648
        %v1628 = vor.u32 1.1754944e-38, %v1627
        %v1629 = vsel %vm1626, %v1628, %v1624
        %v1630 = vmul.f32 %v1487, %v1629
        %v1631 = vrcp.pop %v1171
        %v1632 = vmul.f32 %v1171, %v1631
        %v1633 = vsub.f32 1.0, %v1632
        %v1634 = vmul.f32 %v1631, %v1633
        %v1635 = vadd.f32 %v1631, %v1634
        %vm1636 = vweird.f32 %v1171
        %vm1637 = vweird.f32 %v1631
        %vm1638 = vmor %vm1636, %vm1637
        %v1639 = vsel %vm1638, %v1631, %v1635
        %v1640 = vand.u32 2147483647, %v1171
        %vm1641 = vcmp.eq.f32.partialorder %v1640, 8.507059e+37
        %v1642 = vand.u32 %v1171, 2147483648
        %v1643 = vor.u32 1.1754944e-38, %v1642
        %v1644 = vsel %vm1641, %v1643, %v1639
        %v1645 = vmul.f32 %v1489, %v1644
        %v1646 = vrcp.pop %v1174
        %v1647 = vmul.f32 %v1174, %v1646
        %v1648 = vsub.f32 1.0, %v1647
        %v1649 = vmul.f32 %v1646, %v1648
        %v1650 = vadd.f32 %v1646, %v1649
        %vm1651 = vweird.f32 %v1174
        %vm1652 = vweird.f32 %v1646
        %vm1653 = vmor %vm1651, %vm1652
        %v1654 = vsel %vm1653, %v1646, %v1650
        %v1655 = vand.u32 2147483647, %v1174
        %vm1656 = vcmp.eq.f32.partialorder %v1655, 8.507059e+37
        %v1657 = vand.u32 %v1174, 2147483648
        %v1658 = vor.u32 1.1754944e-38, %v1657
        %v1659 = vsel %vm1656, %v1658, %v1654
        %v1660 = vmul.f32 %v1492, %v1659
        %v1661 = vrcp.pop %v1177
        %v1662 = vmul.f32 %v1177, %v1661
        %v1663 = vsub.f32 1.0, %v1662
        %v1664 = vmul.f32 %v1661, %v1663
        %v1665 = vadd.f32 %v1661, %v1664
        %vm1666 = vweird.f32 %v1177
        %vm1667 = vweird.f32 %v1661
        %vm1668 = vmor %vm1666, %vm1667
        %v1669 = vsel %vm1668, %v1661, %v1665
        %v1670 = vand.u32 2147483647, %v1177
        %vm1671 = vcmp.eq.f32.partialorder %v1670, 8.507059e+37
        %v1672 = vand.u32 %v1177, 2147483648
        %v1673 = vor.u32 1.1754944e-38, %v1672
        %v1674 = vsel %vm1671, %v1673, %v1669
        %v1675 = vmul.f32 %v1494, %v1674
        %v1676 = vrcp.pop %v1180
        %v1677 = vmul.f32 %v1180, %v1676
        %v1678 = vsub.f32 1.0, %v1677
        %v1679 = vmul.f32 %v1676, %v1678
        %v1680 = vadd.f32 %v1676, %v1679
        %vm1681 = vweird.f32 %v1180
        %vm1682 = vweird.f32 %v1676
        %vm1683 = vmor %vm1681, %vm1682
        %v1684 = vsel %vm1683, %v1676, %v1680
        %v1685 = vand.u32 2147483647, %v1180
        %vm1686 = vcmp.eq.f32.partialorder %v1685, 8.507059e+37
        %v1687 = vand.u32 %v1180, 2147483648
        %v1688 = vor.u32 1.1754944e-38, %v1687
        %v1689 = vsel %vm1686, %v1688, %v1684
        %v1690 = vmul.f32 %v1497, %v1689
        %v1691 = vrcp.pop %v1183
        %v1692 = vmul.f32 %v1183, %v1691
        %v1693 = vsub.f32 1.0, %v1692
        %v1694 = vmul.f32 %v1691, %v1693
        %v1695 = vadd.f32 %v1691, %v1694
        %vm1696 = vweird.f32 %v1183
        %vm1697 = vweird.f32 %v1691
        %vm1698 = vmor %vm1696, %vm1697
        %v1699 = vsel %vm1698, %v1691, %v1695
        %v1700 = vand.u32 2147483647, %v1183
        %vm1701 = vcmp.eq.f32.partialorder %v1700, 8.507059e+37
        %v1702 = vand.u32 %v1183, 2147483648
        %v1703 = vor.u32 1.1754944e-38, %v1702
        %v1704 = vsel %vm1701, %v1703, %v1699
        %v1705 = vmul.f32 %v1499, %v1704
        %v1706 = vrcp.pop %v1186
        %v1707 = vmul.f32 %v1186, %v1706
        %v1708 = vsub.f32 1.0, %v1707
        %v1709 = vmul.f32 %v1706, %v1708
        %v1710 = vadd.f32 %v1706, %v1709
        %vm1711 = vweird.f32 %v1186
        %vm1712 = vweird.f32 %v1706
        %vm1713 = vmor %vm1711, %vm1712
        %v1714 = vsel %vm1713, %v1706, %v1710
        %v1715 = vand.u32 2147483647, %v1186
        %vm1716 = vcmp.eq.f32.partialorder %v1715, 8.507059e+37
        %v1717 = vand.u32 %v1186, 2147483648
        %v1718 = vor.u32 1.1754944e-38, %v1717
        %v1719 = vsel %vm1716, %v1718, %v1714
        %v1720 = vmul.f32 %v1502, %v1719
        %v1721 = vrcp.pop %v1189
        %v1722 = vmul.f32 %v1189, %v1721
        %v1723 = vsub.f32 1.0, %v1722
        %v1724 = vmul.f32 %v1721, %v1723
        %v1725 = vadd.f32 %v1721, %v1724
        %vm1726 = vweird.f32 %v1189
        %vm1727 = vweird.f32 %v1721
        %vm1728 = vmor %vm1726, %vm1727
        %v1729 = vsel %vm1728, %v1721, %v1725
        %v1730 = vand.u32 2147483647, %v1189
        %vm1731 = vcmp.eq.f32.partialorder %v1730, 8.507059e+37
        %v1732 = vand.u32 %v1189, 2147483648
        %v1733 = vor.u32 1.1754944e-38, %v1732
        %v1734 = vsel %vm1731, %v1733, %v1729
        %v1735 = vmul.f32 %v1504, %v1734
        %v1736 = vrcp.pop %v1192
        %v1737 = vmul.f32 %v1192, %v1736
        %v1738 = vsub.f32 1.0, %v1737
        %v1739 = vmul.f32 %v1736, %v1738
        %v1740 = vadd.f32 %v1736, %v1739
        %vm1741 = vweird.f32 %v1192
        %vm1742 = vweird.f32 %v1736
        %vm1743 = vmor %vm1741, %vm1742
        %v1744 = vsel %vm1743, %v1736, %v1740
        %v1745 = vand.u32 2147483647, %v1192
        %vm1746 = vcmp.eq.f32.partialorder %v1745, 8.507059e+37
        %v1747 = vand.u32 %v1192, 2147483648
        %v1748 = vor.u32 1.1754944e-38, %v1747
        %v1749 = vsel %vm1746, %v1748, %v1744
        %v1750 = vmul.f32 %v1507, %v1749
        %v1751 = vrcp.pop %v1195
        %v1752 = vmul.f32 %v1195, %v1751
        %v1753 = vsub.f32 1.0, %v1752
        %v1754 = vmul.f32 %v1751, %v1753
        %v1755 = vadd.f32 %v1751, %v1754
        %vm1756 = vweird.f32 %v1195
        %vm1757 = vweird.f32 %v1751
        %vm1758 = vmor %vm1756, %vm1757
        %v1759 = vsel %vm1758, %v1751, %v1755
        %v1760 = vand.u32 2147483647, %v1195
        %vm1761 = vcmp.eq.f32.partialorder %v1760, 8.507059e+37
        %v1762 = vand.u32 %v1195, 2147483648
        %v1763 = vor.u32 1.1754944e-38, %v1762
        %v1764 = vsel %vm1761, %v1763, %v1759
        %v1765 = vmul.f32 %v1509, %v1764
        %v1766 = vrcp.pop %v1198
        %v1767 = vmul.f32 %v1198, %v1766
        %v1768 = vsub.f32 1.0, %v1767
        %v1769 = vmul.f32 %v1766, %v1768
        %v1770 = vadd.f32 %v1766, %v1769
        %vm1771 = vweird.f32 %v1198
        %vm1772 = vweird.f32 %v1766
        %vm1773 = vmor %vm1771, %vm1772
        %v1774 = vsel %vm1773, %v1766, %v1770
        %v1775 = vand.u32 2147483647, %v1198
        %vm1776 = vcmp.eq.f32.partialorder %v1775, 8.507059e+37
        %v1777 = vand.u32 %v1198, 2147483648
        %v1778 = vor.u32 1.1754944e-38, %v1777
        %v1779 = vsel %vm1776, %v1778, %v1774
        %v1780 = vmul.f32 %v1512, %v1779
        %v1781 = vrcp.pop %v1201
        %v1782 = vmul.f32 %v1201, %v1781
        %v1783 = vsub.f32 1.0, %v1782
        %v1784 = vmul.f32 %v1781, %v1783
        %v1785 = vadd.f32 %v1781, %v1784
        %vm1786 = vweird.f32 %v1201
        %vm1787 = vweird.f32 %v1781
        %vm1788 = vmor %vm1786, %vm1787
        %v1789 = vsel %vm1788, %v1781, %v1785
        %v1790 = vand.u32 2147483647, %v1201
        %vm1791 = vcmp.eq.f32.partialorder %v1790, 8.507059e+37
        %v1792 = vand.u32 %v1201, 2147483648
        %v1793 = vor.u32 1.1754944e-38, %v1792
        %v1794 = vsel %vm1791, %v1793, %v1789
        %v1795 = vmul.f32 %v1514, %v1794
        %v1796 = vrcp.pop %v1204
        %v1797 = vmul.f32 %v1204, %v1796
        %v1798 = vsub.f32 1.0, %v1797
        %v1799 = vmul.f32 %v1796, %v1798
        %v1800 = vadd.f32 %v1796, %v1799
        %vm1801 = vweird.f32 %v1204
        %vm1802 = vweird.f32 %v1796
        %vm1803 = vmor %vm1801, %vm1802
        %v1804 = vsel %vm1803, %v1796, %v1800
        %v1805 = vand.u32 2147483647, %v1204
        %vm1806 = vcmp.eq.f32.partialorder %v1805, 8.507059e+37
        %v1807 = vand.u32 %v1204, 2147483648
        %v1808 = vor.u32 1.1754944e-38, %v1807
        %v1809 = vsel %vm1806, %v1808, %v1804
        %v1810 = vmul.f32 %v1517, %v1809
        %v1811 = vrcp.pop %v1207
        %v1812 = vmul.f32 %v1207, %v1811
        %v1813 = vsub.f32 1.0, %v1812
        %v1814 = vmul.f32 %v1811, %v1813
        %v1815 = vadd.f32 %v1811, %v1814
        %vm1816 = vweird.f32 %v1207
        %vm1817 = vweird.f32 %v1811
        %vm1818 = vmor %vm1816, %vm1817
        %v1819 = vsel %vm1818, %v1811, %v1815
        %v1820 = vand.u32 2147483647, %v1207
        %vm1821 = vcmp.eq.f32.partialorder %v1820, 8.507059e+37
        %v1822 = vand.u32 %v1207, 2147483648
        %v1823 = vor.u32 1.1754944e-38, %v1822
        %v1824 = vsel %vm1821, %v1823, %v1819
        %v1825 = vmul.f32 %v1519, %v1824
        %v1826 = vrcp.pop %v1210
        %v1827 = vmul.f32 %v1210, %v1826
        %v1828 = vsub.f32 1.0, %v1827
        %v1829 = vmul.f32 %v1826, %v1828
        %v1830 = vadd.f32 %v1826, %v1829
        %vm1831 = vweird.f32 %v1210
        %vm1832 = vweird.f32 %v1826
        %vm1833 = vmor %vm1831, %vm1832
        %v1834 = vsel %vm1833, %v1826, %v1830
        %v1835 = vand.u32 2147483647, %v1210
        %vm1836 = vcmp.eq.f32.partialorder %v1835, 8.507059e+37
        %v1837 = vand.u32 %v1210, 2147483648
        %v1838 = vor.u32 1.1754944e-38, %v1837
        %v1839 = vsel %vm1836, %v1838, %v1834
        %v1840 = vmul.f32 %v1522, %v1839
        %v1841 = vrcp.pop %v1213
        %v1842 = vmul.f32 %v1213, %v1841
        %v1843 = vsub.f32 1.0, %v1842
        %v1844 = vmul.f32 %v1841, %v1843
        %v1845 = vadd.f32 %v1841, %v1844
        %vm1846 = vweird.f32 %v1213
        %vm1847 = vweird.f32 %v1841
        %vm1848 = vmor %vm1846, %vm1847
        %v1849 = vsel %vm1848, %v1841, %v1845
        %v1850 = vand.u32 2147483647, %v1213
        %vm1851 = vcmp.eq.f32.partialorder %v1850, 8.507059e+37
        %v1852 = vand.u32 %v1213, 2147483648
        %v1853 = vor.u32 1.1754944e-38, %v1852
        %v1854 = vsel %vm1851, %v1853, %v1849
        %v1855 = vmul.f32 %v1524, %v1854
        %v1856 = vrcp.pop %v1216
        %v1857 = vmul.f32 %v1216, %v1856
        %v1858 = vsub.f32 1.0, %v1857
        %v1859 = vmul.f32 %v1856, %v1858
        %v1860 = vadd.f32 %v1856, %v1859
        %vm1861 = vweird.f32 %v1216
        %vm1862 = vweird.f32 %v1856
        %vm1863 = vmor %vm1861, %vm1862
        %v1864 = vsel %vm1863, %v1856, %v1860
        %v1865 = vand.u32 2147483647, %v1216
        %vm1866 = vcmp.eq.f32.partialorder %v1865, 8.507059e+37
        %v1867 = vand.u32 %v1216, 2147483648
        %v1868 = vor.u32 1.1754944e-38, %v1867
        %v1869 = vsel %vm1866, %v1868, %v1864
        %v1870 = vmul.f32 %v1527, %v1869
        %v1871 = vrcp.pop %v1219
        %v1872 = vmul.f32 %v1219, %v1871
        %v1873 = vsub.f32 1.0, %v1872
        %v1874 = vmul.f32 %v1871, %v1873
        %v1875 = vadd.f32 %v1871, %v1874
        %vm1876 = vweird.f32 %v1219
        %vm1877 = vweird.f32 %v1871
        %vm1878 = vmor %vm1876, %vm1877
        %v1879 = vsel %vm1878, %v1871, %v1875
        %v1880 = vand.u32 2147483647, %v1219
        %vm1881 = vcmp.eq.f32.partialorder %v1880, 8.507059e+37
        %v1882 = vand.u32 %v1219, 2147483648
        %v1883 = vor.u32 1.1754944e-38, %v1882
        %v1884 = vsel %vm1881, %v1883, %v1879
        %v1885 = vmul.f32 %v1529, %v1884
        %v1886 = vrcp.pop %v1222
        %v1887 = vmul.f32 %v1222, %v1886
        %v1888 = vsub.f32 1.0, %v1887
        %v1889 = vmul.f32 %v1886, %v1888
        %v1890 = vadd.f32 %v1886, %v1889
        %vm1891 = vweird.f32 %v1222
        %vm1892 = vweird.f32 %v1886
        %vm1893 = vmor %vm1891, %vm1892
        %v1894 = vsel %vm1893, %v1886, %v1890
        %v1895 = vand.u32 2147483647, %v1222
        %vm1896 = vcmp.eq.f32.partialorder %v1895, 8.507059e+37
        %v1897 = vand.u32 %v1222, 2147483648
        %v1898 = vor.u32 1.1754944e-38, %v1897
        %v1899 = vsel %vm1896, %v1898, %v1894
        %v1900 = vmul.f32 %v1532, %v1899
        %v1901 = vrcp.pop %v1225
        %v1902 = vmul.f32 %v1225, %v1901
        %v1903 = vsub.f32 1.0, %v1902
        %v1904 = vmul.f32 %v1901, %v1903
        %v1905 = vadd.f32 %v1901, %v1904
        %vm1906 = vweird.f32 %v1225
        %vm1907 = vweird.f32 %v1901
        %vm1908 = vmor %vm1906, %vm1907
        %v1909 = vsel %vm1908, %v1901, %v1905
        %v1910 = vand.u32 2147483647, %v1225
        %vm1911 = vcmp.eq.f32.partialorder %v1910, 8.507059e+37
        %v1912 = vand.u32 %v1225, 2147483648
        %v1913 = vor.u32 1.1754944e-38, %v1912
        %v1914 = vsel %vm1911, %v1913, %v1909
        %v1915 = vmul.f32 %v1534, %v1914
        %v1916 = vrcp.pop %v1228
        %v1917 = vmul.f32 %v1228, %v1916
        %v1918 = vsub.f32 1.0, %v1917
        %v1919 = vmul.f32 %v1916, %v1918
        %v1920 = vadd.f32 %v1916, %v1919
        %vm1921 = vweird.f32 %v1228
        %vm1922 = vweird.f32 %v1916
        %vm1923 = vmor %vm1921, %vm1922
        %v1924 = vsel %vm1923, %v1916, %v1920
        %v1925 = vand.u32 2147483647, %v1228
        %vm1926 = vcmp.eq.f32.partialorder %v1925, 8.507059e+37
        %v1927 = vand.u32 %v1228, 2147483648
        %v1928 = vor.u32 1.1754944e-38, %v1927
        %v1929 = vsel %vm1926, %v1928, %v1924
        %v1930 = vmul.f32 %v1537, %v1929
        %v1931 = vrcp.pop %v1231
        %v1932 = vmul.f32 %v1231, %v1931
        %v1933 = vsub.f32 1.0, %v1932
        %v1934 = vmul.f32 %v1931, %v1933
        %v1935 = vadd.f32 %v1931, %v1934
        %vm1936 = vweird.f32 %v1231
        %vm1937 = vweird.f32 %v1931
        %vm1938 = vmor %vm1936, %vm1937
        %v1939 = vsel %vm1938, %v1931, %v1935
        %v1940 = vand.u32 2147483647, %v1231
        %vm1941 = vcmp.eq.f32.partialorder %v1940, 8.507059e+37
        %v1942 = vand.u32 %v1231, 2147483648
        %v1943 = vor.u32 1.1754944e-38, %v1942
        %v1944 = vsel %vm1941, %v1943, %v1939
        %v1945 = vmul.f32 %v1539, %v1944
        %v1946 = vrcp.pop %v1234
        %v1947 = vmul.f32 %v1234, %v1946
        %v1948 = vsub.f32 1.0, %v1947
        %v1949 = vmul.f32 %v1946, %v1948
        %v1950 = vadd.f32 %v1946, %v1949
        %vm1951 = vweird.f32 %v1234
        %vm1952 = vweird.f32 %v1946
        %vm1953 = vmor %vm1951, %vm1952
        %v1954 = vsel %vm1953, %v1946, %v1950
        %v1955 = vand.u32 2147483647, %v1234
        %vm1956 = vcmp.eq.f32.partialorder %v1955, 8.507059e+37
        %v1957 = vand.u32 %v1234, 2147483648
        %v1958 = vor.u32 1.1754944e-38, %v1957
        %v1959 = vsel %vm1956, %v1958, %v1954
        %v1960 = vmul.f32 %v1542, %v1959
        %v1961 = vrcp.pop %v1237
        %v1962 = vmul.f32 %v1237, %v1961
        %v1963 = vsub.f32 1.0, %v1962
        %v1964 = vmul.f32 %v1961, %v1963
        %v1965 = vadd.f32 %v1961, %v1964
        %vm1966 = vweird.f32 %v1237
        %vm1967 = vweird.f32 %v1961
        %vm1968 = vmor %vm1966, %vm1967
        %v1969 = vsel %vm1968, %v1961, %v1965
        %v1970 = vand.u32 2147483647, %v1237
        %vm1971 = vcmp.eq.f32.partialorder %v1970, 8.507059e+37
        %v1972 = vand.u32 %v1237, 2147483648
        %v1973 = vor.u32 1.1754944e-38, %v1972
        %v1974 = vsel %vm1971, %v1973, %v1969
        %v1975 = vmul.f32 %v1544, %v1974
        %v1976 = vrcp.pop %v1240
        %v1977 = vmul.f32 %v1240, %v1976
        %v1978 = vsub.f32 1.0, %v1977
        %v1979 = vmul.f32 %v1976, %v1978
        %v1980 = vadd.f32 %v1976, %v1979
        %vm1981 = vweird.f32 %v1240
        %vm1982 = vweird.f32 %v1976
        %vm1983 = vmor %vm1981, %vm1982
        %v1984 = vsel %vm1983, %v1976, %v1980
        %v1985 = vand.u32 2147483647, %v1240
        %vm1986 = vcmp.eq.f32.partialorder %v1985, 8.507059e+37
        %v1987 = vand.u32 %v1240, 2147483648
        %v1988 = vor.u32 1.1754944e-38, %v1987
        %v1989 = vsel %vm1986, %v1988, %v1984
        %v1990 = vmul.f32 %v1547, %v1989
        %v1991 = vrcp.pop %v1243
        %v1992 = vmul.f32 %v1243, %v1991
        %v1993 = vsub.f32 1.0, %v1992
        %v1994 = vmul.f32 %v1991, %v1993
        %v1995 = vadd.f32 %v1991, %v1994
        %vm1996 = vweird.f32 %v1243
        %vm1997 = vweird.f32 %v1991
        %vm1998 = vmor %vm1996, %vm1997
        %v1999 = vsel %vm1998, %v1991, %v1995
        %v2000 = vand.u32 2147483647, %v1243
        %vm2001 = vcmp.eq.f32.partialorder %v2000, 8.507059e+37
        %v2002 = vand.u32 %v1243, 2147483648
        %v2003 = vor.u32 1.1754944e-38, %v2002
        %v2004 = vsel %vm2001, %v2003, %v1999
        %v2005 = vmul.f32 %v1549, %v2004
        %v2006 = vrcp.pop %v1246
        %v2007 = vmul.f32 %v1246, %v2006
        %v2008 = vsub.f32 1.0, %v2007
        %v2009 = vmul.f32 %v2006, %v2008
        %v2010 = vadd.f32 %v2006, %v2009
        %vm2011 = vweird.f32 %v1246
        %vm2012 = vweird.f32 %v2006
        %vm2013 = vmor %vm2011, %vm2012
        %v2014 = vsel %vm2013, %v2006, %v2010
        %v2015 = vand.u32 2147483647, %v1246
        %vm2016 = vcmp.eq.f32.partialorder %v2015, 8.507059e+37
        %v2017 = vand.u32 %v1246, 2147483648
        %v2018 = vor.u32 1.1754944e-38, %v2017
        %v2019 = vsel %vm2016, %v2018, %v2014
        %v2020 = vmul.f32 %v1552, %v2019
        %v2021 = vrcp.pop %v1249
        %v2022 = vmul.f32 %v1249, %v2021
        %v2023 = vsub.f32 1.0, %v2022
        %v2024 = vmul.f32 %v2021, %v2023
        %v2025 = vadd.f32 %v2021, %v2024
        %vm2026 = vweird.f32 %v1249
        %vm2027 = vweird.f32 %v2021
        %vm2028 = vmor %vm2026, %vm2027
        %v2029 = vsel %vm2028, %v2021, %v2025
        %v2030 = vand.u32 2147483647, %v1249
        %vm2031 = vcmp.eq.f32.partialorder %v2030, 8.507059e+37
        %v2032 = vand.u32 %v1249, 2147483648
        %v2033 = vor.u32 1.1754944e-38, %v2032
        %v2034 = vsel %vm2031, %v2033, %v2029
        %v2035 = vmul.f32 %v1554, %v2034
        %v2036 = vpack.c.bf16 %v1585, %v1570
        %v2037 = vpack.c.bf16 %v1825, %v1810
        %v2038 = vpack.c.bf16 %v1615, %v1600
        %v2039 = vpack.c.bf16 %v1855, %v1840
        %v2040 = vpack.c.bf16 %v1645, %v1630
        %v2041 = vpack.c.bf16 %v1885, %v1870
        %v2042 = vpack.c.bf16 %v1675, %v1660
        %v2043 = vpack.c.bf16 %v1915, %v1900
        %v2044 = vpack.c.bf16 %v1705, %v1690
        %v2045 = vpack.c.bf16 %v1945, %v1930
        %v2046 = vpack.c.bf16 %v1735, %v1720
        %v2047 = vpack.c.bf16 %v1975, %v1960
        %v2048 = vpack.c.bf16 %v1765, %v1750
        %v2049 = vpack.c.bf16 %v2005, %v1990
        %v2050 = vpack.c.bf16 %v1795, %v1780
        %v2051 = vpack.c.bf16 %v2035, %v2020
        %v2052 = vld [vmem:[%s3] sm:$0xff]
        %v2053 = vld [vmem:[%s3 + $0x8] sm:$0xff]
        %v2054 = vld [vmem:[%s3 + $0x10] sm:$0xff]
        %v2055 = vld [vmem:[%s3 + $0x18] sm:$0xff]
        %v2056 = vld [vmem:[%s3 + $0x20] sm:$0xff]
        %v2057 = vld [vmem:[%s3 + $0x28] sm:$0xff]
        %v2058 = vld [vmem:[%s3 + $0x30] sm:$0xff]
        %v2059 = vld [vmem:[%s3 + $0x38] sm:$0xff]
        %v2060 = vld [vmem:[%s3 + $0x40] sm:$0xff]
        %v2061 = vld [vmem:[%s3 + $0x48] sm:$0xff]
        %v2062 = vld [vmem:[%s3 + $0x50] sm:$0xff]
        %v2063 = vld [vmem:[%s3 + $0x58] sm:$0xff]
        %v2064 = vld [vmem:[%s3 + $0x60] sm:$0xff]
        %v2065 = vld [vmem:[%s3 + $0x68] sm:$0xff]
        %v2066 = vld [vmem:[%s3 + $0x70] sm:$0xff]
        %v2067 = vld [vmem:[%s3 + $0x78] sm:$0xff]
        %v2068 = vld [vmem:[%s3 + $0x80] sm:$0xff]
        %v2069 = vld [vmem:[%s3 + $0x88] sm:$0xff]
        %v2070 = vld [vmem:[%s3 + $0x90] sm:$0xff]
        %v2071 = vld [vmem:[%s3 + $0x98] sm:$0xff]
        %v2072 = vld [vmem:[%s3 + $0xa0] sm:$0xff]
        %v2073 = vld [vmem:[%s3 + $0xa8] sm:$0xff]
        %v2074 = vld [vmem:[%s3 + $0xb0] sm:$0xff]
        %v2075 = vld [vmem:[%s3 + $0xb8] sm:$0xff]
        %v2076 = vld [vmem:[%s3 + $0xc0] sm:$0xff]
        %v2077 = vld [vmem:[%s3 + $0xc8] sm:$0xff]
        %v2078 = vld [vmem:[%s3 + $0xd0] sm:$0xff]
        %v2079 = vld [vmem:[%s3 + $0xd8] sm:$0xff]
        %v2080 = vld [vmem:[%s3 + $0xe0] sm:$0xff]
        %v2081 = vld [vmem:[%s3 + $0xe8] sm:$0xff]
        %v2082 = vld [vmem:[%s3 + $0xf0] sm:$0xff]
        %v2083 = vld [vmem:[%s3 + $0xf8] sm:$0xff]
        %v2116 = vunpack.c.l.b16 %v2052
        %v2117 = vunpack.c.h.b16 %v2052
        %v2118 = vunpack.c.l.b16 %v2053
        %v2119 = vunpack.c.h.b16 %v2053
        %v2120 = vunpack.c.l.b16 %v2054
        %v2121 = vunpack.c.h.b16 %v2054
        %v2122 = vunpack.c.l.b16 %v2055
        %v2123 = vunpack.c.h.b16 %v2055
        %v2124 = vunpack.c.l.b16 %v2056
        %v2125 = vunpack.c.h.b16 %v2056
        %v2126 = vunpack.c.l.b16 %v2057
        %v2127 = vunpack.c.h.b16 %v2057
        %v2128 = vunpack.c.l.b16 %v2058
        %v2129 = vunpack.c.h.b16 %v2058
        %v2130 = vunpack.c.l.b16 %v2059
        %v2131 = vunpack.c.h.b16 %v2059
        %v2132 = vunpack.c.l.b16 %v2060
        %v2133 = vunpack.c.h.b16 %v2060
        %v2134 = vunpack.c.l.b16 %v2061
        %v2135 = vunpack.c.h.b16 %v2061
        %v2136 = vunpack.c.l.b16 %v2062
        %v2137 = vunpack.c.h.b16 %v2062
        %v2138 = vunpack.c.l.b16 %v2063
        %v2139 = vunpack.c.h.b16 %v2063
        %v2140 = vunpack.c.l.b16 %v2064
        %v2141 = vunpack.c.h.b16 %v2064
        %v2142 = vunpack.c.l.b16 %v2065
        %v2143 = vunpack.c.h.b16 %v2065
        %v2144 = vunpack.c.l.b16 %v2066
        %v2145 = vunpack.c.h.b16 %v2066
        %v2146 = vunpack.c.l.b16 %v2067
        %v2147 = vunpack.c.h.b16 %v2067
        %v2148 = vunpack.c.l.b16 %v2068
        %v2149 = vunpack.c.h.b16 %v2068
        %v2150 = vunpack.c.l.b16 %v2069
        %v2151 = vunpack.c.h.b16 %v2069
        %v2152 = vunpack.c.l.b16 %v2070
        %v2153 = vunpack.c.h.b16 %v2070
        %v2154 = vunpack.c.l.b16 %v2071
        %v2155 = vunpack.c.h.b16 %v2071
        %v2156 = vunpack.c.l.b16 %v2072
        %v2157 = vunpack.c.h.b16 %v2072
        %v2158 = vunpack.c.l.b16 %v2073
        %v2159 = vunpack.c.h.b16 %v2073
        %v2160 = vunpack.c.l.b16 %v2074
        %v2161 = vunpack.c.h.b16 %v2074
        %v2162 = vunpack.c.l.b16 %v2075
        %v2163 = vunpack.c.h.b16 %v2075
        %v2164 = vunpack.c.l.b16 %v2076
        %v2165 = vunpack.c.h.b16 %v2076
        %v2166 = vunpack.c.l.b16 %v2077
        %v2167 = vunpack.c.h.b16 %v2077
        %v2168 = vunpack.c.l.b16 %v2078
        %v2169 = vunpack.c.h.b16 %v2078
        %v2170 = vunpack.c.l.b16 %v2079
        %v2171 = vunpack.c.h.b16 %v2079
        %v2172 = vunpack.c.l.b16 %v2080
        %v2173 = vunpack.c.h.b16 %v2080
        %v2174 = vunpack.c.l.b16 %v2081
        %v2175 = vunpack.c.h.b16 %v2081
        %v2176 = vunpack.c.l.b16 %v2082
        %v2177 = vunpack.c.h.b16 %v2082
        %v2178 = vunpack.c.l.b16 %v2083
        %v2179 = vunpack.c.h.b16 %v2083
        %v2180 = vpack.c.b16 %v2118, %v2116
        %v2181 = vpack.c.b16 %v2119, %v2117
        %v2182 = vpack.c.b16 %v2122, %v2120
        %v2183 = vpack.c.b16 %v2123, %v2121
        %v2184 = vpack.c.b16 %v2126, %v2124
        %v2185 = vpack.c.b16 %v2127, %v2125
        %v2186 = vpack.c.b16 %v2130, %v2128
        %v2187 = vpack.c.b16 %v2131, %v2129
        %v2188 = vpack.c.b16 %v2134, %v2132
        %v2189 = vpack.c.b16 %v2135, %v2133
        %v2190 = vpack.c.b16 %v2138, %v2136
        %v2191 = vpack.c.b16 %v2139, %v2137
        %v2192 = vpack.c.b16 %v2142, %v2140
        %v2193 = vpack.c.b16 %v2143, %v2141
        %v2194 = vpack.c.b16 %v2146, %v2144
        %v2195 = vpack.c.b16 %v2147, %v2145
        %v2196 = vpack.c.b16 %v2150, %v2148
        %v2197 = vpack.c.b16 %v2151, %v2149
        %v2198 = vpack.c.b16 %v2154, %v2152
        %v2199 = vpack.c.b16 %v2155, %v2153
        %v2200 = vpack.c.b16 %v2158, %v2156
        %v2201 = vpack.c.b16 %v2159, %v2157
        %v2202 = vpack.c.b16 %v2162, %v2160
        %v2203 = vpack.c.b16 %v2163, %v2161
        %v2204 = vpack.c.b16 %v2166, %v2164
        %v2205 = vpack.c.b16 %v2167, %v2165
        %v2206 = vpack.c.b16 %v2170, %v2168
        %v2207 = vpack.c.b16 %v2171, %v2169
        %v2208 = vpack.c.b16 %v2174, %v2172
        %v2209 = vpack.c.b16 %v2175, %v2173
        %v2210 = vpack.c.b16 %v2178, %v2176
        %v2211 = vpack.c.b16 %v2179, %v2177
        %2244 = vmatpush.bf16.msra.mxu0 %v2194
        %2245 = vmatpush.bf16.msra.mxu0 %v2192
        %2246 = vmatpush.bf16.msra.mxu0 %v2190
        %2247 = vmatpush.bf16.msra.mxu0 %v2188
        %2248 = vmatpush.bf16.msra.mxu0 %v2186
        %2249 = vmatpush.bf16.msra.mxu0 %v2184
        %2250 = vmatpush.bf16.msra.mxu0 %v2182
        %2251 = vmatpush.bf16.msra.mxu0 %v2180
        %2252 = vmatmul.bf16.gmra.mxu0 %v2036
        %v2253 = vpop.f32.mrf.mxu0
        %v2254 = vadd.f32 0.0, %v2253
        %v2255 = vpop.f32.mrf.mxu0
        %v2256 = vadd.f32 0.0, %v2255
        %2257 = vmatmul.bf16.gmra.mxu0 %v2038
        %v2258 = vpop.f32.mrf.mxu0
        %v2259 = vadd.f32 0.0, %v2258
        %v2260 = vpop.f32.mrf.mxu0
        %v2261 = vadd.f32 0.0, %v2260
        %2262 = vmatmul.bf16.gmra.mxu0 %v2040
        %v2263 = vpop.f32.mrf.mxu0
        %v2264 = vadd.f32 0.0, %v2263
        %v2265 = vpop.f32.mrf.mxu0
        %v2266 = vadd.f32 0.0, %v2265
        %2267 = vmatmul.bf16.gmra.mxu0 %v2042
        %v2268 = vpop.f32.mrf.mxu0
        %v2269 = vadd.f32 0.0, %v2268
        %v2270 = vpop.f32.mrf.mxu0
        %v2271 = vadd.f32 0.0, %v2270
        %2272 = vmatmul.bf16.gmra.mxu0 %v2044
        %v2273 = vpop.f32.mrf.mxu0
        %v2274 = vadd.f32 0.0, %v2273
        %v2275 = vpop.f32.mrf.mxu0
        %v2276 = vadd.f32 0.0, %v2275
        %2277 = vmatmul.bf16.gmra.mxu0 %v2046
        %v2278 = vpop.f32.mrf.mxu0
        %v2279 = vadd.f32 0.0, %v2278
        %v2280 = vpop.f32.mrf.mxu0
        %v2281 = vadd.f32 0.0, %v2280
        %2282 = vmatmul.bf16.gmra.mxu0 %v2048
        %v2283 = vpop.f32.mrf.mxu0
        %v2284 = vadd.f32 0.0, %v2283
        %v2285 = vpop.f32.mrf.mxu0
        %v2286 = vadd.f32 0.0, %v2285
        %2287 = vmatmul.bf16.gmra.mxu0 %v2050
        %v2288 = vpop.f32.mrf.mxu0
        %v2289 = vadd.f32 0.0, %v2288
        %v2290 = vpop.f32.mrf.mxu0
        %v2291 = vadd.f32 0.0, %v2290
        %2292 = vdwg.mxu0
        %2293 = vmatpush.bf16.msra.mxu0 %v2210
        %2294 = vmatpush.bf16.msra.mxu0 %v2208
        %2295 = vmatpush.bf16.msra.mxu0 %v2206
        %2296 = vmatpush.bf16.msra.mxu0 %v2204
        %2297 = vmatpush.bf16.msra.mxu0 %v2202
        %2298 = vmatpush.bf16.msra.mxu0 %v2200
        %2299 = vmatpush.bf16.msra.mxu0 %v2198
        %2300 = vmatpush.bf16.msra.mxu0 %v2196
        %2301 = vmatmul.bf16.gmra.mxu0 %v2037
        %v2302 = vpop.f32.mrf.mxu0
        %v2303 = vadd.f32 %v2254, %v2302
        %v2304 = vpop.f32.mrf.mxu0
        %v2305 = vadd.f32 %v2256, %v2304
        %2306 = vmatmul.bf16.gmra.mxu0 %v2039
        %v2307 = vpop.f32.mrf.mxu0
        %v2308 = vadd.f32 %v2259, %v2307
        %v2309 = vpop.f32.mrf.mxu0
        %v2310 = vadd.f32 %v2261, %v2309
        %2311 = vmatmul.bf16.gmra.mxu0 %v2041
        %v2312 = vpop.f32.mrf.mxu0
        %v2313 = vadd.f32 %v2264, %v2312
        %v2314 = vpop.f32.mrf.mxu0
        %v2315 = vadd.f32 %v2266, %v2314
        %2316 = vmatmul.bf16.gmra.mxu0 %v2043
        %v2317 = vpop.f32.mrf.mxu0
        %v2318 = vadd.f32 %v2269, %v2317
        %v2319 = vpop.f32.mrf.mxu0
        %v2320 = vadd.f32 %v2271, %v2319
        %2321 = vmatmul.bf16.gmra.mxu0 %v2045
        %v2322 = vpop.f32.mrf.mxu0
        %v2323 = vadd.f32 %v2274, %v2322
        %v2324 = vpop.f32.mrf.mxu0
        %v2325 = vadd.f32 %v2276, %v2324
        %2326 = vmatmul.bf16.gmra.mxu0 %v2047
        %v2327 = vpop.f32.mrf.mxu0
        %v2328 = vadd.f32 %v2279, %v2327
        %v2329 = vpop.f32.mrf.mxu0
        %v2330 = vadd.f32 %v2281, %v2329
        %2331 = vmatmul.bf16.gmra.mxu0 %v2049
        %v2332 = vpop.f32.mrf.mxu0
        %v2333 = vadd.f32 %v2284, %v2332
        %v2334 = vpop.f32.mrf.mxu0
        %v2335 = vadd.f32 %v2286, %v2334
        %2336 = vmatmul.bf16.gmra.mxu0 %v2051
        %v2337 = vpop.f32.mrf.mxu0
        %v2338 = vadd.f32 %v2289, %v2337
        %v2339 = vpop.f32.mrf.mxu0
        %v2340 = vadd.f32 %v2291, %v2339
        %2341 = vdwg.mxu0
        %2342 = vmatpush.bf16.msra.mxu0 %v2195
        %2343 = vmatpush.bf16.msra.mxu0 %v2193
        %2344 = vmatpush.bf16.msra.mxu0 %v2191
        %2345 = vmatpush.bf16.msra.mxu0 %v2189
        %2346 = vmatpush.bf16.msra.mxu0 %v2187
        %2347 = vmatpush.bf16.msra.mxu0 %v2185
        %2348 = vmatpush.bf16.msra.mxu0 %v2183
        %2349 = vmatpush.bf16.msra.mxu0 %v2181
        %2350 = vmatmul.bf16.gmra.mxu0 %v2036
        %v2351 = vpop.f32.mrf.mxu0
        %v2352 = vadd.f32 0.0, %v2351
        %v2353 = vpop.f32.mrf.mxu0
        %v2354 = vadd.f32 0.0, %v2353
        %2355 = vmatmul.bf16.gmra.mxu0 %v2038
        %v2356 = vpop.f32.mrf.mxu0
        %v2357 = vadd.f32 0.0, %v2356
        %v2358 = vpop.f32.mrf.mxu0
        %v2359 = vadd.f32 0.0, %v2358
        %2360 = vmatmul.bf16.gmra.mxu0 %v2040
        %v2361 = vpop.f32.mrf.mxu0
        %v2362 = vadd.f32 0.0, %v2361
        %v2363 = vpop.f32.mrf.mxu0
        %v2364 = vadd.f32 0.0, %v2363
        %2365 = vmatmul.bf16.gmra.mxu0 %v2042
        %v2366 = vpop.f32.mrf.mxu0
        %v2367 = vadd.f32 0.0, %v2366
        %v2368 = vpop.f32.mrf.mxu0
        %v2369 = vadd.f32 0.0, %v2368
        %2370 = vmatmul.bf16.gmra.mxu0 %v2044
        %v2371 = vpop.f32.mrf.mxu0
        %v2372 = vadd.f32 0.0, %v2371
        %v2373 = vpop.f32.mrf.mxu0
        %v2374 = vadd.f32 0.0, %v2373
        %2375 = vmatmul.bf16.gmra.mxu0 %v2046
        %v2376 = vpop.f32.mrf.mxu0
        %v2377 = vadd.f32 0.0, %v2376
        %v2378 = vpop.f32.mrf.mxu0
        %v2379 = vadd.f32 0.0, %v2378
        %2380 = vmatmul.bf16.gmra.mxu0 %v2048
        %v2381 = vpop.f32.mrf.mxu0
        %v2382 = vadd.f32 0.0, %v2381
        %v2383 = vpop.f32.mrf.mxu0
        %v2384 = vadd.f32 0.0, %v2383
        %2385 = vmatmul.bf16.gmra.mxu0 %v2050
        %v2386 = vpop.f32.mrf.mxu0
        %v2387 = vadd.f32 0.0, %v2386
        %v2388 = vpop.f32.mrf.mxu0
        %v2389 = vadd.f32 0.0, %v2388
        %2390 = vdwg.mxu0
        %2391 = vmatpush.bf16.msra.mxu0 %v2211
        %2392 = vmatpush.bf16.msra.mxu0 %v2209
        %2393 = vmatpush.bf16.msra.mxu0 %v2207
        %2394 = vmatpush.bf16.msra.mxu0 %v2205
        %2395 = vmatpush.bf16.msra.mxu0 %v2203
        %2396 = vmatpush.bf16.msra.mxu0 %v2201
        %2397 = vmatpush.bf16.msra.mxu0 %v2199
        %2398 = vmatpush.bf16.msra.mxu0 %v2197
        %2399 = vmatmul.bf16.gmra.mxu0 %v2037
        %v2400 = vpop.f32.mrf.mxu0
        %v2401 = vadd.f32 %v2352, %v2400
        %v2402 = vpop.f32.mrf.mxu0
        %v2403 = vadd.f32 %v2354, %v2402
        %2404 = vmatmul.bf16.gmra.mxu0 %v2039
        %v2405 = vpop.f32.mrf.mxu0
        %v2406 = vadd.f32 %v2357, %v2405
        %v2407 = vpop.f32.mrf.mxu0
        %v2408 = vadd.f32 %v2359, %v2407
        %2409 = vmatmul.bf16.gmra.mxu0 %v2041
        %v2410 = vpop.f32.mrf.mxu0
        %v2411 = vadd.f32 %v2362, %v2410
        %v2412 = vpop.f32.mrf.mxu0
        %v2413 = vadd.f32 %v2364, %v2412
        %2414 = vmatmul.bf16.gmra.mxu0 %v2043
        %v2415 = vpop.f32.mrf.mxu0
        %v2416 = vadd.f32 %v2367, %v2415
        %v2417 = vpop.f32.mrf.mxu0
        %v2418 = vadd.f32 %v2369, %v2417
        %2419 = vmatmul.bf16.gmra.mxu0 %v2045
        %v2420 = vpop.f32.mrf.mxu0
        %v2421 = vadd.f32 %v2372, %v2420
        %v2422 = vpop.f32.mrf.mxu0
        %v2423 = vadd.f32 %v2374, %v2422
        %2424 = vmatmul.bf16.gmra.mxu0 %v2047
        %v2425 = vpop.f32.mrf.mxu0
        %v2426 = vadd.f32 %v2377, %v2425
        %v2427 = vpop.f32.mrf.mxu0
        %v2428 = vadd.f32 %v2379, %v2427
        %2429 = vmatmul.bf16.gmra.mxu0 %v2049
        %v2430 = vpop.f32.mrf.mxu0
        %v2431 = vadd.f32 %v2382, %v2430
        %v2432 = vpop.f32.mrf.mxu0
        %v2433 = vadd.f32 %v2384, %v2432
        %2434 = vmatmul.bf16.gmra.mxu0 %v2051
        %v2435 = vpop.f32.mrf.mxu0
        %v2436 = vadd.f32 %v2387, %v2435
        %v2437 = vpop.f32.mrf.mxu0
        %v2438 = vadd.f32 %v2389, %v2437
        %2439 = vdwg.mxu0
        %2440 = vst [vmem:[%s193] sm:$0xff] %v2303
        %2441 = vst [vmem:[%s193 + $0x8] sm:$0xff] %v2401
        %2442 = vst [vmem:[%s193 + $0x10] sm:$0xff] %v2305
        %2443 = vst [vmem:[%s193 + $0x18] sm:$0xff] %v2403
        %2444 = vst [vmem:[%s193 + $0x20] sm:$0xff] %v2308
        %2445 = vst [vmem:[%s193 + $0x28] sm:$0xff] %v2406
        %2446 = vst [vmem:[%s193 + $0x30] sm:$0xff] %v2310
        %2447 = vst [vmem:[%s193 + $0x38] sm:$0xff] %v2408
        %2448 = vst [vmem:[%s193 + $0x40] sm:$0xff] %v2313
        %2449 = vst [vmem:[%s193 + $0x48] sm:$0xff] %v2411
        %2450 = vst [vmem:[%s193 + $0x50] sm:$0xff] %v2315
        %2451 = vst [vmem:[%s193 + $0x58] sm:$0xff] %v2413
        %2452 = vst [vmem:[%s193 + $0x60] sm:$0xff] %v2318
        %2453 = vst [vmem:[%s193 + $0x68] sm:$0xff] %v2416
        %2454 = vst [vmem:[%s193 + $0x70] sm:$0xff] %v2320
        %2455 = vst [vmem:[%s193 + $0x78] sm:$0xff] %v2418
        %2456 = vst [vmem:[%s193 + $0x80] sm:$0xff] %v2323
        %2457 = vst [vmem:[%s193 + $0x88] sm:$0xff] %v2421
        %2458 = vst [vmem:[%s193 + $0x90] sm:$0xff] %v2325
        %2459 = vst [vmem:[%s193 + $0x98] sm:$0xff] %v2423
        %2460 = vst [vmem:[%s193 + $0xa0] sm:$0xff] %v2328
        %2461 = vst [vmem:[%s193 + $0xa8] sm:$0xff] %v2426
        %2462 = vst [vmem:[%s193 + $0xb0] sm:$0xff] %v2330
        %2463 = vst [vmem:[%s193 + $0xb8] sm:$0xff] %v2428
        %2464 = vst [vmem:[%s193 + $0xc0] sm:$0xff] %v2333
        %2465 = vst [vmem:[%s193 + $0xc8] sm:$0xff] %v2431
        %2466 = vst [vmem:[%s193 + $0xd0] sm:$0xff] %v2335
        %2467 = vst [vmem:[%s193 + $0xd8] sm:$0xff] %v2433
        %2468 = vst [vmem:[%s193 + $0xe0] sm:$0xff] %v2338
        %2469 = vst [vmem:[%s193 + $0xe8] sm:$0xff] %v2436
        %2470 = vst [vmem:[%s193 + $0xf0] sm:$0xff] %v2340
        %2471 = vst [vmem:[%s193 + $0xf8] sm:$0xff] %v2438
        %s2472 = sand.u32 %s115, 1
        %s2473 = scalar_lea.sflag [#allocation3], %s2472
        %s2474 = sand.u32 %s115, 1
        %s2475 = smul.addr %s2474, 256
        %s2476 = scalar_lea.vmem [#allocation2], %s2475
        // Predicated region
        $region37: #{olmoe_attention.3} parent=35 // pred_check
          %p2477 = pneg %p125
        $region38: #{olmoe_attention.3} parent=35 // pred_check_branch
          %2479 = sbr.rel (%p2477) target = $region40
        $region39: #{olmoe_attention.3} parent=35 // pred_region
          %s2480 = smul.u32 16, %s18
          %2482 = vsyncadd %s2473, 0
          %s2483 = smul.addr %s2480, 2
          %s2484 = smul.addr %s2483, 8
          %s2485 = scalar_lea.hbm %s4, %s2484
          %s2486 = sshll.u32 %s2476, 4
          %s2487 = int_to_ptr.vmem [resolvable:$true] %s2486
          %s2488 = sshll.u32 %s2485, 4
          %s2489 = int_to_ptr.hbm [resolvable:$true] %s2488
          %2494 = dma.vmem_to_hbm [thread:$0]  %s2487, 4096, %s2489, %s2473, 256, 256, 16
        $region40: #{olmoe_attention.3} parent=35 // pred_fallthru
          _
      $region36: #{olmoe_attention.3} parent=5 // pred_fallthru
        _
      %p2495 = scmp.le.s32.totalorder 2, %s13
      // Predicated region
      $region41: #{olmoe_attention.3} parent=5 // pred_check
        %p2496 = pneg %p2495
      $region42: #{olmoe_attention.3} parent=5 // pred_check_branch
        %2498 = sbr.rel (%p2496) target = $region44
      $region43: #{olmoe_attention.3} parent=5 // pred_region
        %s2499 = ssub.s32 %s13, 2
        // Predicated region
        $region45: #{olmoe_attention.3} parent=43 // pred_check
          %p2500 = pneg %p131
        $region46: #{olmoe_attention.3} parent=43 // pred_check_branch
          %2502 = sbr.rel (%p2500) target = $region48
        $region47: #{olmoe_attention.3} parent=43 // pred_region
          %s2503 = sand.u32 %s116, 1
          %s2504 = scalar_lea.sflag [#allocation3], %s2503
          %s2505 = sand.u32 %s116, 1
          %s2506 = smul.addr %s2505, 256
          %s2507 = scalar_lea.vmem [#allocation2], %s2506
          %2509 = dma.done %s2504, 4096
        $region48: #{olmoe_attention.3} parent=43 // pred_fallthru
          _
      $region44: #{olmoe_attention.3} parent=5 // pred_fallthru
        _
    $region6: #{olmoe_attention.3} parent=1 // loop_footer
      %s17 = sadd.s32 1, %s13
    $region7: #{olmoe_attention.3} parent=1 // loop_footer_branch
      %12 = sbr.rel target = $region3
    $region8: #{olmoe_attention.3} parent=1 // loop_exit
      _
    %2510 = vsyncpa [#allocation3], 1
    %s2511 = scalar_lea.sflag [#allocation3], 1
    %2512 = vsyncpa %s2511, 1

// kernel: olmoe_attention.2
$region0: #{olmoe_attention.2}
  #allocation0 [shape = 'u32[]', space=smem, size = 0x4, offset = 0x4, fixed_abs, tag = 'smem constant byte address 0x4 - core index']
  #allocation1 [shape = 'u32[72,128]{1,0:T(1,128)}', space=vmem, size = 0x9000, scoped, tag = 'internal scratch']
  %s0 = inlined_call_operand.vmem [shape: f32[256,256], index: 0, kind: input, shape index: {}]
  %s1 = inlined_call_operand.vmem [shape: bf16[256,512], index: 1, kind: input, shape index: {}]
  %s2 = inlined_call_operand.vmem [shape: f32[1,256], index: 2, kind: input, shape index: {}]
  %s3 = inlined_call_operand.vmem [shape: f32[1,128], index: 3, kind: input, shape index: {}]
  %s4 = inlined_call_operand.vmem [shape: f32[256,128], index: 4, kind: input, shape index: {}]
  %s5 = inlined_call_operand.vmem [shape: f32[256,128], index: 5, kind: input, shape index: {}]
  %s6 = inlined_call_operand.vmem [shape: f32[128,128], index: 6, kind: input, shape index: {}]
  %s7 = inlined_call_operand.vmem [shape: bf16[256,256], index: 7, kind: output, shape index: {0}]
  %s8 = inlined_call_operand.vmem [shape: bf16[256,128], index: 8, kind: output, shape index: {1}]
  %s9 = inlined_call_operand.vmem [shape: bf16[256,128], index: 9, kind: output, shape index: {2}]
  %10 = xla_tuple %s7, %s8, %s9
  %s11 = sld [smem:[#allocation0]]
  $region77: #{olmoe_attention.2} parent=0
    _
  %s13 = ssub.s32 1, %s11
  %s14 = scalar_select 0, %s13, %s11
  loop: start=0, step=1, limit=4
  $region2: #{olmoe_attention.2} parent=0 // loop_pre_header
    _
  $region3: #{olmoe_attention.2} parent=0 // loop_header
    %s16 = sphi 0, %s20
    %p17 = scmp.ge.s32.totalorder %s16, 4
    %s26 = sphi 0, %s28
    %s29 = sphi 0, %s26
    %s30 = sphi 0, %s29
    %s46 = sphi 0, %s30
    %s50 = sphi 0, %s50
    %s52 = sphi 0, %s50
    %s53 = sphi 0, %s52
    %s67 = sphi 0, %s53
    %s71 = sphi 0, %s71
    %s73 = sphi 0, %s71
    %s74 = sphi 0, %s73
    %s88 = sphi 0, %s74
    %s92 = sphi 0, %s92
    %s94 = sphi 0, %s92
    %s95 = sphi 0, %s94
    %s109 = sphi 0, %s95
    %s115 = sphi 0, %s117
    %s118 = sphi 0, %s115
    %s119 = sphi 0, %s118
    %s135 = sphi 0, %s119
    %s141 = sphi 0, %s143
    %s144 = sphi 0, %s141
    %s145 = sphi 0, %s144
    %s161 = sphi 0, %s145
    %s165 = sphi 0, %s165
    %s167 = sphi 0, %s165
    %s168 = sphi 0, %s167
    %s182 = sphi 0, %s168
    %s188 = sphi 0, %s190
    %s191 = sphi 0, %s188
    %s192 = sphi 0, %s191
    %s208 = sphi 0, %s192
    %s214 = sphi 0, %s216
    %s217 = sphi 0, %s214
    %s218 = sphi 0, %s217
    %s234 = sphi 0, %s218
    %s240 = sphi 0, %s242
    %s243 = sphi 0, %s240
    %s244 = sphi 0, %s243
    %s260 = sphi 0, %s244
  $region4: #{olmoe_attention.2} parent=0 // loop_header_branch
    %19 = sbr.rel (%p17) target = $region8
  $region5: #{olmoe_attention.2} parent=0 // loop_body
    %s21 = ssub.s32 %s16, 1
    %s22 = ssub.s32 %s16, 2
    %s23 = sadd.s32 %s16, 1
    %s24 = ssub.s32 %s16, %s23
    %p25 = scmp.eq.s32.totalorder %s24, 0
    %s27 = sadd.s32 %s26, 1
    %s28 = scalar_select %p25, %s26, %s27
    %p31 = pneg %p25
    %p32 = scmp.eq.s32.totalorder %s16, 1
    %p33 = por %p31, %p32
    %p34 = scmp.ne.s32.totalorder %s26, %s29
    %p35 = scmp.eq.s32.totalorder %s16, 0
    %p36 = por %p34, %p35
    %p37 = scmp.ne.s32.totalorder %s26, %s29
    %p38 = scmp.eq.s32.totalorder %s21, 1
    %p39 = por %p37, %p38
    %p40 = scmp.ne.s32.totalorder %s29, %s30
    %p41 = scmp.eq.s32.totalorder %s21, 0
    %p42 = por %p40, %p41
    %p43 = scmp.ne.s32.totalorder %s29, %s30
    %p44 = scmp.eq.s32.totalorder %s22, 1
    %p45 = por %p43, %p44
    %p47 = scmp.ne.s32.totalorder %s30, %s46
    %p48 = scmp.eq.s32.totalorder %s22, 0
    %p49 = por %p47, %p48
    %s51 = sadd.s32 %s50, 1
    %p54 = scmp.eq.s32.totalorder %s16, 1
    %p55 = scmp.ne.s32.totalorder %s50, %s52
    %p56 = scmp.eq.s32.totalorder %s16, 0
    %p57 = por %p55, %p56
    %p58 = scmp.ne.s32.totalorder %s50, %s52
    %p59 = scmp.eq.s32.totalorder %s21, 1
    %p60 = por %p58, %p59
    %p61 = scmp.ne.s32.totalorder %s52, %s53
    %p62 = scmp.eq.s32.totalorder %s21, 0
    %p63 = por %p61, %p62
    %p64 = scmp.ne.s32.totalorder %s52, %s53
    %p65 = scmp.eq.s32.totalorder %s22, 1
    %p66 = por %p64, %p65
    %p68 = scmp.ne.s32.totalorder %s53, %s67
    %p69 = scmp.eq.s32.totalorder %s22, 0
    %p70 = por %p68, %p69
    %s72 = sadd.s32 %s71, 1
    %p75 = scmp.eq.s32.totalorder %s16, 1
    %p76 = scmp.ne.s32.totalorder %s71, %s73
    %p77 = scmp.eq.s32.totalorder %s16, 0
    %p78 = por %p76, %p77
    %p79 = scmp.ne.s32.totalorder %s71, %s73
    %p80 = scmp.eq.s32.totalorder %s21, 1
    %p81 = por %p79, %p80
    %p82 = scmp.ne.s32.totalorder %s73, %s74
    %p83 = scmp.eq.s32.totalorder %s21, 0
    %p84 = por %p82, %p83
    %p85 = scmp.ne.s32.totalorder %s73, %s74
    %p86 = scmp.eq.s32.totalorder %s22, 1
    %p87 = por %p85, %p86
    %p89 = scmp.ne.s32.totalorder %s74, %s88
    %p90 = scmp.eq.s32.totalorder %s22, 0
    %p91 = por %p89, %p90
    %s93 = sadd.s32 %s92, 1
    %p96 = scmp.eq.s32.totalorder %s16, 1
    %p97 = scmp.ne.s32.totalorder %s92, %s94
    %p98 = scmp.eq.s32.totalorder %s16, 0
    %p99 = por %p97, %p98
    %p100 = scmp.ne.s32.totalorder %s92, %s94
    %p101 = scmp.eq.s32.totalorder %s21, 1
    %p102 = por %p100, %p101
    %p103 = scmp.ne.s32.totalorder %s94, %s95
    %p104 = scmp.eq.s32.totalorder %s21, 0
    %p105 = por %p103, %p104
    %p106 = scmp.ne.s32.totalorder %s94, %s95
    %p107 = scmp.eq.s32.totalorder %s22, 1
    %p108 = por %p106, %p107
    %p110 = scmp.ne.s32.totalorder %s95, %s109
    %p111 = scmp.eq.s32.totalorder %s22, 0
    %p112 = por %p110, %p111
    %s113 = ssub.s32 %s16, %s23
    %p114 = scmp.eq.s32.totalorder %s113, 0
    %s116 = sadd.s32 %s115, 1
    %s117 = scalar_select %p114, %s115, %s116
    %p120 = pneg %p114
    %p121 = scmp.eq.s32.totalorder %s16, 1
    %p122 = por %p120, %p121
    %p123 = scmp.ne.s32.totalorder %s115, %s118
    %p124 = scmp.eq.s32.totalorder %s16, 0
    %p125 = por %p123, %p124
    %p126 = scmp.ne.s32.totalorder %s115, %s118
    %p127 = scmp.eq.s32.totalorder %s21, 1
    %p128 = por %p126, %p127
    %p129 = scmp.ne.s32.totalorder %s118, %s119
    %p130 = scmp.eq.s32.totalorder %s21, 0
    %p131 = por %p129, %p130
    %p132 = scmp.ne.s32.totalorder %s118, %s119
    %p133 = scmp.eq.s32.totalorder %s22, 1
    %p134 = por %p132, %p133
    %p136 = scmp.ne.s32.totalorder %s119, %s135
    %p137 = scmp.eq.s32.totalorder %s22, 0
    %p138 = por %p136, %p137
    %s139 = ssub.s32 %s16, %s23
    %p140 = scmp.eq.s32.totalorder %s139, 0
    %s142 = sadd.s32 %s141, 1
    %s143 = scalar_select %p140, %s141, %s142
    %p146 = pneg %p140
    %p147 = scmp.eq.s32.totalorder %s16, 1
    %p148 = por %p146, %p147
    %p149 = scmp.ne.s32.totalorder %s141, %s144
    %p150 = scmp.eq.s32.totalorder %s16, 0
    %p151 = por %p149, %p150
    %p152 = scmp.ne.s32.totalorder %s141, %s144
    %p153 = scmp.eq.s32.totalorder %s21, 1
    %p154 = por %p152, %p153
    %p155 = scmp.ne.s32.totalorder %s144, %s145
    %p156 = scmp.eq.s32.totalorder %s21, 0
    %p157 = por %p155, %p156
    %p158 = scmp.ne.s32.totalorder %s144, %s145
    %p159 = scmp.eq.s32.totalorder %s22, 1
    %p160 = por %p158, %p159
    %p162 = scmp.ne.s32.totalorder %s145, %s161
    %p163 = scmp.eq.s32.totalorder %s22, 0
    %p164 = por %p162, %p163
    %s166 = sadd.s32 %s165, 1
    %p169 = scmp.eq.s32.totalorder %s16, 1
    %p170 = scmp.ne.s32.totalorder %s165, %s167
    %p171 = scmp.eq.s32.totalorder %s16, 0
    %p172 = por %p170, %p171
    %p173 = scmp.ne.s32.totalorder %s165, %s167
    %p174 = scmp.eq.s32.totalorder %s21, 1
    %p175 = por %p173, %p174
    %p176 = scmp.ne.s32.totalorder %s167, %s168
    %p177 = scmp.eq.s32.totalorder %s21, 0
    %p178 = por %p176, %p177
    %p179 = scmp.ne.s32.totalorder %s167, %s168
    %p180 = scmp.eq.s32.totalorder %s22, 1
    %p181 = por %p179, %p180
    %p183 = scmp.ne.s32.totalorder %s168, %s182
    %p184 = scmp.eq.s32.totalorder %s22, 0
    %p185 = por %p183, %p184
    %s186 = ssub.s32 %s16, %s23
    %p187 = scmp.eq.s32.totalorder %s186, 0
    %s189 = sadd.s32 %s188, 1
    %s190 = scalar_select %p187, %s188, %s189
    %p193 = pneg %p187
    %p194 = scmp.eq.s32.totalorder %s16, 1
    %p195 = por %p193, %p194
    %p196 = scmp.ne.s32.totalorder %s188, %s191
    %p197 = scmp.eq.s32.totalorder %s16, 0
    %p198 = por %p196, %p197
    %p199 = scmp.ne.s32.totalorder %s188, %s191
    %p200 = scmp.eq.s32.totalorder %s21, 1
    %p201 = por %p199, %p200
    %p202 = scmp.ne.s32.totalorder %s191, %s192
    %p203 = scmp.eq.s32.totalorder %s21, 0
    %p204 = por %p202, %p203
    %p205 = scmp.ne.s32.totalorder %s191, %s192
    %p206 = scmp.eq.s32.totalorder %s22, 1
    %p207 = por %p205, %p206
    %p209 = scmp.ne.s32.totalorder %s192, %s208
    %p210 = scmp.eq.s32.totalorder %s22, 0
    %p211 = por %p209, %p210
    %s212 = ssub.s32 %s16, %s23
    %p213 = scmp.eq.s32.totalorder %s212, 0
    %s215 = sadd.s32 %s214, 1
    %s216 = scalar_select %p213, %s214, %s215
    %p219 = pneg %p213
    %p220 = scmp.eq.s32.totalorder %s16, 1
    %p221 = por %p219, %p220
    %p222 = scmp.ne.s32.totalorder %s214, %s217
    %p223 = scmp.eq.s32.totalorder %s16, 0
    %p224 = por %p222, %p223
    %p225 = scmp.ne.s32.totalorder %s214, %s217
    %p226 = scmp.eq.s32.totalorder %s21, 1
    %p227 = por %p225, %p226
    %p228 = scmp.ne.s32.totalorder %s217, %s218
    %p229 = scmp.eq.s32.totalorder %s21, 0
    %p230 = por %p228, %p229
    %p231 = scmp.ne.s32.totalorder %s217, %s218
    %p232 = scmp.eq.s32.totalorder %s22, 1
    %p233 = por %p231, %p232
    %p235 = scmp.ne.s32.totalorder %s218, %s234
    %p236 = scmp.eq.s32.totalorder %s22, 0
    %p237 = por %p235, %p236
    %s238 = ssub.s32 %s16, %s23
    %p239 = scmp.eq.s32.totalorder %s238, 0
    %s241 = sadd.s32 %s240, 1
    %s242 = scalar_select %p239, %s240, %s241
    %p245 = pneg %p239
    %p246 = scmp.eq.s32.totalorder %s16, 1
    %p247 = por %p245, %p246
    %p248 = scmp.ne.s32.totalorder %s240, %s243
    %p249 = scmp.eq.s32.totalorder %s16, 0
    %p250 = por %p248, %p249
    %p251 = scmp.ne.s32.totalorder %s240, %s243
    %p252 = scmp.eq.s32.totalorder %s21, 1
    %p253 = por %p251, %p252
    %p254 = scmp.ne.s32.totalorder %s243, %s244
    %p255 = scmp.eq.s32.totalorder %s21, 0
    %p256 = por %p254, %p255
    %p257 = scmp.ne.s32.totalorder %s243, %s244
    %p258 = scmp.eq.s32.totalorder %s22, 1
    %p259 = por %p257, %p258
    %p261 = scmp.ne.s32.totalorder %s244, %s260
    %p262 = scmp.eq.s32.totalorder %s22, 0
    %p263 = por %p261, %p262
    %p264 = scmp.le.s32.totalorder 1, %s16
    %p265 = scmp.lt.s32.totalorder %s16, 3
    %p266 = pnand %p264, %p265
    %p267 = pneg %p266
    // Predicated region
    $region9: #{olmoe_attention.2} parent=5 // pred_check
      _
    $region10: #{olmoe_attention.2} parent=5 // pred_check_branch
      %269 = sbr.rel (%p266) target = $region12
    $region11: #{olmoe_attention.2} parent=5 // pred_region
      %s270 = ssub.s32 %s16, 1
      // Predicated region
      $region13: #{olmoe_attention.2} parent=11 // pred_check
        %p271 = pneg %p63
      $region14: #{olmoe_attention.2} parent=11 // pred_check_branch
        %273 = sbr.rel (%p271) target = $region16
      $region15: #{olmoe_attention.2} parent=11 // pred_region
        _
      $region16: #{olmoe_attention.2} parent=11 // pred_fallthru
        _
      // Predicated region
      $region17: #{olmoe_attention.2} parent=11 // pred_check
        %p274 = pneg %p84
      $region18: #{olmoe_attention.2} parent=11 // pred_check_branch
        %276 = sbr.rel (%p274) target = $region20
      $region19: #{olmoe_attention.2} parent=11 // pred_region
        _
      $region20: #{olmoe_attention.2} parent=11 // pred_fallthru
        _
      // Predicated region
      $region21: #{olmoe_attention.2} parent=11 // pred_check
        %p277 = pneg %p105
      $region22: #{olmoe_attention.2} parent=11 // pred_check_branch
        %279 = sbr.rel (%p277) target = $region24
      $region23: #{olmoe_attention.2} parent=11 // pred_region
        _
      $region24: #{olmoe_attention.2} parent=11 // pred_fallthru
        _
      // Predicated region
      $region25: #{olmoe_attention.2} parent=11 // pred_check
        %p280 = pneg %p178
      $region26: #{olmoe_attention.2} parent=11 // pred_check_branch
        %282 = sbr.rel (%p280) target = $region28
      $region27: #{olmoe_attention.2} parent=11 // pred_region
        _
      $region28: #{olmoe_attention.2} parent=11 // pred_fallthru
        _
    $region12: #{olmoe_attention.2} parent=5 // pred_fallthru
      _
    %p283 = scmp.lt.s32.totalorder %s16, 2
    // Predicated region
    $region29: #{olmoe_attention.2} parent=5 // pred_check
      %p284 = pneg %p283
    $region30: #{olmoe_attention.2} parent=5 // pred_check_branch
      %286 = sbr.rel (%p284) target = $region32
    $region31: #{olmoe_attention.2} parent=5 // pred_region
      // Predicated region
      $region33: #{olmoe_attention.2} parent=31 // pred_check
        %p287 = pneg %p36
      $region34: #{olmoe_attention.2} parent=31 // pred_check_branch
        %289 = sbr.rel (%p287) target = $region36
      $region35: #{olmoe_attention.2} parent=31 // pred_region
        %s290 = smul.u32 16, %s16
        %p291 = scmp.lt.s32.totalorder %s290, 31
        %s292 = scalar_select %p291, %s290, 31
        %s293 = smul.addr %s292, 2
        %s294 = smul.addr %s293, 8
        %s295 = scalar_lea.vmem %s0, %s294
        %s296 = smul.u32 16, %s16
      $region36: #{olmoe_attention.2} parent=31 // pred_fallthru
        _
      // Predicated region
      $region37: #{olmoe_attention.2} parent=31 // pred_check
        %p297 = pneg %p125
      $region38: #{olmoe_attention.2} parent=31 // pred_check_branch
        %299 = sbr.rel (%p297) target = $region40
      $region39: #{olmoe_attention.2} parent=31 // pred_region
        %s300 = smul.u32 16, %s16
        %p301 = scmp.lt.s32.totalorder %s300, 31
        %s302 = scalar_select %p301, %s300, 31
        %s303 = smul.addr %s302, 8
        %s304 = scalar_lea.vmem %s4, %s303
        %s305 = smul.u32 16, %s16
      $region40: #{olmoe_attention.2} parent=31 // pred_fallthru
        _
      // Predicated region
      $region41: #{olmoe_attention.2} parent=31 // pred_check
        %p306 = pneg %p151
      $region42: #{olmoe_attention.2} parent=31 // pred_check_branch
        %308 = sbr.rel (%p306) target = $region44
      $region43: #{olmoe_attention.2} parent=31 // pred_region
        %s309 = smul.u32 16, %s16
        %p310 = scmp.lt.s32.totalorder %s309, 31
        %s311 = scalar_select %p310, %s309, 31
        %s312 = smul.addr %s311, 8
        %s313 = scalar_lea.vmem %s5, %s312
        %s314 = smul.u32 16, %s16
      $region44: #{olmoe_attention.2} parent=31 // pred_fallthru
        _
    $region32: #{olmoe_attention.2} parent=5 // pred_fallthru
      _
    %p315 = scmp.le.s32.totalorder 1, %s16
    %p316 = scmp.lt.s32.totalorder %s16, 3
    %p317 = pnand %p315, %p316
    %p318 = pneg %p317
    // Predicated region
    $region45: #{olmoe_attention.2} parent=5 // pred_check
      _
    $region46: #{olmoe_attention.2} parent=5 // pred_check_branch
      %320 = sbr.rel (%p317) target = $region48
    $region47: #{olmoe_attention.2} parent=5 // pred_region
      %s321 = ssub.s32 %s16, 1
      %s322 = smul.u32 16, %s21
      %p323 = scmp.lt.s32.totalorder %s322, 31
      %s324 = scalar_select %p323, %s322, 31
      %s325 = smul.addr %s324, 2
      %s326 = smul.addr %s325, 8
      %s327 = scalar_lea.vmem %s0, %s326
      %p328 = pneg %p42
      %p329 = pneg %p39
      %p330 = pneg %p63
      %p331 = pneg %p60
      %p332 = pneg %p84
      %p333 = pneg %p81
      %p334 = pneg %p105
      %p335 = pneg %p102
      %s336 = smul.u32 16, %s21
      %p337 = scmp.lt.s32.totalorder %s336, 31
      %s338 = scalar_select %p337, %s336, 31
      %s339 = smul.addr %s338, 8
      %s340 = scalar_lea.vmem %s4, %s339
      %p341 = pneg %p131
      %p342 = pneg %p128
      %s343 = smul.u32 16, %s21
      %p344 = scmp.lt.s32.totalorder %s343, 31
      %s345 = scalar_select %p344, %s343, 31
      %s346 = smul.addr %s345, 8
      %s347 = scalar_lea.vmem %s5, %s346
      %p348 = pneg %p157
      %p349 = pneg %p154
      %p350 = pneg %p178
      %p351 = pneg %p175
      %p352 = pneg %p204
      %p353 = pneg %p201
      %s354 = smul.u32 16, %s21
      %p355 = scmp.lt.s32.totalorder %s354, 31
      %s356 = scalar_select %p355, %s354, 31
      %s357 = smul.addr %s356, 2
      %s358 = smul.addr %s357, 4
      %s359 = scalar_lea.vmem %s7, %s358
      %p360 = pneg %p230
      %p361 = pneg %p227
      %s362 = smul.u32 16, %s21
      %p363 = scmp.lt.s32.totalorder %s362, 31
      %s364 = scalar_select %p363, %s362, 31
      %s365 = smul.addr %s364, 4
      %s366 = scalar_lea.vmem %s8, %s365
      %p367 = pneg %p256
      %p368 = pneg %p253
      %s369 = smul.u32 16, %s21
      %p370 = scmp.lt.s32.totalorder %s369, 31
      %s371 = scalar_select %p370, %s369, 31
      %s372 = smul.addr %s371, 4
      %s373 = scalar_lea.vmem %s9, %s372
      %s374 = smul.u32 16, %s21
      %p375 = scmp.lt.s32.totalorder %s374, 31
      %s376 = scalar_select %p375, %s374, 31
      %s377 = smul.addr %s376, 2
      %s378 = smul.addr %s377, 8
      %s379 = scalar_lea.vmem %s0, %s378
      %s380 = smul.u32 16, %s21
      %s381 = smul.u32 16, %s21
      %p382 = scmp.lt.s32.totalorder %s381, 31
      %s383 = scalar_select %p382, %s381, 31
      %s384 = smul.addr %s383, 8
      %s385 = scalar_lea.vmem %s4, %s384
      %s386 = smul.u32 16, %s21
      %s387 = smul.u32 16, %s21
      %p388 = scmp.lt.s32.totalorder %s387, 31
      %s389 = scalar_select %p388, %s387, 31
      %s390 = smul.addr %s389, 8
      %s391 = scalar_lea.vmem %s5, %s390
      %s392 = smul.u32 16, %s21
      %s393 = smul.u32 16, %s21
      %p394 = scmp.lt.s32.totalorder %s393, 31
      %s395 = scalar_select %p394, %s393, 31
      %s396 = smul.addr %s395, 2
      %s397 = smul.addr %s396, 4
      %s398 = scalar_lea.vmem %s7, %s397
      %s399 = smul.u32 16, %s21
      %s400 = smul.u32 16, %s21
      %p401 = scmp.lt.s32.totalorder %s400, 31
      %s402 = scalar_select %p401, %s400, 31
      %s403 = smul.addr %s402, 4
      %s404 = scalar_lea.vmem %s8, %s403
      %s405 = smul.u32 16, %s21
      %s406 = smul.u32 16, %s21
      %p407 = scmp.lt.s32.totalorder %s406, 31
      %s408 = scalar_select %p407, %s406, 31
      %s409 = smul.addr %s408, 4
      %s410 = scalar_lea.vmem %s9, %s409
      %s411 = smul.u32 16, %s21
      %v412 = vld [vmem:[%s379] sm:$0xff]
      %v413 = vld [vmem:[%s379 + $0x8] sm:$0xff]
      %v414 = vld [vmem:[%s379 + $0x10] sm:$0xff]
      %v415 = vld [vmem:[%s379 + $0x18] sm:$0xff]
      %v416 = vld [vmem:[%s379 + $0x20] sm:$0xff]
      %v417 = vld [vmem:[%s379 + $0x28] sm:$0xff]
      %v418 = vld [vmem:[%s379 + $0x30] sm:$0xff]
      %v419 = vld [vmem:[%s379 + $0x38] sm:$0xff]
      %v420 = vld [vmem:[%s379 + $0x40] sm:$0xff]
      %v421 = vld [vmem:[%s379 + $0x48] sm:$0xff]
      %v422 = vld [vmem:[%s379 + $0x50] sm:$0xff]
      %v423 = vld [vmem:[%s379 + $0x58] sm:$0xff]
      %v424 = vld [vmem:[%s379 + $0x60] sm:$0xff]
      %v425 = vld [vmem:[%s379 + $0x68] sm:$0xff]
      %v426 = vld [vmem:[%s379 + $0x70] sm:$0xff]
      %v427 = vld [vmem:[%s379 + $0x78] sm:$0xff]
      %v428 = vld [vmem:[%s379 + $0x80] sm:$0xff]
      %v429 = vld [vmem:[%s379 + $0x88] sm:$0xff]
      %v430 = vld [vmem:[%s379 + $0x90] sm:$0xff]
      %v431 = vld [vmem:[%s379 + $0x98] sm:$0xff]
      %v432 = vld [vmem:[%s379 + $0xa0] sm:$0xff]
      %v433 = vld [vmem:[%s379 + $0xa8] sm:$0xff]
      %v434 = vld [vmem:[%s379 + $0xb0] sm:$0xff]
      %v435 = vld [vmem:[%s379 + $0xb8] sm:$0xff]
      %v436 = vld [vmem:[%s379 + $0xc0] sm:$0xff]
      %v437 = vld [vmem:[%s379 + $0xc8] sm:$0xff]
      %v438 = vld [vmem:[%s379 + $0xd0] sm:$0xff]
      %v439 = vld [vmem:[%s379 + $0xd8] sm:$0xff]
      %v440 = vld [vmem:[%s379 + $0xe0] sm:$0xff]
      %v441 = vld [vmem:[%s379 + $0xe8] sm:$0xff]
      %v442 = vld [vmem:[%s379 + $0xf0] sm:$0xff]
      %v443 = vld [vmem:[%s379 + $0xf8] sm:$0xff]
      %v444 = vpack.c.bf16 %v414, %v412
      %v445 = vpack.c.bf16 %v415, %v413
      %v446 = vpack.c.bf16 %v418, %v416
      %v447 = vpack.c.bf16 %v419, %v417
      %v448 = vpack.c.bf16 %v422, %v420
      %v449 = vpack.c.bf16 %v423, %v421
      %v450 = vpack.c.bf16 %v426, %v424
      %v451 = vpack.c.bf16 %v427, %v425
      %v452 = vpack.c.bf16 %v430, %v428
      %v453 = vpack.c.bf16 %v431, %v429
      %v454 = vpack.c.bf16 %v434, %v432
      %v455 = vpack.c.bf16 %v435, %v433
      %v456 = vpack.c.bf16 %v438, %v436
      %v457 = vpack.c.bf16 %v439, %v437
      %v458 = vpack.c.bf16 %v442, %v440
      %v459 = vpack.c.bf16 %v443, %v441
      %v460 = vld [vmem:[%s1] sm:$0xff]
      %v461 = vld [vmem:[%s1 + $0x8] sm:$0xff]
      %v462 = vld [vmem:[%s1 + $0x10] sm:$0xff]
      %v463 = vld [vmem:[%s1 + $0x18] sm:$0xff]
      %v464 = vld [vmem:[%s1 + $0x20] sm:$0xff]
      %v465 = vld [vmem:[%s1 + $0x28] sm:$0xff]
      %v466 = vld [vmem:[%s1 + $0x30] sm:$0xff]
      %v467 = vld [vmem:[%s1 + $0x38] sm:$0xff]
      %v468 = vld [vmem:[%s1 + $0x40] sm:$0xff]
      %v469 = vld [vmem:[%s1 + $0x48] sm:$0xff]
      %v470 = vld [vmem:[%s1 + $0x50] sm:$0xff]
      %v471 = vld [vmem:[%s1 + $0x58] sm:$0xff]
      %v472 = vld [vmem:[%s1 + $0x60] sm:$0xff]
      %v473 = vld [vmem:[%s1 + $0x68] sm:$0xff]
      %v474 = vld [vmem:[%s1 + $0x70] sm:$0xff]
      %v475 = vld [vmem:[%s1 + $0x78] sm:$0xff]
      %v476 = vld [vmem:[%s1 + $0x80] sm:$0xff]
      %v477 = vld [vmem:[%s1 + $0x88] sm:$0xff]
      %v478 = vld [vmem:[%s1 + $0x90] sm:$0xff]
      %v479 = vld [vmem:[%s1 + $0x98] sm:$0xff]
      %v480 = vld [vmem:[%s1 + $0xa0] sm:$0xff]
      %v481 = vld [vmem:[%s1 + $0xa8] sm:$0xff]
      %v482 = vld [vmem:[%s1 + $0xb0] sm:$0xff]
      %v483 = vld [vmem:[%s1 + $0xb8] sm:$0xff]
      %v484 = vld [vmem:[%s1 + $0xc0] sm:$0xff]
      %v485 = vld [vmem:[%s1 + $0xc8] sm:$0xff]
      %v486 = vld [vmem:[%s1 + $0xd0] sm:$0xff]
      %v487 = vld [vmem:[%s1 + $0xd8] sm:$0xff]
      %v488 = vld [vmem:[%s1 + $0xe0] sm:$0xff]
      %v489 = vld [vmem:[%s1 + $0xe8] sm:$0xff]
      %v490 = vld [vmem:[%s1 + $0xf0] sm:$0xff]
      %v491 = vld [vmem:[%s1 + $0xf8] sm:$0xff]
      %v492 = vld [vmem:[%s1 + $0x100] sm:$0xff]
      %v493 = vld [vmem:[%s1 + $0x108] sm:$0xff]
      %v494 = vld [vmem:[%s1 + $0x110] sm:$0xff]
      %v495 = vld [vmem:[%s1 + $0x118] sm:$0xff]
      %v496 = vld [vmem:[%s1 + $0x120] sm:$0xff]
      %v497 = vld [vmem:[%s1 + $0x128] sm:$0xff]
      %v498 = vld [vmem:[%s1 + $0x130] sm:$0xff]
      %v499 = vld [vmem:[%s1 + $0x138] sm:$0xff]
      %v500 = vld [vmem:[%s1 + $0x140] sm:$0xff]
      %v501 = vld [vmem:[%s1 + $0x148] sm:$0xff]
      %v502 = vld [vmem:[%s1 + $0x150] sm:$0xff]
      %v503 = vld [vmem:[%s1 + $0x158] sm:$0xff]
      %v504 = vld [vmem:[%s1 + $0x160] sm:$0xff]
      %v505 = vld [vmem:[%s1 + $0x168] sm:$0xff]
      %v506 = vld [vmem:[%s1 + $0x170] sm:$0xff]
      %v507 = vld [vmem:[%s1 + $0x178] sm:$0xff]
      %v508 = vld [vmem:[%s1 + $0x180] sm:$0xff]
      %v509 = vld [vmem:[%s1 + $0x188] sm:$0xff]
      %v510 = vld [vmem:[%s1 + $0x190] sm:$0xff]
      %v511 = vld [vmem:[%s1 + $0x198] sm:$0xff]
      %v512 = vld [vmem:[%s1 + $0x1a0] sm:$0xff]
      %v513 = vld [vmem:[%s1 + $0x1a8] sm:$0xff]
      %v514 = vld [vmem:[%s1 + $0x1b0] sm:$0xff]
      %v515 = vld [vmem:[%s1 + $0x1b8] sm:$0xff]
      %v516 = vld [vmem:[%s1 + $0x1c0] sm:$0xff]
      %v517 = vld [vmem:[%s1 + $0x1c8] sm:$0xff]
      %v518 = vld [vmem:[%s1 + $0x1d0] sm:$0xff]
      %v519 = vld [vmem:[%s1 + $0x1d8] sm:$0xff]
      %v520 = vld [vmem:[%s1 + $0x1e0] sm:$0xff]
      %v521 = vld [vmem:[%s1 + $0x1e8] sm:$0xff]
      %v522 = vld [vmem:[%s1 + $0x1f0] sm:$0xff]
      %v523 = vld [vmem:[%s1 + $0x1f8] sm:$0xff]
      %v588 = vunpack.c.l.b16 %v460
      %v589 = vunpack.c.h.b16 %v460
      %v590 = vunpack.c.l.b16 %v461
      %v591 = vunpack.c.h.b16 %v461
      %v592 = vunpack.c.l.b16 %v462
      %v593 = vunpack.c.h.b16 %v462
      %v594 = vunpack.c.l.b16 %v463
      %v595 = vunpack.c.h.b16 %v463
      %v596 = vunpack.c.l.b16 %v464
      %v597 = vunpack.c.h.b16 %v464
      %v598 = vunpack.c.l.b16 %v465
      %v599 = vunpack.c.h.b16 %v465
      %v600 = vunpack.c.l.b16 %v466
      %v601 = vunpack.c.h.b16 %v466
      %v602 = vunpack.c.l.b16 %v467
      %v603 = vunpack.c.h.b16 %v467
      %v604 = vunpack.c.l.b16 %v468
      %v605 = vunpack.c.h.b16 %v468
      %v606 = vunpack.c.l.b16 %v469
      %v607 = vunpack.c.h.b16 %v469
      %v608 = vunpack.c.l.b16 %v470
      %v609 = vunpack.c.h.b16 %v470
      %v610 = vunpack.c.l.b16 %v471
      %v611 = vunpack.c.h.b16 %v471
      %v612 = vunpack.c.l.b16 %v472
      %v613 = vunpack.c.h.b16 %v472
      %v614 = vunpack.c.l.b16 %v473
      %v615 = vunpack.c.h.b16 %v473
      %v616 = vunpack.c.l.b16 %v474
      %v617 = vunpack.c.h.b16 %v474
      %v618 = vunpack.c.l.b16 %v475
      %v619 = vunpack.c.h.b16 %v475
      %v620 = vunpack.c.l.b16 %v476
      %v621 = vunpack.c.h.b16 %v476
      %v622 = vunpack.c.l.b16 %v477
      %v623 = vunpack.c.h.b16 %v477
      %v624 = vunpack.c.l.b16 %v478
      %v625 = vunpack.c.h.b16 %v478
      %v626 = vunpack.c.l.b16 %v479
      %v627 = vunpack.c.h.b16 %v479
      %v628 = vunpack.c.l.b16 %v480
      %v629 = vunpack.c.h.b16 %v480
      %v630 = vunpack.c.l.b16 %v481
      %v631 = vunpack.c.h.b16 %v481
      %v632 = vunpack.c.l.b16 %v482
      %v633 = vunpack.c.h.b16 %v482
      %v634 = vunpack.c.l.b16 %v483
      %v635 = vunpack.c.h.b16 %v483
      %v636 = vunpack.c.l.b16 %v484
      %v637 = vunpack.c.h.b16 %v484
      %v638 = vunpack.c.l.b16 %v485
      %v639 = vunpack.c.h.b16 %v485
      %v640 = vunpack.c.l.b16 %v486
      %v641 = vunpack.c.h.b16 %v486
      %v642 = vunpack.c.l.b16 %v487
      %v643 = vunpack.c.h.b16 %v487
      %v644 = vunpack.c.l.b16 %v488
      %v645 = vunpack.c.h.b16 %v488
      %v646 = vunpack.c.l.b16 %v489
      %v647 = vunpack.c.h.b16 %v489
      %v648 = vunpack.c.l.b16 %v490
      %v649 = vunpack.c.h.b16 %v490
      %v650 = vunpack.c.l.b16 %v491
      %v651 = vunpack.c.h.b16 %v491
      %v652 = vunpack.c.l.b16 %v492
      %v653 = vunpack.c.h.b16 %v492
      %v654 = vunpack.c.l.b16 %v493
      %v655 = vunpack.c.h.b16 %v493
      %v656 = vunpack.c.l.b16 %v494
      %v657 = vunpack.c.h.b16 %v494
      %v658 = vunpack.c.l.b16 %v495
      %v659 = vunpack.c.h.b16 %v495
      %v660 = vunpack.c.l.b16 %v496
      %v661 = vunpack.c.h.b16 %v496
      %v662 = vunpack.c.l.b16 %v497
      %v663 = vunpack.c.h.b16 %v497
      %v664 = vunpack.c.l.b16 %v498
      %v665 = vunpack.c.h.b16 %v498
      %v666 = vunpack.c.l.b16 %v499
      %v667 = vunpack.c.h.b16 %v499
      %v668 = vunpack.c.l.b16 %v500
      %v669 = vunpack.c.h.b16 %v500
      %v670 = vunpack.c.l.b16 %v501
      %v671 = vunpack.c.h.b16 %v501
      %v672 = vunpack.c.l.b16 %v502
      %v673 = vunpack.c.h.b16 %v502
      %v674 = vunpack.c.l.b16 %v503
      %v675 = vunpack.c.h.b16 %v503
      %v676 = vunpack.c.l.b16 %v504
      %v677 = vunpack.c.h.b16 %v504
      %v678 = vunpack.c.l.b16 %v505
      %v679 = vunpack.c.h.b16 %v505
      %v680 = vunpack.c.l.b16 %v506
      %v681 = vunpack.c.h.b16 %v506
      %v682 = vunpack.c.l.b16 %v507
      %v683 = vunpack.c.h.b16 %v507
      %v684 = vunpack.c.l.b16 %v508
      %v685 = vunpack.c.h.b16 %v508
      %v686 = vunpack.c.l.b16 %v509
      %v687 = vunpack.c.h.b16 %v509
      %v688 = vunpack.c.l.b16 %v510
      %v689 = vunpack.c.h.b16 %v510
      %v690 = vunpack.c.l.b16 %v511
      %v691 = vunpack.c.h.b16 %v511
      %v692 = vunpack.c.l.b16 %v512
      %v693 = vunpack.c.h.b16 %v512
      %v694 = vunpack.c.l.b16 %v513
      %v695 = vunpack.c.h.b16 %v513
      %v696 = vunpack.c.l.b16 %v514
      %v697 = vunpack.c.h.b16 %v514
      %v698 = vunpack.c.l.b16 %v515
      %v699 = vunpack.c.h.b16 %v515
      %v700 = vunpack.c.l.b16 %v516
      %v701 = vunpack.c.h.b16 %v516
      %v702 = vunpack.c.l.b16 %v517
      %v703 = vunpack.c.h.b16 %v517
      %v704 = vunpack.c.l.b16 %v518
      %v705 = vunpack.c.h.b16 %v518
      %v706 = vunpack.c.l.b16 %v519
      %v707 = vunpack.c.h.b16 %v519
      %v708 = vunpack.c.l.b16 %v520
      %v709 = vunpack.c.h.b16 %v520
      %v710 = vunpack.c.l.b16 %v521
      %v711 = vunpack.c.h.b16 %v521
      %v712 = vunpack.c.l.b16 %v522
      %v713 = vunpack.c.h.b16 %v522
      %v714 = vunpack.c.l.b16 %v523
      %v715 = vunpack.c.h.b16 %v523
      %v716 = vpack.c.b16 %v592, %v588
      %v717 = vpack.c.b16 %v593, %v589
      %v718 = vpack.c.b16 %v594, %v590
      %v719 = vpack.c.b16 %v595, %v591
      %v720 = vpack.c.b16 %v600, %v596
      %v721 = vpack.c.b16 %v601, %v597
      %v722 = vpack.c.b16 %v602, %v598
      %v723 = vpack.c.b16 %v603, %v599
      %v724 = vpack.c.b16 %v608, %v604
      %v725 = vpack.c.b16 %v609, %v605
      %v726 = vpack.c.b16 %v610, %v606
      %v727 = vpack.c.b16 %v611, %v607
      %v728 = vpack.c.b16 %v616, %v612
      %v729 = vpack.c.b16 %v617, %v613
      %v730 = vpack.c.b16 %v618, %v614
      %v731 = vpack.c.b16 %v619, %v615
      %v732 = vpack.c.b16 %v624, %v620
      %v733 = vpack.c.b16 %v625, %v621
      %v734 = vpack.c.b16 %v626, %v622
      %v735 = vpack.c.b16 %v627, %v623
      %v736 = vpack.c.b16 %v632, %v628
      %v737 = vpack.c.b16 %v633, %v629
      %v738 = vpack.c.b16 %v634, %v630
      %v739 = vpack.c.b16 %v635, %v631
      %v740 = vpack.c.b16 %v640, %v636
      %v741 = vpack.c.b16 %v641, %v637
      %v742 = vpack.c.b16 %v642, %v638
      %v743 = vpack.c.b16 %v643, %v639
      %v744 = vpack.c.b16 %v648, %v644
      %v745 = vpack.c.b16 %v649, %v645
      %v746 = vpack.c.b16 %v650, %v646
      %v747 = vpack.c.b16 %v651, %v647
      %v748 = vpack.c.b16 %v656, %v652
      %v749 = vpack.c.b16 %v657, %v653
      %v750 = vpack.c.b16 %v658, %v654
      %v751 = vpack.c.b16 %v659, %v655
      %v752 = vpack.c.b16 %v664, %v660
      %v753 = vpack.c.b16 %v665, %v661
      %v754 = vpack.c.b16 %v666, %v662
      %v755 = vpack.c.b16 %v667, %v663
      %v756 = vpack.c.b16 %v672, %v668
      %v757 = vpack.c.b16 %v673, %v669
      %v758 = vpack.c.b16 %v674, %v670
      %v759 = vpack.c.b16 %v675, %v671
      %v760 = vpack.c.b16 %v680, %v676
      %v761 = vpack.c.b16 %v681, %v677
      %v762 = vpack.c.b16 %v682, %v678
      %v763 = vpack.c.b16 %v683, %v679
      %v764 = vpack.c.b16 %v688, %v684
      %v765 = vpack.c.b16 %v689, %v685
      %v766 = vpack.c.b16 %v690, %v686
      %v767 = vpack.c.b16 %v691, %v687
      %v768 = vpack.c.b16 %v696, %v692
      %v769 = vpack.c.b16 %v697, %v693
      %v770 = vpack.c.b16 %v698, %v694
      %v771 = vpack.c.b16 %v699, %v695
      %v772 = vpack.c.b16 %v704, %v700
      %v773 = vpack.c.b16 %v705, %v701
      %v774 = vpack.c.b16 %v706, %v702
      %v775 = vpack.c.b16 %v707, %v703
      %v776 = vpack.c.b16 %v712, %v708
      %v777 = vpack.c.b16 %v713, %v709
      %v778 = vpack.c.b16 %v714, %v710
      %v779 = vpack.c.b16 %v715, %v711
      %844 = vmatpush.bf16.msra.mxu0 %v744
      %845 = vmatpush.bf16.msra.mxu0 %v740
      %846 = vmatpush.bf16.msra.mxu0 %v736
      %847 = vmatpush.bf16.msra.mxu0 %v732
      %848 = vmatpush.bf16.msra.mxu0 %v728
      %849 = vmatpush.bf16.msra.mxu0 %v724
      %850 = vmatpush.bf16.msra.mxu0 %v720
      %851 = vmatpush.bf16.msra.mxu0 %v716
      %852 = vmatmul.bf16.gmra.mxu0 %v444
      %v853 = vpop.f32.mrf.mxu0
      %v854 = vadd.f32 0.0, %v853
      %v855 = vpop.f32.mrf.mxu0
      %v856 = vadd.f32 0.0, %v855
      %857 = vmatmul.bf16.gmra.mxu0 %v446
      %v858 = vpop.f32.mrf.mxu0
      %v859 = vadd.f32 0.0, %v858
      %v860 = vpop.f32.mrf.mxu0
      %v861 = vadd.f32 0.0, %v860
      %862 = vmatmul.bf16.gmra.mxu0 %v448
      %v863 = vpop.f32.mrf.mxu0
      %v864 = vadd.f32 0.0, %v863
      %v865 = vpop.f32.mrf.mxu0
      %v866 = vadd.f32 0.0, %v865
      %867 = vmatmul.bf16.gmra.mxu0 %v450
      %v868 = vpop.f32.mrf.mxu0
      %v869 = vadd.f32 0.0, %v868
      %v870 = vpop.f32.mrf.mxu0
      %v871 = vadd.f32 0.0, %v870
      %872 = vmatmul.bf16.gmra.mxu0 %v452
      %v873 = vpop.f32.mrf.mxu0
      %v874 = vadd.f32 0.0, %v873
      %v875 = vpop.f32.mrf.mxu0
      %v876 = vadd.f32 0.0, %v875
      %877 = vmatmul.bf16.gmra.mxu0 %v454
      %v878 = vpop.f32.mrf.mxu0
      %v879 = vadd.f32 0.0, %v878
      %v880 = vpop.f32.mrf.mxu0
      %v881 = vadd.f32 0.0, %v880
      %882 = vmatmul.bf16.gmra.mxu0 %v456
      %v883 = vpop.f32.mrf.mxu0
      %v884 = vadd.f32 0.0, %v883
      %v885 = vpop.f32.mrf.mxu0
      %v886 = vadd.f32 0.0, %v885
      %887 = vmatmul.bf16.gmra.mxu0 %v458
      %v888 = vpop.f32.mrf.mxu0
      %v889 = vadd.f32 0.0, %v888
      %v890 = vpop.f32.mrf.mxu0
      %v891 = vadd.f32 0.0, %v890
      %892 = vdwg.mxu0
      %893 = vmatpush.bf16.msra.mxu0 %v776
      %894 = vmatpush.bf16.msra.mxu0 %v772
      %895 = vmatpush.bf16.msra.mxu0 %v768
      %896 = vmatpush.bf16.msra.mxu0 %v764
      %897 = vmatpush.bf16.msra.mxu0 %v760
      %898 = vmatpush.bf16.msra.mxu0 %v756
      %899 = vmatpush.bf16.msra.mxu0 %v752
      %900 = vmatpush.bf16.msra.mxu0 %v748
      %901 = vmatmul.bf16.gmra.mxu0 %v445
      %v902 = vpop.f32.mrf.mxu0
      %v903 = vadd.f32 %v854, %v902
      %v904 = vpop.f32.mrf.mxu0
      %v905 = vadd.f32 %v856, %v904
      %906 = vmatmul.bf16.gmra.mxu0 %v447
      %v907 = vpop.f32.mrf.mxu0
      %v908 = vadd.f32 %v859, %v907
      %v909 = vpop.f32.mrf.mxu0
      %v910 = vadd.f32 %v861, %v909
      %911 = vmatmul.bf16.gmra.mxu0 %v449
      %v912 = vpop.f32.mrf.mxu0
      %v913 = vadd.f32 %v864, %v912
      %v914 = vpop.f32.mrf.mxu0
      %v915 = vadd.f32 %v866, %v914
      %916 = vmatmul.bf16.gmra.mxu0 %v451
      %v917 = vpop.f32.mrf.mxu0
      %v918 = vadd.f32 %v869, %v917
      %v919 = vpop.f32.mrf.mxu0
      %v920 = vadd.f32 %v871, %v919
      %921 = vmatmul.bf16.gmra.mxu0 %v453
      %v922 = vpop.f32.mrf.mxu0
      %v923 = vadd.f32 %v874, %v922
      %v924 = vpop.f32.mrf.mxu0
      %v925 = vadd.f32 %v876, %v924
      %926 = vmatmul.bf16.gmra.mxu0 %v455
      %v927 = vpop.f32.mrf.mxu0
      %v928 = vadd.f32 %v879, %v927
      %v929 = vpop.f32.mrf.mxu0
      %v930 = vadd.f32 %v881, %v929
      %931 = vmatmul.bf16.gmra.mxu0 %v457
      %v932 = vpop.f32.mrf.mxu0
      %v933 = vadd.f32 %v884, %v932
      %v934 = vpop.f32.mrf.mxu0
      %v935 = vadd.f32 %v886, %v934
      %936 = vmatmul.bf16.gmra.mxu0 %v459
      %v937 = vpop.f32.mrf.mxu0
      %v938 = vadd.f32 %v889, %v937
      %v939 = vpop.f32.mrf.mxu0
      %v940 = vadd.f32 %v891, %v939
      %941 = vdwg.mxu0
      %942 = vmatpush.bf16.msra.mxu0 %v745
      %943 = vmatpush.bf16.msra.mxu0 %v741
      %944 = vmatpush.bf16.msra.mxu0 %v737
      %945 = vmatpush.bf16.msra.mxu0 %v733
      %946 = vmatpush.bf16.msra.mxu0 %v729
      %947 = vmatpush.bf16.msra.mxu0 %v725
      %948 = vmatpush.bf16.msra.mxu0 %v721
      %949 = vmatpush.bf16.msra.mxu0 %v717
      %950 = vmatmul.bf16.gmra.mxu0 %v444
      %v951 = vpop.f32.mrf.mxu0
      %v952 = vadd.f32 0.0, %v951
      %v953 = vpop.f32.mrf.mxu0
      %v954 = vadd.f32 0.0, %v953
      %955 = vmatmul.bf16.gmra.mxu0 %v446
      %v956 = vpop.f32.mrf.mxu0
      %v957 = vadd.f32 0.0, %v956
      %v958 = vpop.f32.mrf.mxu0
      %v959 = vadd.f32 0.0, %v958
      %960 = vmatmul.bf16.gmra.mxu0 %v448
      %v961 = vpop.f32.mrf.mxu0
      %v962 = vadd.f32 0.0, %v961
      %v963 = vpop.f32.mrf.mxu0
      %v964 = vadd.f32 0.0, %v963
      %965 = vmatmul.bf16.gmra.mxu0 %v450
      %v966 = vpop.f32.mrf.mxu0
      %v967 = vadd.f32 0.0, %v966
      %v968 = vpop.f32.mrf.mxu0
      %v969 = vadd.f32 0.0, %v968
      %970 = vmatmul.bf16.gmra.mxu0 %v452
      %v971 = vpop.f32.mrf.mxu0
      %v972 = vadd.f32 0.0, %v971
      %v973 = vpop.f32.mrf.mxu0
      %v974 = vadd.f32 0.0, %v973
      %975 = vmatmul.bf16.gmra.mxu0 %v454
      %v976 = vpop.f32.mrf.mxu0
      %v977 = vadd.f32 0.0, %v976
      %v978 = vpop.f32.mrf.mxu0
      %v979 = vadd.f32 0.0, %v978
      %980 = vmatmul.bf16.gmra.mxu0 %v456
      %v981 = vpop.f32.mrf.mxu0
      %v982 = vadd.f32 0.0, %v981
      %v983 = vpop.f32.mrf.mxu0
      %v984 = vadd.f32 0.0, %v983
      %985 = vmatmul.bf16.gmra.mxu0 %v458
      %v986 = vpop.f32.mrf.mxu0
      %v987 = vadd.f32 0.0, %v986
      %v988 = vpop.f32.mrf.mxu0
      %v989 = vadd.f32 0.0, %v988
      %990 = vdwg.mxu0
      %991 = vmatpush.bf16.msra.mxu0 %v777
      %992 = vmatpush.bf16.msra.mxu0 %v773
      %993 = vmatpush.bf16.msra.mxu0 %v769
      %994 = vmatpush.bf16.msra.mxu0 %v765
      %995 = vmatpush.bf16.msra.mxu0 %v761
      %996 = vmatpush.bf16.msra.mxu0 %v757
      %997 = vmatpush.bf16.msra.mxu0 %v753
      %998 = vmatpush.bf16.msra.mxu0 %v749
      %999 = vmatmul.bf16.gmra.mxu0 %v445
      %v1000 = vpop.f32.mrf.mxu0
      %v1001 = vadd.f32 %v952, %v1000
      %v1002 = vpop.f32.mrf.mxu0
      %v1003 = vadd.f32 %v954, %v1002
      %1004 = vmatmul.bf16.gmra.mxu0 %v447
      %v1005 = vpop.f32.mrf.mxu0
      %v1006 = vadd.f32 %v957, %v1005
      %v1007 = vpop.f32.mrf.mxu0
      %v1008 = vadd.f32 %v959, %v1007
      %1009 = vmatmul.bf16.gmra.mxu0 %v449
      %v1010 = vpop.f32.mrf.mxu0
      %v1011 = vadd.f32 %v962, %v1010
      %v1012 = vpop.f32.mrf.mxu0
      %v1013 = vadd.f32 %v964, %v1012
      %1014 = vmatmul.bf16.gmra.mxu0 %v451
      %v1015 = vpop.f32.mrf.mxu0
      %v1016 = vadd.f32 %v967, %v1015
      %v1017 = vpop.f32.mrf.mxu0
      %v1018 = vadd.f32 %v969, %v1017
      %1019 = vmatmul.bf16.gmra.mxu0 %v453
      %v1020 = vpop.f32.mrf.mxu0
      %v1021 = vadd.f32 %v972, %v1020
      %v1022 = vpop.f32.mrf.mxu0
      %v1023 = vadd.f32 %v974, %v1022
      %1024 = vmatmul.bf16.gmra.mxu0 %v455
      %v1025 = vpop.f32.mrf.mxu0
      %v1026 = vadd.f32 %v977, %v1025
      %v1027 = vpop.f32.mrf.mxu0
      %v1028 = vadd.f32 %v979, %v1027
      %1029 = vmatmul.bf16.gmra.mxu0 %v457
      %v1030 = vpop.f32.mrf.mxu0
      %v1031 = vadd.f32 %v982, %v1030
      %v1032 = vpop.f32.mrf.mxu0
      %v1033 = vadd.f32 %v984, %v1032
      %1034 = vmatmul.bf16.gmra.mxu0 %v459
      %v1035 = vpop.f32.mrf.mxu0
      %v1036 = vadd.f32 %v987, %v1035
      %v1037 = vpop.f32.mrf.mxu0
      %v1038 = vadd.f32 %v989, %v1037
      %1039 = vdwg.mxu0
      %1040 = vmatpush.bf16.msra.mxu0 %v746
      %1041 = vmatpush.bf16.msra.mxu0 %v742
      %1042 = vmatpush.bf16.msra.mxu0 %v738
      %1043 = vmatpush.bf16.msra.mxu0 %v734
      %1044 = vmatpush.bf16.msra.mxu0 %v730
      %1045 = vmatpush.bf16.msra.mxu0 %v726
      %1046 = vmatpush.bf16.msra.mxu0 %v722
      %1047 = vmatpush.bf16.msra.mxu0 %v718
      %1048 = vmatmul.bf16.gmra.mxu0 %v444
      %v1049 = vpop.f32.mrf.mxu0
      %v1050 = vadd.f32 0.0, %v1049
      %v1051 = vpop.f32.mrf.mxu0
      %v1052 = vadd.f32 0.0, %v1051
      %1053 = vmatmul.bf16.gmra.mxu0 %v446
      %v1054 = vpop.f32.mrf.mxu0
      %v1055 = vadd.f32 0.0, %v1054
      %v1056 = vpop.f32.mrf.mxu0
      %v1057 = vadd.f32 0.0, %v1056
      %1058 = vmatmul.bf16.gmra.mxu0 %v448
      %v1059 = vpop.f32.mrf.mxu0
      %v1060 = vadd.f32 0.0, %v1059
      %v1061 = vpop.f32.mrf.mxu0
      %v1062 = vadd.f32 0.0, %v1061
      %1063 = vmatmul.bf16.gmra.mxu0 %v450
      %v1064 = vpop.f32.mrf.mxu0
      %v1065 = vadd.f32 0.0, %v1064
      %v1066 = vpop.f32.mrf.mxu0
      %v1067 = vadd.f32 0.0, %v1066
      %1068 = vmatmul.bf16.gmra.mxu0 %v452
      %v1069 = vpop.f32.mrf.mxu0
      %v1070 = vadd.f32 0.0, %v1069
      %v1071 = vpop.f32.mrf.mxu0
      %v1072 = vadd.f32 0.0, %v1071
      %1073 = vmatmul.bf16.gmra.mxu0 %v454
      %v1074 = vpop.f32.mrf.mxu0
      %v1075 = vadd.f32 0.0, %v1074
      %v1076 = vpop.f32.mrf.mxu0
      %v1077 = vadd.f32 0.0, %v1076
      %1078 = vmatmul.bf16.gmra.mxu0 %v456
      %v1079 = vpop.f32.mrf.mxu0
      %v1080 = vadd.f32 0.0, %v1079
      %v1081 = vpop.f32.mrf.mxu0
      %v1082 = vadd.f32 0.0, %v1081
      %1083 = vmatmul.bf16.gmra.mxu0 %v458
      %v1084 = vpop.f32.mrf.mxu0
      %v1085 = vadd.f32 0.0, %v1084
      %v1086 = vpop.f32.mrf.mxu0
      %v1087 = vadd.f32 0.0, %v1086
      %1088 = vdwg.mxu0
      %1089 = vmatpush.bf16.msra.mxu0 %v778
      %1090 = vmatpush.bf16.msra.mxu0 %v774
      %1091 = vmatpush.bf16.msra.mxu0 %v770
      %1092 = vmatpush.bf16.msra.mxu0 %v766
      %1093 = vmatpush.bf16.msra.mxu0 %v762
      %1094 = vmatpush.bf16.msra.mxu0 %v758
      %1095 = vmatpush.bf16.msra.mxu0 %v754
      %1096 = vmatpush.bf16.msra.mxu0 %v750
      %1097 = vmatmul.bf16.gmra.mxu0 %v445
      %v1098 = vpop.f32.mrf.mxu0
      %v1099 = vadd.f32 %v1050, %v1098
      %v1100 = vpop.f32.mrf.mxu0
      %v1101 = vadd.f32 %v1052, %v1100
      %1102 = vmatmul.bf16.gmra.mxu0 %v447
      %v1103 = vpop.f32.mrf.mxu0
      %v1104 = vadd.f32 %v1055, %v1103
      %v1105 = vpop.f32.mrf.mxu0
      %v1106 = vadd.f32 %v1057, %v1105
      %1107 = vmatmul.bf16.gmra.mxu0 %v449
      %v1108 = vpop.f32.mrf.mxu0
      %v1109 = vadd.f32 %v1060, %v1108
      %v1110 = vpop.f32.mrf.mxu0
      %v1111 = vadd.f32 %v1062, %v1110
      %1112 = vmatmul.bf16.gmra.mxu0 %v451
      %v1113 = vpop.f32.mrf.mxu0
      %v1114 = vadd.f32 %v1065, %v1113
      %v1115 = vpop.f32.mrf.mxu0
      %v1116 = vadd.f32 %v1067, %v1115
      %1117 = vmatmul.bf16.gmra.mxu0 %v453
      %v1118 = vpop.f32.mrf.mxu0
      %v1119 = vadd.f32 %v1070, %v1118
      %v1120 = vpop.f32.mrf.mxu0
      %v1121 = vadd.f32 %v1072, %v1120
      %1122 = vmatmul.bf16.gmra.mxu0 %v455
      %v1123 = vpop.f32.mrf.mxu0
      %v1124 = vadd.f32 %v1075, %v1123
      %v1125 = vpop.f32.mrf.mxu0
      %v1126 = vadd.f32 %v1077, %v1125
      %1127 = vmatmul.bf16.gmra.mxu0 %v457
      %v1128 = vpop.f32.mrf.mxu0
      %v1129 = vadd.f32 %v1080, %v1128
      %v1130 = vpop.f32.mrf.mxu0
      %v1131 = vadd.f32 %v1082, %v1130
      %1132 = vmatmul.bf16.gmra.mxu0 %v459
      %v1133 = vpop.f32.mrf.mxu0
      %v1134 = vadd.f32 %v1085, %v1133
      %v1135 = vpop.f32.mrf.mxu0
      %v1136 = vadd.f32 %v1087, %v1135
      %1137 = vdwg.mxu0
      %1138 = vmatpush.bf16.msra.mxu0 %v747
      %1139 = vmatpush.bf16.msra.mxu0 %v743
      %1140 = vmatpush.bf16.msra.mxu0 %v739
      %1141 = vmatpush.bf16.msra.mxu0 %v735
      %1142 = vmatpush.bf16.msra.mxu0 %v731
      %1143 = vmatpush.bf16.msra.mxu0 %v727
      %1144 = vmatpush.bf16.msra.mxu0 %v723
      %1145 = vmatpush.bf16.msra.mxu0 %v719
      %1146 = vmatmul.bf16.gmra.mxu0 %v444
      %v1147 = vpop.f32.mrf.mxu0
      %v1148 = vadd.f32 0.0, %v1147
      %v1149 = vpop.f32.mrf.mxu0
      %v1150 = vadd.f32 0.0, %v1149
      %1151 = vmatmul.bf16.gmra.mxu0 %v446
      %v1152 = vpop.f32.mrf.mxu0
      %v1153 = vadd.f32 0.0, %v1152
      %v1154 = vpop.f32.mrf.mxu0
      %v1155 = vadd.f32 0.0, %v1154
      %1156 = vmatmul.bf16.gmra.mxu0 %v448
      %v1157 = vpop.f32.mrf.mxu0
      %v1158 = vadd.f32 0.0, %v1157
      %v1159 = vpop.f32.mrf.mxu0
      %v1160 = vadd.f32 0.0, %v1159
      %1161 = vmatmul.bf16.gmra.mxu0 %v450
      %v1162 = vpop.f32.mrf.mxu0
      %v1163 = vadd.f32 0.0, %v1162
      %v1164 = vpop.f32.mrf.mxu0
      %v1165 = vadd.f32 0.0, %v1164
      %1166 = vmatmul.bf16.gmra.mxu0 %v452
      %v1167 = vpop.f32.mrf.mxu0
      %v1168 = vadd.f32 0.0, %v1167
      %v1169 = vpop.f32.mrf.mxu0
      %v1170 = vadd.f32 0.0, %v1169
      %1171 = vmatmul.bf16.gmra.mxu0 %v454
      %v1172 = vpop.f32.mrf.mxu0
      %v1173 = vadd.f32 0.0, %v1172
      %v1174 = vpop.f32.mrf.mxu0
      %v1175 = vadd.f32 0.0, %v1174
      %1176 = vmatmul.bf16.gmra.mxu0 %v456
      %v1177 = vpop.f32.mrf.mxu0
      %v1178 = vadd.f32 0.0, %v1177
      %v1179 = vpop.f32.mrf.mxu0
      %v1180 = vadd.f32 0.0, %v1179
      %1181 = vmatmul.bf16.gmra.mxu0 %v458
      %v1182 = vpop.f32.mrf.mxu0
      %v1183 = vadd.f32 0.0, %v1182
      %v1184 = vpop.f32.mrf.mxu0
      %v1185 = vadd.f32 0.0, %v1184
      %1186 = vdwg.mxu0
      %1187 = vmatpush.bf16.msra.mxu0 %v779
      %1188 = vmatpush.bf16.msra.mxu0 %v775
      %1189 = vmatpush.bf16.msra.mxu0 %v771
      %1190 = vmatpush.bf16.msra.mxu0 %v767
      %1191 = vmatpush.bf16.msra.mxu0 %v763
      %1192 = vmatpush.bf16.msra.mxu0 %v759
      %1193 = vmatpush.bf16.msra.mxu0 %v755
      %1194 = vmatpush.bf16.msra.mxu0 %v751
      %1195 = vmatmul.bf16.gmra.mxu0 %v445
      %v1196 = vpop.f32.mrf.mxu0
      %v1197 = vadd.f32 %v1148, %v1196
      %v1198 = vpop.f32.mrf.mxu0
      %v1199 = vadd.f32 %v1150, %v1198
      %1200 = vmatmul.bf16.gmra.mxu0 %v447
      %v1201 = vpop.f32.mrf.mxu0
      %v1202 = vadd.f32 %v1153, %v1201
      %v1203 = vpop.f32.mrf.mxu0
      %v1204 = vadd.f32 %v1155, %v1203
      %1205 = vmatmul.bf16.gmra.mxu0 %v449
      %v1206 = vpop.f32.mrf.mxu0
      %v1207 = vadd.f32 %v1158, %v1206
      %v1208 = vpop.f32.mrf.mxu0
      %v1209 = vadd.f32 %v1160, %v1208
      %1210 = vmatmul.bf16.gmra.mxu0 %v451
      %v1211 = vpop.f32.mrf.mxu0
      %v1212 = vadd.f32 %v1163, %v1211
      %v1213 = vpop.f32.mrf.mxu0
      %v1214 = vadd.f32 %v1165, %v1213
      %1215 = vmatmul.bf16.gmra.mxu0 %v453
      %v1216 = vpop.f32.mrf.mxu0
      %v1217 = vadd.f32 %v1168, %v1216
      %v1218 = vpop.f32.mrf.mxu0
      %v1219 = vadd.f32 %v1170, %v1218
      %1220 = vmatmul.bf16.gmra.mxu0 %v455
      %v1221 = vpop.f32.mrf.mxu0
      %v1222 = vadd.f32 %v1173, %v1221
      %v1223 = vpop.f32.mrf.mxu0
      %v1224 = vadd.f32 %v1175, %v1223
      %1225 = vmatmul.bf16.gmra.mxu0 %v457
      %v1226 = vpop.f32.mrf.mxu0
      %v1227 = vadd.f32 %v1178, %v1226
      %v1228 = vpop.f32.mrf.mxu0
      %v1229 = vadd.f32 %v1180, %v1228
      %1230 = vmatmul.bf16.gmra.mxu0 %v459
      %v1231 = vpop.f32.mrf.mxu0
      %v1232 = vadd.f32 %v1183, %v1231
      %v1233 = vpop.f32.mrf.mxu0
      %v1234 = vadd.f32 %v1185, %v1233
      %1235 = vdwg.mxu0
      %v1236 = vld [vmem:[%s2] sm:$0x3]
      %v1237 = vmul.f32 %v903, %v903
      %v1238 = vmul.f32 %v1001, %v1001
      %v1239 = vmul.f32 %v905, %v905
      %v1240 = vmul.f32 %v1003, %v1003
      %v1241 = vmul.f32 %v908, %v908
      %v1242 = vmul.f32 %v1006, %v1006
      %v1243 = vmul.f32 %v910, %v910
      %v1244 = vmul.f32 %v1008, %v1008
      %v1245 = vmul.f32 %v913, %v913
      %v1246 = vmul.f32 %v1011, %v1011
      %v1247 = vmul.f32 %v915, %v915
      %v1248 = vmul.f32 %v1013, %v1013
      %v1249 = vmul.f32 %v918, %v918
      %v1250 = vmul.f32 %v1016, %v1016
      %v1251 = vmul.f32 %v920, %v920
      %v1252 = vmul.f32 %v1018, %v1018
      %v1253 = vmul.f32 %v923, %v923
      %v1254 = vmul.f32 %v1021, %v1021
      %v1255 = vmul.f32 %v925, %v925
      %v1256 = vmul.f32 %v1023, %v1023
      %v1257 = vmul.f32 %v928, %v928
      %v1258 = vmul.f32 %v1026, %v1026
      %v1259 = vmul.f32 %v930, %v930
      %v1260 = vmul.f32 %v1028, %v1028
      %v1261 = vmul.f32 %v933, %v933
      %v1262 = vmul.f32 %v1031, %v1031
      %v1263 = vmul.f32 %v935, %v935
      %v1264 = vmul.f32 %v1033, %v1033
      %v1265 = vmul.f32 %v938, %v938
      %v1266 = vmul.f32 %v1036, %v1036
      %v1267 = vmul.f32 %v940, %v940
      %v1268 = vmul.f32 %v1038, %v1038
      %v1269 = vadd.f32 %v1237, %v1238
      %1270 = vadd.xlane.f32.xlu0 %v1269
      %v1271 = vpop.xlane.xlu0 %1270
      %v1272 = vadd.f32 %v1239, %v1240
      %1273 = vadd.xlane.f32.xlu0 %v1272
      %v1274 = vpop.xlane.xlu0 %1273
      %v1275 = vadd.f32 %v1241, %v1242
      %1276 = vadd.xlane.f32.xlu0 %v1275
      %v1277 = vpop.xlane.xlu0 %1276
      %v1278 = vadd.f32 %v1243, %v1244
      %1279 = vadd.xlane.f32.xlu0 %v1278
      %v1280 = vpop.xlane.xlu0 %1279
      %v1281 = vadd.f32 %v1245, %v1246
      %1282 = vadd.xlane.f32.xlu0 %v1281
      %v1283 = vpop.xlane.xlu0 %1282
      %v1284 = vadd.f32 %v1247, %v1248
      %1285 = vadd.xlane.f32.xlu0 %v1284
      %v1286 = vpop.xlane.xlu0 %1285
      %v1287 = vadd.f32 %v1249, %v1250
      %1288 = vadd.xlane.f32.xlu0 %v1287
      %v1289 = vpop.xlane.xlu0 %1288
      %v1290 = vadd.f32 %v1251, %v1252
      %1291 = vadd.xlane.f32.xlu0 %v1290
      %v1292 = vpop.xlane.xlu0 %1291
      %v1293 = vadd.f32 %v1253, %v1254
      %1294 = vadd.xlane.f32.xlu0 %v1293
      %v1295 = vpop.xlane.xlu0 %1294
      %v1296 = vadd.f32 %v1255, %v1256
      %1297 = vadd.xlane.f32.xlu0 %v1296
      %v1298 = vpop.xlane.xlu0 %1297
      %v1299 = vadd.f32 %v1257, %v1258
      %1300 = vadd.xlane.f32.xlu0 %v1299
      %v1301 = vpop.xlane.xlu0 %1300
      %v1302 = vadd.f32 %v1259, %v1260
      %1303 = vadd.xlane.f32.xlu0 %v1302
      %v1304 = vpop.xlane.xlu0 %1303
      %v1305 = vadd.f32 %v1261, %v1262
      %1306 = vadd.xlane.f32.xlu0 %v1305
      %v1307 = vpop.xlane.xlu0 %1306
      %v1308 = vadd.f32 %v1263, %v1264
      %1309 = vadd.xlane.f32.xlu0 %v1308
      %v1310 = vpop.xlane.xlu0 %1309
      %v1311 = vadd.f32 %v1265, %v1266
      %1312 = vadd.xlane.f32.xlu0 %v1311
      %v1313 = vpop.xlane.xlu0 %1312
      %v1314 = vadd.f32 %v1267, %v1268
      %1315 = vadd.xlane.f32.xlu0 %v1314
      %v1316 = vpop.xlane.xlu0 %1315
      %v1317 = vrcp.pop 256.0
      %v1318 = vmul.f32 256.0, %v1317
      %v1319 = vsub.f32 1.0, %v1318
      %v1320 = vmul.f32 %v1317, %v1319
      %v1321 = vadd.f32 %v1317, %v1320
      %vm1322 = vweird.f32 %v1317
      %v1323 = vsel %vm1322, %v1317, %v1321
      %v1324 = vmul.f32 %v1271, %v1323
      %v1325 = vmul.f32 %v1274, %v1323
      %v1326 = vmul.f32 %v1277, %v1323
      %v1327 = vmul.f32 %v1280, %v1323
      %v1328 = vmul.f32 %v1283, %v1323
      %v1329 = vmul.f32 %v1286, %v1323
      %v1330 = vmul.f32 %v1289, %v1323
      %v1331 = vmul.f32 %v1292, %v1323
      %v1332 = vmul.f32 %v1295, %v1323
      %v1333 = vmul.f32 %v1298, %v1323
      %v1334 = vmul.f32 %v1301, %v1323
      %v1335 = vmul.f32 %v1304, %v1323
      %v1336 = vmul.f32 %v1307, %v1323
      %v1337 = vmul.f32 %v1310, %v1323
      %v1338 = vmul.f32 %v1313, %v1323
      %v1339 = vmul.f32 %v1316, %v1323
      %v1340 = vadd.f32 %v1324, 1e-05
      %v1341 = vadd.f32 %v1325, 1e-05
      %v1342 = vadd.f32 %v1326, 1e-05
      %v1343 = vadd.f32 %v1327, 1e-05
      %v1344 = vadd.f32 %v1328, 1e-05
      %v1345 = vadd.f32 %v1329, 1e-05
      %v1346 = vadd.f32 %v1330, 1e-05
      %v1347 = vadd.f32 %v1331, 1e-05
      %v1348 = vadd.f32 %v1332, 1e-05
      %v1349 = vadd.f32 %v1333, 1e-05
      %v1350 = vadd.f32 %v1334, 1e-05
      %v1351 = vadd.f32 %v1335, 1e-05
      %v1352 = vadd.f32 %v1336, 1e-05
      %v1353 = vadd.f32 %v1337, 1e-05
      %v1354 = vadd.f32 %v1338, 1e-05
      %v1355 = vadd.f32 %v1339, 1e-05
      %v1356 = vrsqrt.pop %v1340
      %v1357 = vmul.f32 %v1356, %v1340
      %v1358 = vmul.f32 %v1357, %v1356
      %v1359 = vmul.f32 0.5, %v1358
      %v1360 = vsub.f32 1.5, %v1359
      %v1361 = vmul.f32 %v1356, %v1360
      %vm1362 = vweird.f32 %v1340
      %vm1363 = vweird.f32 %v1356
      %vm1364 = vmor %vm1362, %vm1363
      %v1365 = vsel %vm1364, %v1356, %v1361
      %v1366 = vrsqrt.pop %v1341
      %v1367 = vmul.f32 %v1366, %v1341
      %v1368 = vmul.f32 %v1367, %v1366
      %v1369 = vmul.f32 0.5, %v1368
      %v1370 = vsub.f32 1.5, %v1369
      %v1371 = vmul.f32 %v1366, %v1370
      %vm1372 = vweird.f32 %v1341
      %vm1373 = vweird.f32 %v1366
      %vm1374 = vmor %vm1372, %vm1373
      %v1375 = vsel %vm1374, %v1366, %v1371
      %v1376 = vrsqrt.pop %v1342
      %v1377 = vmul.f32 %v1376, %v1342
      %v1378 = vmul.f32 %v1377, %v1376
      %v1379 = vmul.f32 0.5, %v1378
      %v1380 = vsub.f32 1.5, %v1379
      %v1381 = vmul.f32 %v1376, %v1380
      %vm1382 = vweird.f32 %v1342
      %vm1383 = vweird.f32 %v1376
      %vm1384 = vmor %vm1382, %vm1383
      %v1385 = vsel %vm1384, %v1376, %v1381
      %v1386 = vrsqrt.pop %v1343
      %v1387 = vmul.f32 %v1386, %v1343
      %v1388 = vmul.f32 %v1387, %v1386
      %v1389 = vmul.f32 0.5, %v1388
      %v1390 = vsub.f32 1.5, %v1389
      %v1391 = vmul.f32 %v1386, %v1390
      %vm1392 = vweird.f32 %v1343
      %vm1393 = vweird.f32 %v1386
      %vm1394 = vmor %vm1392, %vm1393
      %v1395 = vsel %vm1394, %v1386, %v1391
      %v1396 = vrsqrt.pop %v1344
      %v1397 = vmul.f32 %v1396, %v1344
      %v1398 = vmul.f32 %v1397, %v1396
      %v1399 = vmul.f32 0.5, %v1398
      %v1400 = vsub.f32 1.5, %v1399
      %v1401 = vmul.f32 %v1396, %v1400
      %vm1402 = vweird.f32 %v1344
      %vm1403 = vweird.f32 %v1396
      %vm1404 = vmor %vm1402, %vm1403
      %v1405 = vsel %vm1404, %v1396, %v1401
      %v1406 = vrsqrt.pop %v1345
      %v1407 = vmul.f32 %v1406, %v1345
      %v1408 = vmul.f32 %v1407, %v1406
      %v1409 = vmul.f32 0.5, %v1408
      %v1410 = vsub.f32 1.5, %v1409
      %v1411 = vmul.f32 %v1406, %v1410
      %vm1412 = vweird.f32 %v1345
      %vm1413 = vweird.f32 %v1406
      %vm1414 = vmor %vm1412, %vm1413
      %v1415 = vsel %vm1414, %v1406, %v1411
      %v1416 = vrsqrt.pop %v1346
      %v1417 = vmul.f32 %v1416, %v1346
      %v1418 = vmul.f32 %v1417, %v1416
      %v1419 = vmul.f32 0.5, %v1418
      %v1420 = vsub.f32 1.5, %v1419
      %v1421 = vmul.f32 %v1416, %v1420
      %vm1422 = vweird.f32 %v1346
      %vm1423 = vweird.f32 %v1416
      %vm1424 = vmor %vm1422, %vm1423
      %v1425 = vsel %vm1424, %v1416, %v1421
      %v1426 = vrsqrt.pop %v1347
      %v1427 = vmul.f32 %v1426, %v1347
      %v1428 = vmul.f32 %v1427, %v1426
      %v1429 = vmul.f32 0.5, %v1428
      %v1430 = vsub.f32 1.5, %v1429
      %v1431 = vmul.f32 %v1426, %v1430
      %vm1432 = vweird.f32 %v1347
      %vm1433 = vweird.f32 %v1426
      %vm1434 = vmor %vm1432, %vm1433
      %v1435 = vsel %vm1434, %v1426, %v1431
      %v1436 = vrsqrt.pop %v1348
      %v1437 = vmul.f32 %v1436, %v1348
      %v1438 = vmul.f32 %v1437, %v1436
      %v1439 = vmul.f32 0.5, %v1438
      %v1440 = vsub.f32 1.5, %v1439
      %v1441 = vmul.f32 %v1436, %v1440
      %vm1442 = vweird.f32 %v1348
      %vm1443 = vweird.f32 %v1436
      %vm1444 = vmor %vm1442, %vm1443
      %v1445 = vsel %vm1444, %v1436, %v1441
      %v1446 = vrsqrt.pop %v1349
      %v1447 = vmul.f32 %v1446, %v1349
      %v1448 = vmul.f32 %v1447, %v1446
      %v1449 = vmul.f32 0.5, %v1448
      %v1450 = vsub.f32 1.5, %v1449
      %v1451 = vmul.f32 %v1446, %v1450
      %vm1452 = vweird.f32 %v1349
      %vm1453 = vweird.f32 %v1446
      %vm1454 = vmor %vm1452, %vm1453
      %v1455 = vsel %vm1454, %v1446, %v1451
      %v1456 = vrsqrt.pop %v1350
      %v1457 = vmul.f32 %v1456, %v1350
      %v1458 = vmul.f32 %v1457, %v1456
      %v1459 = vmul.f32 0.5, %v1458
      %v1460 = vsub.f32 1.5, %v1459
      %v1461 = vmul.f32 %v1456, %v1460
      %vm1462 = vweird.f32 %v1350
      %vm1463 = vweird.f32 %v1456
      %vm1464 = vmor %vm1462, %vm1463
      %v1465 = vsel %vm1464, %v1456, %v1461
      %v1466 = vrsqrt.pop %v1351
      %v1467 = vmul.f32 %v1466, %v1351
      %v1468 = vmul.f32 %v1467, %v1466
      %v1469 = vmul.f32 0.5, %v1468
      %v1470 = vsub.f32 1.5, %v1469
      %v1471 = vmul.f32 %v1466, %v1470
      %vm1472 = vweird.f32 %v1351
      %vm1473 = vweird.f32 %v1466
      %vm1474 = vmor %vm1472, %vm1473
      %v1475 = vsel %vm1474, %v1466, %v1471
      %v1476 = vrsqrt.pop %v1352
      %v1477 = vmul.f32 %v1476, %v1352
      %v1478 = vmul.f32 %v1477, %v1476
      %v1479 = vmul.f32 0.5, %v1478
      %v1480 = vsub.f32 1.5, %v1479
      %v1481 = vmul.f32 %v1476, %v1480
      %vm1482 = vweird.f32 %v1352
      %vm1483 = vweird.f32 %v1476
      %vm1484 = vmor %vm1482, %vm1483
      %v1485 = vsel %vm1484, %v1476, %v1481
      %v1486 = vrsqrt.pop %v1353
      %v1487 = vmul.f32 %v1486, %v1353
      %v1488 = vmul.f32 %v1487, %v1486
      %v1489 = vmul.f32 0.5, %v1488
      %v1490 = vsub.f32 1.5, %v1489
      %v1491 = vmul.f32 %v1486, %v1490
      %vm1492 = vweird.f32 %v1353
      %vm1493 = vweird.f32 %v1486
      %vm1494 = vmor %vm1492, %vm1493
      %v1495 = vsel %vm1494, %v1486, %v1491
      %v1496 = vrsqrt.pop %v1354
      %v1497 = vmul.f32 %v1496, %v1354
      %v1498 = vmul.f32 %v1497, %v1496
      %v1499 = vmul.f32 0.5, %v1498
      %v1500 = vsub.f32 1.5, %v1499
      %v1501 = vmul.f32 %v1496, %v1500
      %vm1502 = vweird.f32 %v1354
      %vm1503 = vweird.f32 %v1496
      %vm1504 = vmor %vm1502, %vm1503
      %v1505 = vsel %vm1504, %v1496, %v1501
      %v1506 = vrsqrt.pop %v1355
      %v1507 = vmul.f32 %v1506, %v1355
      %v1508 = vmul.f32 %v1507, %v1506
      %v1509 = vmul.f32 0.5, %v1508
      %v1510 = vsub.f32 1.5, %v1509
      %v1511 = vmul.f32 %v1506, %v1510
      %vm1512 = vweird.f32 %v1355
      %vm1513 = vweird.f32 %v1506
      %vm1514 = vmor %vm1512, %vm1513
      %v1515 = vsel %vm1514, %v1506, %v1511
      %v1516 = vmul.f32 %v903, %v1365
      %v1517 = vmul.f32 %v1001, %v1365
      %v1518 = vmul.f32 %v905, %v1375
      %v1519 = vmul.f32 %v1003, %v1375
      %v1520 = vmul.f32 %v908, %v1385
      %v1521 = vmul.f32 %v1006, %v1385
      %v1522 = vmul.f32 %v910, %v1395
      %v1523 = vmul.f32 %v1008, %v1395
      %v1524 = vmul.f32 %v913, %v1405
      %v1525 = vmul.f32 %v1011, %v1405
      %v1526 = vmul.f32 %v915, %v1415
      %v1527 = vmul.f32 %v1013, %v1415
      %v1528 = vmul.f32 %v918, %v1425
      %v1529 = vmul.f32 %v1016, %v1425
      %v1530 = vmul.f32 %v920, %v1435
      %v1531 = vmul.f32 %v1018, %v1435
      %v1532 = vmul.f32 %v923, %v1445
      %v1533 = vmul.f32 %v1021, %v1445
      %v1534 = vmul.f32 %v925, %v1455
      %v1535 = vmul.f32 %v1023, %v1455
      %v1536 = vmul.f32 %v928, %v1465
      %v1537 = vmul.f32 %v1026, %v1465
      %v1538 = vmul.f32 %v930, %v1475
      %v1539 = vmul.f32 %v1028, %v1475
      %v1540 = vmul.f32 %v933, %v1485
      %v1541 = vmul.f32 %v1031, %v1485
      %v1542 = vmul.f32 %v935, %v1495
      %v1543 = vmul.f32 %v1033, %v1495
      %v1544 = vmul.f32 %v938, %v1505
      %v1545 = vmul.f32 %v1036, %v1505
      %v1546 = vmul.f32 %v940, %v1515
      %v1547 = vmul.f32 %v1038, %v1515
      %v1549 = vperm.slane %v1236, 0
      %v1550 = vperm.slane %v1236, 1
      %v1553 = vmul.f32 %v1516, %v1549
      %v1554 = vmul.f32 %v1517, %v1550
      %v1555 = vmul.f32 %v1518, %v1549
      %v1556 = vmul.f32 %v1519, %v1550
      %v1557 = vmul.f32 %v1520, %v1549
      %v1558 = vmul.f32 %v1521, %v1550
      %v1559 = vmul.f32 %v1522, %v1549
      %v1560 = vmul.f32 %v1523, %v1550
      %v1561 = vmul.f32 %v1524, %v1549
      %v1562 = vmul.f32 %v1525, %v1550
      %v1563 = vmul.f32 %v1526, %v1549
      %v1564 = vmul.f32 %v1527, %v1550
      %v1565 = vmul.f32 %v1528, %v1549
      %v1566 = vmul.f32 %v1529, %v1550
      %v1567 = vmul.f32 %v1530, %v1549
      %v1568 = vmul.f32 %v1531, %v1550
      %v1569 = vmul.f32 %v1532, %v1549
      %v1570 = vmul.f32 %v1533, %v1550
      %v1571 = vmul.f32 %v1534, %v1549
      %v1572 = vmul.f32 %v1535, %v1550
      %v1573 = vmul.f32 %v1536, %v1549
      %v1574 = vmul.f32 %v1537, %v1550
      %v1575 = vmul.f32 %v1538, %v1549
      %v1576 = vmul.f32 %v1539, %v1550
      %v1577 = vmul.f32 %v1540, %v1549
      %v1578 = vmul.f32 %v1541, %v1550
      %v1579 = vmul.f32 %v1542, %v1549
      %v1580 = vmul.f32 %v1543, %v1550
      %v1581 = vmul.f32 %v1544, %v1549
      %v1582 = vmul.f32 %v1545, %v1550
      %v1583 = vmul.f32 %v1546, %v1549
      %v1584 = vmul.f32 %v1547, %v1550
      %v1585 = vld [vmem:[%s3] sm:$0x1]
      %v1586 = vmul.f32 %v1099, %v1099
      %v1587 = vmul.f32 %v1101, %v1101
      %v1588 = vmul.f32 %v1104, %v1104
      %v1589 = vmul.f32 %v1106, %v1106
      %v1590 = vmul.f32 %v1109, %v1109
      %v1591 = vmul.f32 %v1111, %v1111
      %v1592 = vmul.f32 %v1114, %v1114
      %v1593 = vmul.f32 %v1116, %v1116
      %v1594 = vmul.f32 %v1119, %v1119
      %v1595 = vmul.f32 %v1121, %v1121
      %v1596 = vmul.f32 %v1124, %v1124
      %v1597 = vmul.f32 %v1126, %v1126
      %v1598 = vmul.f32 %v1129, %v1129
      %v1599 = vmul.f32 %v1131, %v1131
      %v1600 = vmul.f32 %v1134, %v1134
      %v1601 = vmul.f32 %v1136, %v1136
      %1602 = vadd.xlane.f32.xlu0 %v1586
      %v1603 = vpop.xlane.xlu0 %1602
      %1604 = vadd.xlane.f32.xlu0 %v1587
      %v1605 = vpop.xlane.xlu0 %1604
      %1606 = vadd.xlane.f32.xlu0 %v1588
      %v1607 = vpop.xlane.xlu0 %1606
      %1608 = vadd.xlane.f32.xlu0 %v1589
      %v1609 = vpop.xlane.xlu0 %1608
      %1610 = vadd.xlane.f32.xlu0 %v1590
      %v1611 = vpop.xlane.xlu0 %1610
      %1612 = vadd.xlane.f32.xlu0 %v1591
      %v1613 = vpop.xlane.xlu0 %1612
      %1614 = vadd.xlane.f32.xlu0 %v1592
      %v1615 = vpop.xlane.xlu0 %1614
      %1616 = vadd.xlane.f32.xlu0 %v1593
      %v1617 = vpop.xlane.xlu0 %1616
      %1618 = vadd.xlane.f32.xlu0 %v1594
      %v1619 = vpop.xlane.xlu0 %1618
      %1620 = vadd.xlane.f32.xlu0 %v1595
      %v1621 = vpop.xlane.xlu0 %1620
      %1622 = vadd.xlane.f32.xlu0 %v1596
      %v1623 = vpop.xlane.xlu0 %1622
      %1624 = vadd.xlane.f32.xlu0 %v1597
      %v1625 = vpop.xlane.xlu0 %1624
      %1626 = vadd.xlane.f32.xlu0 %v1598
      %v1627 = vpop.xlane.xlu0 %1626
      %1628 = vadd.xlane.f32.xlu0 %v1599
      %v1629 = vpop.xlane.xlu0 %1628
      %1630 = vadd.xlane.f32.xlu0 %v1600
      %v1631 = vpop.xlane.xlu0 %1630
      %1632 = vadd.xlane.f32.xlu0 %v1601
      %v1633 = vpop.xlane.xlu0 %1632
      %v1634 = vrcp.pop 128.0
      %v1635 = vmul.f32 128.0, %v1634
      %v1636 = vsub.f32 1.0, %v1635
      %v1637 = vmul.f32 %v1634, %v1636
      %v1638 = vadd.f32 %v1634, %v1637
      %vm1639 = vweird.f32 %v1634
      %v1640 = vsel %vm1639, %v1634, %v1638
      %v1641 = vmul.f32 %v1603, %v1640
      %v1642 = vmul.f32 %v1605, %v1640
      %v1643 = vmul.f32 %v1607, %v1640
      %v1644 = vmul.f32 %v1609, %v1640
      %v1645 = vmul.f32 %v1611, %v1640
      %v1646 = vmul.f32 %v1613, %v1640
      %v1647 = vmul.f32 %v1615, %v1640
      %v1648 = vmul.f32 %v1617, %v1640
      %v1649 = vmul.f32 %v1619, %v1640
      %v1650 = vmul.f32 %v1621, %v1640
      %v1651 = vmul.f32 %v1623, %v1640
      %v1652 = vmul.f32 %v1625, %v1640
      %v1653 = vmul.f32 %v1627, %v1640
      %v1654 = vmul.f32 %v1629, %v1640
      %v1655 = vmul.f32 %v1631, %v1640
      %v1656 = vmul.f32 %v1633, %v1640
      %v1657 = vadd.f32 %v1641, 1e-05
      %v1658 = vadd.f32 %v1642, 1e-05
      %v1659 = vadd.f32 %v1643, 1e-05
      %v1660 = vadd.f32 %v1644, 1e-05
      %v1661 = vadd.f32 %v1645, 1e-05
      %v1662 = vadd.f32 %v1646, 1e-05
      %v1663 = vadd.f32 %v1647, 1e-05
      %v1664 = vadd.f32 %v1648, 1e-05
      %v1665 = vadd.f32 %v1649, 1e-05
      %v1666 = vadd.f32 %v1650, 1e-05
      %v1667 = vadd.f32 %v1651, 1e-05
      %v1668 = vadd.f32 %v1652, 1e-05
      %v1669 = vadd.f32 %v1653, 1e-05
      %v1670 = vadd.f32 %v1654, 1e-05
      %v1671 = vadd.f32 %v1655, 1e-05
      %v1672 = vadd.f32 %v1656, 1e-05
      %v1673 = vrsqrt.pop %v1657
      %v1674 = vmul.f32 %v1673, %v1657
      %v1675 = vmul.f32 %v1674, %v1673
      %v1676 = vmul.f32 0.5, %v1675
      %v1677 = vsub.f32 1.5, %v1676
      %v1678 = vmul.f32 %v1673, %v1677
      %vm1679 = vweird.f32 %v1657
      %vm1680 = vweird.f32 %v1673
      %vm1681 = vmor %vm1679, %vm1680
      %v1682 = vsel %vm1681, %v1673, %v1678
      %v1683 = vrsqrt.pop %v1658
      %v1684 = vmul.f32 %v1683, %v1658
      %v1685 = vmul.f32 %v1684, %v1683
      %v1686 = vmul.f32 0.5, %v1685
      %v1687 = vsub.f32 1.5, %v1686
      %v1688 = vmul.f32 %v1683, %v1687
      %vm1689 = vweird.f32 %v1658
      %vm1690 = vweird.f32 %v1683
      %vm1691 = vmor %vm1689, %vm1690
      %v1692 = vsel %vm1691, %v1683, %v1688
      %v1693 = vrsqrt.pop %v1659
      %v1694 = vmul.f32 %v1693, %v1659
      %v1695 = vmul.f32 %v1694, %v1693
      %v1696 = vmul.f32 0.5, %v1695
      %v1697 = vsub.f32 1.5, %v1696
      %v1698 = vmul.f32 %v1693, %v1697
      %vm1699 = vweird.f32 %v1659
      %vm1700 = vweird.f32 %v1693
      %vm1701 = vmor %vm1699, %vm1700
      %v1702 = vsel %vm1701, %v1693, %v1698
      %v1703 = vrsqrt.pop %v1660
      %v1704 = vmul.f32 %v1703, %v1660
      %v1705 = vmul.f32 %v1704, %v1703
      %v1706 = vmul.f32 0.5, %v1705
      %v1707 = vsub.f32 1.5, %v1706
      %v1708 = vmul.f32 %v1703, %v1707
      %vm1709 = vweird.f32 %v1660
      %vm1710 = vweird.f32 %v1703
      %vm1711 = vmor %vm1709, %vm1710
      %v1712 = vsel %vm1711, %v1703, %v1708
      %v1713 = vrsqrt.pop %v1661
      %v1714 = vmul.f32 %v1713, %v1661
      %v1715 = vmul.f32 %v1714, %v1713
      %v1716 = vmul.f32 0.5, %v1715
      %v1717 = vsub.f32 1.5, %v1716
      %v1718 = vmul.f32 %v1713, %v1717
      %vm1719 = vweird.f32 %v1661
      %vm1720 = vweird.f32 %v1713
      %vm1721 = vmor %vm1719, %vm1720
      %v1722 = vsel %vm1721, %v1713, %v1718
      %v1723 = vrsqrt.pop %v1662
      %v1724 = vmul.f32 %v1723, %v1662
      %v1725 = vmul.f32 %v1724, %v1723
      %v1726 = vmul.f32 0.5, %v1725
      %v1727 = vsub.f32 1.5, %v1726
      %v1728 = vmul.f32 %v1723, %v1727
      %vm1729 = vweird.f32 %v1662
      %vm1730 = vweird.f32 %v1723
      %vm1731 = vmor %vm1729, %vm1730
      %v1732 = vsel %vm1731, %v1723, %v1728
      %v1733 = vrsqrt.pop %v1663
      %v1734 = vmul.f32 %v1733, %v1663
      %v1735 = vmul.f32 %v1734, %v1733
      %v1736 = vmul.f32 0.5, %v1735
      %v1737 = vsub.f32 1.5, %v1736
      %v1738 = vmul.f32 %v1733, %v1737
      %vm1739 = vweird.f32 %v1663
      %vm1740 = vweird.f32 %v1733
      %vm1741 = vmor %vm1739, %vm1740
      %v1742 = vsel %vm1741, %v1733, %v1738
      %v1743 = vrsqrt.pop %v1664
      %v1744 = vmul.f32 %v1743, %v1664
      %v1745 = vmul.f32 %v1744, %v1743
      %v1746 = vmul.f32 0.5, %v1745
      %v1747 = vsub.f32 1.5, %v1746
      %v1748 = vmul.f32 %v1743, %v1747
      %vm1749 = vweird.f32 %v1664
      %vm1750 = vweird.f32 %v1743
      %vm1751 = vmor %vm1749, %vm1750
      %v1752 = vsel %vm1751, %v1743, %v1748
      %v1753 = vrsqrt.pop %v1665
      %v1754 = vmul.f32 %v1753, %v1665
      %v1755 = vmul.f32 %v1754, %v1753
      %v1756 = vmul.f32 0.5, %v1755
      %v1757 = vsub.f32 1.5, %v1756
      %v1758 = vmul.f32 %v1753, %v1757
      %vm1759 = vweird.f32 %v1665
      %vm1760 = vweird.f32 %v1753
      %vm1761 = vmor %vm1759, %vm1760
      %v1762 = vsel %vm1761, %v1753, %v1758
      %v1763 = vrsqrt.pop %v1666
      %v1764 = vmul.f32 %v1763, %v1666
      %v1765 = vmul.f32 %v1764, %v1763
      %v1766 = vmul.f32 0.5, %v1765
      %v1767 = vsub.f32 1.5, %v1766
      %v1768 = vmul.f32 %v1763, %v1767
      %vm1769 = vweird.f32 %v1666
      %vm1770 = vweird.f32 %v1763
      %vm1771 = vmor %vm1769, %vm1770
      %v1772 = vsel %vm1771, %v1763, %v1768
      %v1773 = vrsqrt.pop %v1667
      %v1774 = vmul.f32 %v1773, %v1667
      %v1775 = vmul.f32 %v1774, %v1773
      %v1776 = vmul.f32 0.5, %v1775
      %v1777 = vsub.f32 1.5, %v1776
      %v1778 = vmul.f32 %v1773, %v1777
      %vm1779 = vweird.f32 %v1667
      %vm1780 = vweird.f32 %v1773
      %vm1781 = vmor %vm1779, %vm1780
      %v1782 = vsel %vm1781, %v1773, %v1778
      %v1783 = vrsqrt.pop %v1668
      %v1784 = vmul.f32 %v1783, %v1668
      %v1785 = vmul.f32 %v1784, %v1783
      %v1786 = vmul.f32 0.5, %v1785
      %v1787 = vsub.f32 1.5, %v1786
      %v1788 = vmul.f32 %v1783, %v1787
      %vm1789 = vweird.f32 %v1668
      %vm1790 = vweird.f32 %v1783
      %vm1791 = vmor %vm1789, %vm1790
      %v1792 = vsel %vm1791, %v1783, %v1788
      %v1793 = vrsqrt.pop %v1669
      %v1794 = vmul.f32 %v1793, %v1669
      %v1795 = vmul.f32 %v1794, %v1793
      %v1796 = vmul.f32 0.5, %v1795
      %v1797 = vsub.f32 1.5, %v1796
      %v1798 = vmul.f32 %v1793, %v1797
      %vm1799 = vweird.f32 %v1669
      %vm1800 = vweird.f32 %v1793
      %vm1801 = vmor %vm1799, %vm1800
      %v1802 = vsel %vm1801, %v1793, %v1798
      %v1803 = vrsqrt.pop %v1670
      %v1804 = vmul.f32 %v1803, %v1670
      %v1805 = vmul.f32 %v1804, %v1803
      %v1806 = vmul.f32 0.5, %v1805
      %v1807 = vsub.f32 1.5, %v1806
      %v1808 = vmul.f32 %v1803, %v1807
      %vm1809 = vweird.f32 %v1670
      %vm1810 = vweird.f32 %v1803
      %vm1811 = vmor %vm1809, %vm1810
      %v1812 = vsel %vm1811, %v1803, %v1808
      %v1813 = vrsqrt.pop %v1671
      %v1814 = vmul.f32 %v1813, %v1671
      %v1815 = vmul.f32 %v1814, %v1813
      %v1816 = vmul.f32 0.5, %v1815
      %v1817 = vsub.f32 1.5, %v1816
      %v1818 = vmul.f32 %v1813, %v1817
      %vm1819 = vweird.f32 %v1671
      %vm1820 = vweird.f32 %v1813
      %vm1821 = vmor %vm1819, %vm1820
      %v1822 = vsel %vm1821, %v1813, %v1818
      %v1823 = vrsqrt.pop %v1672
      %v1824 = vmul.f32 %v1823, %v1672
      %v1825 = vmul.f32 %v1824, %v1823
      %v1826 = vmul.f32 0.5, %v1825
      %v1827 = vsub.f32 1.5, %v1826
      %v1828 = vmul.f32 %v1823, %v1827
      %vm1829 = vweird.f32 %v1672
      %vm1830 = vweird.f32 %v1823
      %vm1831 = vmor %vm1829, %vm1830
      %v1832 = vsel %vm1831, %v1823, %v1828
      %v1833 = vmul.f32 %v1099, %v1682
      %v1834 = vmul.f32 %v1101, %v1692
      %v1835 = vmul.f32 %v1104, %v1702
      %v1836 = vmul.f32 %v1106, %v1712
      %v1837 = vmul.f32 %v1109, %v1722
      %v1838 = vmul.f32 %v1111, %v1732
      %v1839 = vmul.f32 %v1114, %v1742
      %v1840 = vmul.f32 %v1116, %v1752
      %v1841 = vmul.f32 %v1119, %v1762
      %v1842 = vmul.f32 %v1121, %v1772
      %v1843 = vmul.f32 %v1124, %v1782
      %v1844 = vmul.f32 %v1126, %v1792
      %v1845 = vmul.f32 %v1129, %v1802
      %v1846 = vmul.f32 %v1131, %v1812
      %v1847 = vmul.f32 %v1134, %v1822
      %v1848 = vmul.f32 %v1136, %v1832
      %v1850 = vperm.slane %v1585, 0
      %v1852 = vmul.f32 %v1833, %v1850
      %v1853 = vmul.f32 %v1834, %v1850
      %v1854 = vmul.f32 %v1835, %v1850
      %v1855 = vmul.f32 %v1836, %v1850
      %v1856 = vmul.f32 %v1837, %v1850
      %v1857 = vmul.f32 %v1838, %v1850
      %v1858 = vmul.f32 %v1839, %v1850
      %v1859 = vmul.f32 %v1840, %v1850
      %v1860 = vmul.f32 %v1841, %v1850
      %v1861 = vmul.f32 %v1842, %v1850
      %v1862 = vmul.f32 %v1843, %v1850
      %v1863 = vmul.f32 %v1844, %v1850
      %v1864 = vmul.f32 %v1845, %v1850
      %v1865 = vmul.f32 %v1846, %v1850
      %v1866 = vmul.f32 %v1847, %v1850
      %v1867 = vmul.f32 %v1848, %v1850
      %v1868 = vld [vmem:[%s385] sm:$0xff]
      %v1869 = vld [vmem:[%s385 + $0x8] sm:$0xff]
      %v1870 = vld [vmem:[%s385 + $0x10] sm:$0xff]
      %v1871 = vld [vmem:[%s385 + $0x18] sm:$0xff]
      %v1872 = vld [vmem:[%s385 + $0x20] sm:$0xff]
      %v1873 = vld [vmem:[%s385 + $0x28] sm:$0xff]
      %v1874 = vld [vmem:[%s385 + $0x30] sm:$0xff]
      %v1875 = vld [vmem:[%s385 + $0x38] sm:$0xff]
      %v1876 = vld [vmem:[%s385 + $0x40] sm:$0xff]
      %v1877 = vld [vmem:[%s385 + $0x48] sm:$0xff]
      %v1878 = vld [vmem:[%s385 + $0x50] sm:$0xff]
      %v1879 = vld [vmem:[%s385 + $0x58] sm:$0xff]
      %v1880 = vld [vmem:[%s385 + $0x60] sm:$0xff]
      %v1881 = vld [vmem:[%s385 + $0x68] sm:$0xff]
      %v1882 = vld [vmem:[%s385 + $0x70] sm:$0xff]
      %v1883 = vld [vmem:[%s385 + $0x78] sm:$0xff]
      %v1884 = vld [vmem:[%s391] sm:$0xff]
      %v1885 = vld [vmem:[%s391 + $0x8] sm:$0xff]
      %v1886 = vld [vmem:[%s391 + $0x10] sm:$0xff]
      %v1887 = vld [vmem:[%s391 + $0x18] sm:$0xff]
      %v1888 = vld [vmem:[%s391 + $0x20] sm:$0xff]
      %v1889 = vld [vmem:[%s391 + $0x28] sm:$0xff]
      %v1890 = vld [vmem:[%s391 + $0x30] sm:$0xff]
      %v1891 = vld [vmem:[%s391 + $0x38] sm:$0xff]
      %v1892 = vld [vmem:[%s391 + $0x40] sm:$0xff]
      %v1893 = vld [vmem:[%s391 + $0x48] sm:$0xff]
      %v1894 = vld [vmem:[%s391 + $0x50] sm:$0xff]
      %v1895 = vld [vmem:[%s391 + $0x58] sm:$0xff]
      %v1896 = vld [vmem:[%s391 + $0x60] sm:$0xff]
      %v1897 = vld [vmem:[%s391 + $0x68] sm:$0xff]
      %v1898 = vld [vmem:[%s391 + $0x70] sm:$0xff]
      %v1899 = vld [vmem:[%s391 + $0x78] sm:$0xff]
      %v1900 = vld [vmem:[%s6] sm:$0xff]
      %v1901 = vld [vmem:[%s6 + $0x8] sm:$0xff]
      %v1902 = vld [vmem:[%s6 + $0x10] sm:$0xff]
      %v1903 = vld [vmem:[%s6 + $0x18] sm:$0xff]
      %v1904 = vld [vmem:[%s6 + $0x20] sm:$0xff]
      %v1905 = vld [vmem:[%s6 + $0x28] sm:$0xff]
      %v1906 = vld [vmem:[%s6 + $0x30] sm:$0xff]
      %v1907 = vld [vmem:[%s6 + $0x38] sm:$0xff]
      %v1908 = vld [vmem:[%s6 + $0x40] sm:$0xff]
      %v1909 = vld [vmem:[%s6 + $0x48] sm:$0xff]
      %v1910 = vld [vmem:[%s6 + $0x50] sm:$0xff]
      %v1911 = vld [vmem:[%s6 + $0x58] sm:$0xff]
      %v1912 = vld [vmem:[%s6 + $0x60] sm:$0xff]
      %v1913 = vld [vmem:[%s6 + $0x68] sm:$0xff]
      %v1914 = vld [vmem:[%s6 + $0x70] sm:$0xff]
      %v1915 = vld [vmem:[%s6 + $0x78] sm:$0xff]
      %1916 = vmatpush.msra.mxu0 %v1915
      %1917 = vmatpush.msra.mxu0 %v1914
      %1918 = vmatpush.msra.mxu0 %v1913
      %1919 = vmatpush.msra.mxu0 %v1912
      %1920 = vmatpush.msra.mxu0 %v1911
      %1921 = vmatpush.msra.mxu0 %v1910
      %1922 = vmatpush.msra.mxu0 %v1909
      %1923 = vmatpush.msra.mxu0 %v1908
      %1924 = vmatpush.msra.mxu0 %v1907
      %1925 = vmatpush.msra.mxu0 %v1906
      %1926 = vmatpush.msra.mxu0 %v1905
      %1927 = vmatpush.msra.mxu0 %v1904
      %1928 = vmatpush.msra.mxu0 %v1903
      %1929 = vmatpush.msra.mxu0 %v1902
      %1930 = vmatpush.msra.mxu0 %v1901
      %1931 = vmatpush.msra.mxu0 %v1900
      %1932 = vmatmul.f32.gmra.mxu0 %v1553
      %v1933 = vpop.f32.mrf.mxu0
      %v1934 = vadd.f32 0.0, %v1933
      %1935 = vmatmul.f32.gmra.mxu0 %v1555
      %v1936 = vpop.f32.mrf.mxu0
      %v1937 = vadd.f32 0.0, %v1936
      %1938 = vmatmul.f32.gmra.mxu0 %v1557
      %v1939 = vpop.f32.mrf.mxu0
      %v1940 = vadd.f32 0.0, %v1939
      %1941 = vmatmul.f32.gmra.mxu0 %v1559
      %v1942 = vpop.f32.mrf.mxu0
      %v1943 = vadd.f32 0.0, %v1942
      %1944 = vmatmul.f32.gmra.mxu0 %v1561
      %v1945 = vpop.f32.mrf.mxu0
      %v1946 = vadd.f32 0.0, %v1945
      %1947 = vmatmul.f32.gmra.mxu0 %v1563
      %v1948 = vpop.f32.mrf.mxu0
      %v1949 = vadd.f32 0.0, %v1948
      %1950 = vmatmul.f32.gmra.mxu0 %v1565
      %v1951 = vpop.f32.mrf.mxu0
      %v1952 = vadd.f32 0.0, %v1951
      %1953 = vmatmul.f32.gmra.mxu0 %v1567
      %v1954 = vpop.f32.mrf.mxu0
      %v1955 = vadd.f32 0.0, %v1954
      %1956 = vmatmul.f32.gmra.mxu0 %v1569
      %v1957 = vpop.f32.mrf.mxu0
      %v1958 = vadd.f32 0.0, %v1957
      %1959 = vmatmul.f32.gmra.mxu0 %v1571
      %v1960 = vpop.f32.mrf.mxu0
      %v1961 = vadd.f32 0.0, %v1960
      %1962 = vmatmul.f32.gmra.mxu0 %v1573
      %v1963 = vpop.f32.mrf.mxu0
      %v1964 = vadd.f32 0.0, %v1963
      %1965 = vmatmul.f32.gmra.mxu0 %v1575
      %v1966 = vpop.f32.mrf.mxu0
      %v1967 = vadd.f32 0.0, %v1966
      %1968 = vmatmul.f32.gmra.mxu0 %v1577
      %v1969 = vpop.f32.mrf.mxu0
      %v1970 = vadd.f32 0.0, %v1969
      %1971 = vmatmul.f32.gmra.mxu0 %v1579
      %v1972 = vpop.f32.mrf.mxu0
      %v1973 = vadd.f32 0.0, %v1972
      %1974 = vmatmul.f32.gmra.mxu0 %v1581
      %v1975 = vpop.f32.mrf.mxu0
      %v1976 = vadd.f32 0.0, %v1975
      %1977 = vmatmul.f32.gmra.mxu0 %v1583
      %v1978 = vpop.f32.mrf.mxu0
      %v1979 = vadd.f32 0.0, %v1978
      %1980 = vdwg.mxu0
      %v1981 = vmul.f32 %v1553, %v1868
      %v1982 = vmul.f32 %v1555, %v1869
      %v1983 = vmul.f32 %v1557, %v1870
      %v1984 = vmul.f32 %v1559, %v1871
      %v1985 = vmul.f32 %v1561, %v1872
      %v1986 = vmul.f32 %v1563, %v1873
      %v1987 = vmul.f32 %v1565, %v1874
      %v1988 = vmul.f32 %v1567, %v1875
      %v1989 = vmul.f32 %v1569, %v1876
      %v1990 = vmul.f32 %v1571, %v1877
      %v1991 = vmul.f32 %v1573, %v1878
      %v1992 = vmul.f32 %v1575, %v1879
      %v1993 = vmul.f32 %v1577, %v1880
      %v1994 = vmul.f32 %v1579, %v1881
      %v1995 = vmul.f32 %v1581, %v1882
      %v1996 = vmul.f32 %v1583, %v1883
      %v1997 = vmul.f32 %v1934, %v1884
      %v1998 = vmul.f32 %v1937, %v1885
      %v1999 = vmul.f32 %v1940, %v1886
      %v2000 = vmul.f32 %v1943, %v1887
      %v2001 = vmul.f32 %v1946, %v1888
      %v2002 = vmul.f32 %v1949, %v1889
      %v2003 = vmul.f32 %v1952, %v1890
      %v2004 = vmul.f32 %v1955, %v1891
      %v2005 = vmul.f32 %v1958, %v1892
      %v2006 = vmul.f32 %v1961, %v1893
      %v2007 = vmul.f32 %v1964, %v1894
      %v2008 = vmul.f32 %v1967, %v1895
      %v2009 = vmul.f32 %v1970, %v1896
      %v2010 = vmul.f32 %v1973, %v1897
      %v2011 = vmul.f32 %v1976, %v1898
      %v2012 = vmul.f32 %v1979, %v1899
      %v2013 = vadd.f32 %v1981, %v1997
      %v2014 = vadd.f32 %v1982, %v1998
      %v2015 = vadd.f32 %v1983, %v1999
      %v2016 = vadd.f32 %v1984, %v2000
      %v2017 = vadd.f32 %v1985, %v2001
      %v2018 = vadd.f32 %v1986, %v2002
      %v2019 = vadd.f32 %v1987, %v2003
      %v2020 = vadd.f32 %v1988, %v2004
      %v2021 = vadd.f32 %v1989, %v2005
      %v2022 = vadd.f32 %v1990, %v2006
      %v2023 = vadd.f32 %v1991, %v2007
      %v2024 = vadd.f32 %v1992, %v2008
      %v2025 = vadd.f32 %v1993, %v2009
      %v2026 = vadd.f32 %v1994, %v2010
      %v2027 = vadd.f32 %v1995, %v2011
      %v2028 = vadd.f32 %v1996, %v2012
      %2029 = vmatpush.msra.mxu0 %v1915
      %2030 = vmatpush.msra.mxu0 %v1914
      %2031 = vmatpush.msra.mxu0 %v1913
      %2032 = vmatpush.msra.mxu0 %v1912
      %2033 = vmatpush.msra.mxu0 %v1911
      %2034 = vmatpush.msra.mxu0 %v1910
      %2035 = vmatpush.msra.mxu0 %v1909
      %2036 = vmatpush.msra.mxu0 %v1908
      %2037 = vmatpush.msra.mxu0 %v1907
      %2038 = vmatpush.msra.mxu0 %v1906
      %2039 = vmatpush.msra.mxu0 %v1905
      %2040 = vmatpush.msra.mxu0 %v1904
      %2041 = vmatpush.msra.mxu0 %v1903
      %2042 = vmatpush.msra.mxu0 %v1902
      %2043 = vmatpush.msra.mxu0 %v1901
      %2044 = vmatpush.msra.mxu0 %v1900
      %2045 = vmatmul.f32.gmra.mxu0 %v1554
      %v2046 = vpop.f32.mrf.mxu0
      %v2047 = vadd.f32 0.0, %v2046
      %2048 = vmatmul.f32.gmra.mxu0 %v1556
      %v2049 = vpop.f32.mrf.mxu0
      %v2050 = vadd.f32 0.0, %v2049
      %2051 = vmatmul.f32.gmra.mxu0 %v1558
      %v2052 = vpop.f32.mrf.mxu0
      %v2053 = vadd.f32 0.0, %v2052
      %2054 = vmatmul.f32.gmra.mxu0 %v1560
      %v2055 = vpop.f32.mrf.mxu0
      %v2056 = vadd.f32 0.0, %v2055
      %2057 = vmatmul.f32.gmra.mxu0 %v1562
      %v2058 = vpop.f32.mrf.mxu0
      %v2059 = vadd.f32 0.0, %v2058
      %2060 = vmatmul.f32.gmra.mxu0 %v1564
      %v2061 = vpop.f32.mrf.mxu0
      %v2062 = vadd.f32 0.0, %v2061
      %2063 = vmatmul.f32.gmra.mxu0 %v1566
      %v2064 = vpop.f32.mrf.mxu0
      %v2065 = vadd.f32 0.0, %v2064
      %2066 = vmatmul.f32.gmra.mxu0 %v1568
      %v2067 = vpop.f32.mrf.mxu0
      %v2068 = vadd.f32 0.0, %v2067
      %2069 = vmatmul.f32.gmra.mxu0 %v1570
      %v2070 = vpop.f32.mrf.mxu0
      %v2071 = vadd.f32 0.0, %v2070
      %2072 = vmatmul.f32.gmra.mxu0 %v1572
      %v2073 = vpop.f32.mrf.mxu0
      %v2074 = vadd.f32 0.0, %v2073
      %2075 = vmatmul.f32.gmra.mxu0 %v1574
      %v2076 = vpop.f32.mrf.mxu0
      %v2077 = vadd.f32 0.0, %v2076
      %2078 = vmatmul.f32.gmra.mxu0 %v1576
      %v2079 = vpop.f32.mrf.mxu0
      %v2080 = vadd.f32 0.0, %v2079
      %2081 = vmatmul.f32.gmra.mxu0 %v1578
      %v2082 = vpop.f32.mrf.mxu0
      %v2083 = vadd.f32 0.0, %v2082
      %2084 = vmatmul.f32.gmra.mxu0 %v1580
      %v2085 = vpop.f32.mrf.mxu0
      %v2086 = vadd.f32 0.0, %v2085
      %2087 = vmatmul.f32.gmra.mxu0 %v1582
      %v2088 = vpop.f32.mrf.mxu0
      %v2089 = vadd.f32 0.0, %v2088
      %2090 = vmatmul.f32.gmra.mxu0 %v1584
      %v2091 = vpop.f32.mrf.mxu0
      %v2092 = vadd.f32 0.0, %v2091
      %2093 = vdwg.mxu0
      %v2094 = vmul.f32 %v1554, %v1868
      %v2095 = vmul.f32 %v1556, %v1869
      %v2096 = vmul.f32 %v1558, %v1870
      %v2097 = vmul.f32 %v1560, %v1871
      %v2098 = vmul.f32 %v1562, %v1872
      %v2099 = vmul.f32 %v1564, %v1873
      %v2100 = vmul.f32 %v1566, %v1874
      %v2101 = vmul.f32 %v1568, %v1875
      %v2102 = vmul.f32 %v1570, %v1876
      %v2103 = vmul.f32 %v1572, %v1877
      %v2104 = vmul.f32 %v1574, %v1878
      %v2105 = vmul.f32 %v1576, %v1879
      %v2106 = vmul.f32 %v1578, %v1880
      %v2107 = vmul.f32 %v1580, %v1881
      %v2108 = vmul.f32 %v1582, %v1882
      %v2109 = vmul.f32 %v1584, %v1883
      %v2110 = vmul.f32 %v2047, %v1884
      %v2111 = vmul.f32 %v2050, %v1885
      %v2112 = vmul.f32 %v2053, %v1886
      %v2113 = vmul.f32 %v2056, %v1887
      %v2114 = vmul.f32 %v2059, %v1888
      %v2115 = vmul.f32 %v2062, %v1889
      %v2116 = vmul.f32 %v2065, %v1890
      %v2117 = vmul.f32 %v2068, %v1891
      %v2118 = vmul.f32 %v2071, %v1892
      %v2119 = vmul.f32 %v2074, %v1893
      %v2120 = vmul.f32 %v2077, %v1894
      %v2121 = vmul.f32 %v2080, %v1895
      %v2122 = vmul.f32 %v2083, %v1896
      %v2123 = vmul.f32 %v2086, %v1897
      %v2124 = vmul.f32 %v2089, %v1898
      %v2125 = vmul.f32 %v2092, %v1899
      %v2126 = vadd.f32 %v2094, %v2110
      %v2127 = vadd.f32 %v2095, %v2111
      %v2128 = vadd.f32 %v2096, %v2112
      %v2129 = vadd.f32 %v2097, %v2113
      %v2130 = vadd.f32 %v2098, %v2114
      %v2131 = vadd.f32 %v2099, %v2115
      %v2132 = vadd.f32 %v2100, %v2116
      %v2133 = vadd.f32 %v2101, %v2117
      %v2134 = vadd.f32 %v2102, %v2118
      %v2135 = vadd.f32 %v2103, %v2119
      %v2136 = vadd.f32 %v2104, %v2120
      %v2137 = vadd.f32 %v2105, %v2121
      %v2138 = vadd.f32 %v2106, %v2122
      %v2139 = vadd.f32 %v2107, %v2123
      %v2140 = vadd.f32 %v2108, %v2124
      %v2141 = vadd.f32 %v2109, %v2125
      %2142 = vmatpush.msra.mxu0 %v1915
      %2143 = vmatpush.msra.mxu0 %v1914
      %2144 = vmatpush.msra.mxu0 %v1913
      %2145 = vmatpush.msra.mxu0 %v1912
      %2146 = vmatpush.msra.mxu0 %v1911
      %2147 = vmatpush.msra.mxu0 %v1910
      %2148 = vmatpush.msra.mxu0 %v1909
      %2149 = vmatpush.msra.mxu0 %v1908
      %2150 = vmatpush.msra.mxu0 %v1907
      %2151 = vmatpush.msra.mxu0 %v1906
      %2152 = vmatpush.msra.mxu0 %v1905
      %2153 = vmatpush.msra.mxu0 %v1904
      %2154 = vmatpush.msra.mxu0 %v1903
      %2155 = vmatpush.msra.mxu0 %v1902
      %2156 = vmatpush.msra.mxu0 %v1901
      %2157 = vmatpush.msra.mxu0 %v1900
      %2158 = vmatmul.f32.gmra.mxu0 %v1852
      %v2159 = vpop.f32.mrf.mxu0
      %v2160 = vadd.f32 0.0, %v2159
      %2161 = vmatmul.f32.gmra.mxu0 %v1853
      %v2162 = vpop.f32.mrf.mxu0
      %v2163 = vadd.f32 0.0, %v2162
      %2164 = vmatmul.f32.gmra.mxu0 %v1854
      %v2165 = vpop.f32.mrf.mxu0
      %v2166 = vadd.f32 0.0, %v2165
      %2167 = vmatmul.f32.gmra.mxu0 %v1855
      %v2168 = vpop.f32.mrf.mxu0
      %v2169 = vadd.f32 0.0, %v2168
      %2170 = vmatmul.f32.gmra.mxu0 %v1856
      %v2171 = vpop.f32.mrf.mxu0
      %v2172 = vadd.f32 0.0, %v2171
      %2173 = vmatmul.f32.gmra.mxu0 %v1857
      %v2174 = vpop.f32.mrf.mxu0
      %v2175 = vadd.f32 0.0, %v2174
      %2176 = vmatmul.f32.gmra.mxu0 %v1858
      %v2177 = vpop.f32.mrf.mxu0
      %v2178 = vadd.f32 0.0, %v2177
      %2179 = vmatmul.f32.gmra.mxu0 %v1859
      %v2180 = vpop.f32.mrf.mxu0
      %v2181 = vadd.f32 0.0, %v2180
      %2182 = vmatmul.f32.gmra.mxu0 %v1860
      %v2183 = vpop.f32.mrf.mxu0
      %v2184 = vadd.f32 0.0, %v2183
      %2185 = vmatmul.f32.gmra.mxu0 %v1861
      %v2186 = vpop.f32.mrf.mxu0
      %v2187 = vadd.f32 0.0, %v2186
      %2188 = vmatmul.f32.gmra.mxu0 %v1862
      %v2189 = vpop.f32.mrf.mxu0
      %v2190 = vadd.f32 0.0, %v2189
      %2191 = vmatmul.f32.gmra.mxu0 %v1863
      %v2192 = vpop.f32.mrf.mxu0
      %v2193 = vadd.f32 0.0, %v2192
      %2194 = vmatmul.f32.gmra.mxu0 %v1864
      %v2195 = vpop.f32.mrf.mxu0
      %v2196 = vadd.f32 0.0, %v2195
      %2197 = vmatmul.f32.gmra.mxu0 %v1865
      %v2198 = vpop.f32.mrf.mxu0
      %v2199 = vadd.f32 0.0, %v2198
      %2200 = vmatmul.f32.gmra.mxu0 %v1866
      %v2201 = vpop.f32.mrf.mxu0
      %v2202 = vadd.f32 0.0, %v2201
      %2203 = vmatmul.f32.gmra.mxu0 %v1867
      %v2204 = vpop.f32.mrf.mxu0
      %v2205 = vadd.f32 0.0, %v2204
      %2206 = vdwg.mxu0
      %v2207 = vmul.f32 %v1852, %v1868
      %v2208 = vmul.f32 %v1853, %v1869
      %v2209 = vmul.f32 %v1854, %v1870
      %v2210 = vmul.f32 %v1855, %v1871
      %v2211 = vmul.f32 %v1856, %v1872
      %v2212 = vmul.f32 %v1857, %v1873
      %v2213 = vmul.f32 %v1858, %v1874
      %v2214 = vmul.f32 %v1859, %v1875
      %v2215 = vmul.f32 %v1860, %v1876
      %v2216 = vmul.f32 %v1861, %v1877
      %v2217 = vmul.f32 %v1862, %v1878
      %v2218 = vmul.f32 %v1863, %v1879
      %v2219 = vmul.f32 %v1864, %v1880
      %v2220 = vmul.f32 %v1865, %v1881
      %v2221 = vmul.f32 %v1866, %v1882
      %v2222 = vmul.f32 %v1867, %v1883
      %v2223 = vmul.f32 %v2160, %v1884
      %v2224 = vmul.f32 %v2163, %v1885
      %v2225 = vmul.f32 %v2166, %v1886
      %v2226 = vmul.f32 %v2169, %v1887
      %v2227 = vmul.f32 %v2172, %v1888
      %v2228 = vmul.f32 %v2175, %v1889
      %v2229 = vmul.f32 %v2178, %v1890
      %v2230 = vmul.f32 %v2181, %v1891
      %v2231 = vmul.f32 %v2184, %v1892
      %v2232 = vmul.f32 %v2187, %v1893
      %v2233 = vmul.f32 %v2190, %v1894
      %v2234 = vmul.f32 %v2193, %v1895
      %v2235 = vmul.f32 %v2196, %v1896
      %v2236 = vmul.f32 %v2199, %v1897
      %v2237 = vmul.f32 %v2202, %v1898
      %v2238 = vmul.f32 %v2205, %v1899
      %v2239 = vadd.f32 %v2207, %v2223
      %v2240 = vadd.f32 %v2208, %v2224
      %v2241 = vadd.f32 %v2209, %v2225
      %v2242 = vadd.f32 %v2210, %v2226
      %v2243 = vadd.f32 %v2211, %v2227
      %v2244 = vadd.f32 %v2212, %v2228
      %v2245 = vadd.f32 %v2213, %v2229
      %v2246 = vadd.f32 %v2214, %v2230
      %v2247 = vadd.f32 %v2215, %v2231
      %v2248 = vadd.f32 %v2216, %v2232
      %v2249 = vadd.f32 %v2217, %v2233
      %v2250 = vadd.f32 %v2218, %v2234
      %v2251 = vadd.f32 %v2219, %v2235
      %v2252 = vadd.f32 %v2220, %v2236
      %v2253 = vadd.f32 %v2221, %v2237
      %v2254 = vadd.f32 %v2222, %v2238
      %v2255 = vpack.c.bf16 %v2126, %v2013
      %v2256 = vpack.c.bf16 %v2127, %v2014
      %v2257 = vpack.c.bf16 %v2128, %v2015
      %v2258 = vpack.c.bf16 %v2129, %v2016
      %v2259 = vpack.c.bf16 %v2130, %v2017
      %v2260 = vpack.c.bf16 %v2131, %v2018
      %v2261 = vpack.c.bf16 %v2132, %v2019
      %v2262 = vpack.c.bf16 %v2133, %v2020
      %v2263 = vpack.c.bf16 %v2134, %v2021
      %v2264 = vpack.c.bf16 %v2135, %v2022
      %v2265 = vpack.c.bf16 %v2136, %v2023
      %v2266 = vpack.c.bf16 %v2137, %v2024
      %v2267 = vpack.c.bf16 %v2138, %v2025
      %v2268 = vpack.c.bf16 %v2139, %v2026
      %v2269 = vpack.c.bf16 %v2140, %v2027
      %v2270 = vpack.c.bf16 %v2141, %v2028
      %2271 = vst [vmem:[%s398] sm:$0xff] %v2255
      %2272 = vst [vmem:[%s398 + $0x8] sm:$0xff] %v2256
      %2273 = vst [vmem:[%s398 + $0x10] sm:$0xff] %v2257
      %2274 = vst [vmem:[%s398 + $0x18] sm:$0xff] %v2258
      %2275 = vst [vmem:[%s398 + $0x20] sm:$0xff] %v2259
      %2276 = vst [vmem:[%s398 + $0x28] sm:$0xff] %v2260
      %2277 = vst [vmem:[%s398 + $0x30] sm:$0xff] %v2261
      %2278 = vst [vmem:[%s398 + $0x38] sm:$0xff] %v2262
      %2279 = vst [vmem:[%s398 + $0x40] sm:$0xff] %v2263
      %2280 = vst [vmem:[%s398 + $0x48] sm:$0xff] %v2264
      %2281 = vst [vmem:[%s398 + $0x50] sm:$0xff] %v2265
      %2282 = vst [vmem:[%s398 + $0x58] sm:$0xff] %v2266
      %2283 = vst [vmem:[%s398 + $0x60] sm:$0xff] %v2267
      %2284 = vst [vmem:[%s398 + $0x68] sm:$0xff] %v2268
      %2285 = vst [vmem:[%s398 + $0x70] sm:$0xff] %v2269
      %2286 = vst [vmem:[%s398 + $0x78] sm:$0xff] %v2270
      %v2287 = vpack.c.bf16 %v2239, %v2239
      %v2288 = vpack.c.bf16 %v2240, %v2240
      %v2289 = vpack.c.bf16 %v2241, %v2241
      %v2290 = vpack.c.bf16 %v2242, %v2242
      %v2291 = vpack.c.bf16 %v2243, %v2243
      %v2292 = vpack.c.bf16 %v2244, %v2244
      %v2293 = vpack.c.bf16 %v2245, %v2245
      %v2294 = vpack.c.bf16 %v2246, %v2246
      %v2295 = vpack.c.bf16 %v2247, %v2247
      %v2296 = vpack.c.bf16 %v2248, %v2248
      %v2297 = vpack.c.bf16 %v2249, %v2249
      %v2298 = vpack.c.bf16 %v2250, %v2250
      %v2299 = vpack.c.bf16 %v2251, %v2251
      %v2300 = vpack.c.bf16 %v2252, %v2252
      %v2301 = vpack.c.bf16 %v2253, %v2253
      %v2302 = vpack.c.bf16 %v2254, %v2254
      %2303 = vst [vmem:[%s404] sm:$0xf] %v2287
      %2304 = vst [vmem:[%s404 + $0x4] sm:$0xf] %v2288
      %2305 = vst [vmem:[%s404 + $0x8] sm:$0xf] %v2289
      %2306 = vst [vmem:[%s404 + $0xc] sm:$0xf] %v2290
      %2307 = vst [vmem:[%s404 + $0x10] sm:$0xf] %v2291
      %2308 = vst [vmem:[%s404 + $0x14] sm:$0xf] %v2292
      %2309 = vst [vmem:[%s404 + $0x18] sm:$0xf] %v2293
      %2310 = vst [vmem:[%s404 + $0x1c] sm:$0xf] %v2294
      %2311 = vst [vmem:[%s404 + $0x20] sm:$0xf] %v2295
      %2312 = vst [vmem:[%s404 + $0x24] sm:$0xf] %v2296
      %2313 = vst [vmem:[%s404 + $0x28] sm:$0xf] %v2297
      %2314 = vst [vmem:[%s404 + $0x2c] sm:$0xf] %v2298
      %2315 = vst [vmem:[%s404 + $0x30] sm:$0xf] %v2299
      %2316 = vst [vmem:[%s404 + $0x34] sm:$0xf] %v2300
      %2317 = vst [vmem:[%s404 + $0x38] sm:$0xf] %v2301
      %2318 = vst [vmem:[%s404 + $0x3c] sm:$0xf] %v2302
      %v2319 = vpack.c.bf16 %v1197, %v1197
      %v2320 = vpack.c.bf16 %v1199, %v1199
      %v2321 = vpack.c.bf16 %v1202, %v1202
      %v2322 = vpack.c.bf16 %v1204, %v1204
      %v2323 = vpack.c.bf16 %v1207, %v1207
      %v2324 = vpack.c.bf16 %v1209, %v1209
      %v2325 = vpack.c.bf16 %v1212, %v1212
      %v2326 = vpack.c.bf16 %v1214, %v1214
      %v2327 = vpack.c.bf16 %v1217, %v1217
      %v2328 = vpack.c.bf16 %v1219, %v1219
      %v2329 = vpack.c.bf16 %v1222, %v1222
      %v2330 = vpack.c.bf16 %v1224, %v1224
      %v2331 = vpack.c.bf16 %v1227, %v1227
      %v2332 = vpack.c.bf16 %v1229, %v1229
      %v2333 = vpack.c.bf16 %v1232, %v1232
      %v2334 = vpack.c.bf16 %v1234, %v1234
      %2335 = vst [vmem:[%s410] sm:$0xf] %v2319
      %2336 = vst [vmem:[%s410 + $0x4] sm:$0xf] %v2320
      %2337 = vst [vmem:[%s410 + $0x8] sm:$0xf] %v2321
      %2338 = vst [vmem:[%s410 + $0xc] sm:$0xf] %v2322
      %2339 = vst [vmem:[%s410 + $0x10] sm:$0xf] %v2323
      %2340 = vst [vmem:[%s410 + $0x14] sm:$0xf] %v2324
      %2341 = vst [vmem:[%s410 + $0x18] sm:$0xf] %v2325
      %2342 = vst [vmem:[%s410 + $0x1c] sm:$0xf] %v2326
      %2343 = vst [vmem:[%s410 + $0x20] sm:$0xf] %v2327
      %2344 = vst [vmem:[%s410 + $0x24] sm:$0xf] %v2328
      %2345 = vst [vmem:[%s410 + $0x28] sm:$0xf] %v2329
      %2346 = vst [vmem:[%s410 + $0x2c] sm:$0xf] %v2330
      %2347 = vst [vmem:[%s410 + $0x30] sm:$0xf] %v2331
      %2348 = vst [vmem:[%s410 + $0x34] sm:$0xf] %v2332
      %2349 = vst [vmem:[%s410 + $0x38] sm:$0xf] %v2333
      %2350 = vst [vmem:[%s410 + $0x3c] sm:$0xf] %v2334
      %s2351 = smul.u32 16, %s21
      %p2352 = scmp.lt.s32.totalorder %s2351, 31
      %s2353 = scalar_select %p2352, %s2351, 31
      %s2354 = smul.addr %s2353, 2
      %s2355 = smul.addr %s2354, 4
      %s2356 = scalar_lea.vmem %s7, %s2355
      %s2357 = smul.u32 16, %s21
      %p2358 = scmp.lt.s32.totalorder %s2357, 31
      %s2359 = scalar_select %p2358, %s2357, 31
      %s2360 = smul.addr %s2359, 4
      %s2361 = scalar_lea.vmem %s8, %s2360
      %s2362 = smul.u32 16, %s21
      %p2363 = scmp.lt.s32.totalorder %s2362, 31
      %s2364 = scalar_select %p2363, %s2362, 31
      %s2365 = smul.addr %s2364, 4
      %s2366 = scalar_lea.vmem %s9, %s2365
      // Predicated region
      $region49: #{olmoe_attention.2} parent=47 // pred_check
        %p2367 = pneg %p201
      $region50: #{olmoe_attention.2} parent=47 // pred_check_branch
        %2369 = sbr.rel (%p2367) target = $region52
      $region51: #{olmoe_attention.2} parent=47 // pred_region
        %s2370 = smul.u32 16, %s21
      $region52: #{olmoe_attention.2} parent=47 // pred_fallthru
        _
      // Predicated region
      $region53: #{olmoe_attention.2} parent=47 // pred_check
        %p2371 = pneg %p227
      $region54: #{olmoe_attention.2} parent=47 // pred_check_branch
        %2373 = sbr.rel (%p2371) target = $region56
      $region55: #{olmoe_attention.2} parent=47 // pred_region
        %s2374 = smul.u32 16, %s21
      $region56: #{olmoe_attention.2} parent=47 // pred_fallthru
        _
      // Predicated region
      $region57: #{olmoe_attention.2} parent=47 // pred_check
        %p2375 = pneg %p253
      $region58: #{olmoe_attention.2} parent=47 // pred_check_branch
        %2377 = sbr.rel (%p2375) target = $region60
      $region59: #{olmoe_attention.2} parent=47 // pred_region
        %s2378 = smul.u32 16, %s21
      $region60: #{olmoe_attention.2} parent=47 // pred_fallthru
        _
    $region48: #{olmoe_attention.2} parent=5 // pred_fallthru
      _
    %p2379 = scmp.le.s32.totalorder 2, %s16
    // Predicated region
    $region61: #{olmoe_attention.2} parent=5 // pred_check
      %p2380 = pneg %p2379
    $region62: #{olmoe_attention.2} parent=5 // pred_check_branch
      %2382 = sbr.rel (%p2380) target = $region64
    $region63: #{olmoe_attention.2} parent=5 // pred_region
      %s2383 = ssub.s32 %s16, 2
      // Predicated region
      $region65: #{olmoe_attention.2} parent=63 // pred_check
        %p2384 = pneg %p207
      $region66: #{olmoe_attention.2} parent=63 // pred_check_branch
        %2386 = sbr.rel (%p2384) target = $region68
      $region67: #{olmoe_attention.2} parent=63 // pred_region
        %s2387 = smul.u32 16, %s22
        %p2388 = scmp.lt.s32.totalorder %s2387, 31
        %s2389 = scalar_select %p2388, %s2387, 31
        %s2390 = smul.addr %s2389, 2
        %s2391 = smul.addr %s2390, 4
        %s2392 = scalar_lea.vmem %s7, %s2391
      $region68: #{olmoe_attention.2} parent=63 // pred_fallthru
        _
      // Predicated region
      $region69: #{olmoe_attention.2} parent=63 // pred_check
        %p2393 = pneg %p233
      $region70: #{olmoe_attention.2} parent=63 // pred_check_branch
        %2395 = sbr.rel (%p2393) target = $region72
      $region71: #{olmoe_attention.2} parent=63 // pred_region
        %s2396 = smul.u32 16, %s22
        %p2397 = scmp.lt.s32.totalorder %s2396, 31
        %s2398 = scalar_select %p2397, %s2396, 31
        %s2399 = smul.addr %s2398, 4
        %s2400 = scalar_lea.vmem %s8, %s2399
      $region72: #{olmoe_attention.2} parent=63 // pred_fallthru
        _
      // Predicated region
      $region73: #{olmoe_attention.2} parent=63 // pred_check
        %p2401 = pneg %p259
      $region74: #{olmoe_attention.2} parent=63 // pred_check_branch
        %2403 = sbr.rel (%p2401) target = $region76
      $region75: #{olmoe_attention.2} parent=63 // pred_region
        %s2404 = smul.u32 16, %s22
        %p2405 = scmp.lt.s32.totalorder %s2404, 31
        %s2406 = scalar_select %p2405, %s2404, 31
        %s2407 = smul.addr %s2406, 4
        %s2408 = scalar_lea.vmem %s9, %s2407
      $region76: #{olmoe_attention.2} parent=63 // pred_fallthru
        _
    $region64: #{olmoe_attention.2} parent=5 // pred_fallthru
      _
  $region6: #{olmoe_attention.2} parent=0 // loop_footer
    %s20 = sadd.s32 1, %s16
  $region7: #{olmoe_attention.2} parent=0 // loop_footer_branch
    %15 = sbr.rel target = $region3
  $region8: #{olmoe_attention.2} parent=0 // loop_exit
    _

</llo_original>
